<compile_context>
chip_gen: v7x
topology: tpu7x:2x2x1
jax: 0.10.0
libtpu: 0.0.40
codegen_flags: <defaults>
</compile_context>

<pallas_src>
import jax
import jax.numpy as jnp
from jax import lax
from jax.experimental import pallas as pl
from jax.experimental.pallas import tpu as pltpu

TB = 8  # batch tile (sublane aligned); batch is padded up to a multiple of TB


# --------------------------------- kernel ------------------------------------

def lenet_kernel(x_ref, w1b_ref, b1l_ref, w2b_ref, b2l_ref,
                 wf1b_ref, fb1_ref, wf2t_ref, fb2_ref,
                 s240_ref, s160_ref, out_ref):
    bf16 = jnp.bfloat16
    f32 = jnp.float32

    # ---- conv1: Conv2d(1, 10, k=5), valid -------------------------------
    # rows = oh*TB + b, lanes = ow*10 + c   (oh, ow in 0..23, c in 0..9)
    x = x_ref[...].reshape(28 * TB, 28)                    # rows (h, b), lanes w
    acc1 = jnp.zeros((24 * TB, 240), f32)
    for ki in range(5):
        xs = x[ki * TB:(ki + 24) * TB, :].astype(bf16)     # rows (oh + ki, b)
        acc1 = acc1 + jnp.dot(xs, w1b_ref[ki], preferred_element_type=f32)

    # ---- maxpool 2x2 + bias + relu --------------------------------------
    v1 = acc1.reshape(12, 2 * TB, 240)                     # [i, (pair, b), lane]
    hp1 = jnp.maximum(v1[:, :TB, :], v1[:, TB:, :]).reshape(12 * TB, 240)
    sh1 = jnp.dot(hp1, s240_ref[...], preferred_element_type=f32)   # lane L <- L+10
    p1 = jnp.maximum(jnp.maximum(hp1, sh1) + b1l_ref[...], 0.0)
    # valid lanes of p1: 20*j + c (j in 0..11); junk lanes hit zero rows of w2b.

    # ---- conv2: Conv2d(10, 20, k=5)   (Dropout2d = identity in eval) ----
    # rows = oh2*TB + b, lanes = ow2*20 + c2   (oh2, ow2 in 0..7, c2 in 0..19)
    acc2 = jnp.zeros((8 * TB, 160), f32)
    for ki in range(5):
        ps = p1[ki * TB:(ki + 8) * TB, :].astype(bf16)
        acc2 = acc2 + jnp.dot(ps, w2b_ref[ki], preferred_element_type=f32)

    # ---- maxpool 2x2 + bias + relu --------------------------------------
    v2 = acc2.reshape(4, 2 * TB, 160)
    hp2 = jnp.maximum(v2[:, :TB, :], v2[:, TB:, :]).reshape(4 * TB, 160)
    sh2 = jnp.dot(hp2, s160_ref[...], preferred_element_type=f32)   # lane L <- L+20
    p2 = jnp.maximum(jnp.maximum(hp2, sh2) + b2l_ref[...], 0.0)
    # valid lanes of p2: 40*j2 + c2 (j2 in 0..3, c2 in 0..19)

    # ---- fc1: Linear(320, 50) + relu   (Dropout = identity in eval) -----
    # torch's NCHW x.view(-1, 320) order (c2, i2, j2) is baked into wf1b.
    z1 = jnp.zeros((TB, 50), f32)
    for i2 in range(4):
        h = p2[i2 * TB:(i2 + 1) * TB, :].astype(bf16)
        z1 = z1 + jnp.dot(h, wf1b_ref[i2], preferred_element_type=f32)
    z1 = jnp.maximum(z1 + fb1_ref[...], 0.0)

    # ---- fc2: Linear(50, 10) + log_softmax -------------------------------
    z2 = jnp.dot(z1.astype(bf16), wf2t_ref[...], preferred_element_type=f32)
    z2 = z2 + fb2_ref[...]
    m = jnp.max(z2, axis=-1, keepdims=True)
    lse = jnp.log(jnp.sum(jnp.exp(z2 - m), axis=-1, keepdims=True))
    out_ref[...] = z2 - m - lse


# --------------------------- weight preparation -------------------------------

def prepare_params(params, dtype=jnp.bfloat16):
    """Reformat torch-layout weights into banded / lane-dense kernel operands."""
    w1, b1, w2, b2, fw1, fb1, fw2, fb2 = params
    f32 = jnp.float32

    # conv1 band: w1b[ki, w, ow*10 + c] = w1[c, 0, ki, w - ow]  for 0 <= w-ow < 5
    w1t = jnp.transpose(w1[:, 0].astype(f32), (1, 2, 0))            # [ki, kj, c]
    w_idx = jnp.arange(28)[:, None]
    ow_idx = jnp.arange(24)[None, :]
    kj1 = w_idx - ow_idx                                            # [28, 24]
    ok1 = (kj1 >= 0) & (kj1 < 5)
    g1 = w1t[:, jnp.clip(kj1, 0, 4), :]                             # [5, 28, 24, 10]
    w1b = jnp.where(ok1[None, :, :, None], g1, 0.0).reshape(5, 28, 240).astype(dtype)

    # conv2 band: w2b[ki, 20*ow1 + s, 20*ow2 + c2] = w2[c2, s, ki, ow1 - ow2]
    #   valid when 0 <= ow1-ow2 < 5 and s < 10; other rows are zero (junk lanes).
    w2t = jnp.transpose(w2.astype(f32), (2, 3, 1, 0))               # [ki, kj, c1, c2]
    ow1 = jnp.arange(12)[:, None]
    ow2 = jnp.arange(8)[None, :]
    kj2 = ow1 - ow2                                                 # [12, 8]
    ok2 = (kj2 >= 0) & (kj2 < 5)
    slot = jnp.arange(20)
    okc = slot < 10
    g2 = w2t[:, jnp.clip(kj2, 0, 4)][:, :, :, jnp.clip(slot, 0, 9), :]   # [5,12,8,20,20]
    mask2 = (ok2[:, :, None] & okc[None, None, :])[None, :, :, :, None]
    g2 = jnp.where(mask2, g2, 0.0)
    w2b = jnp.transpose(g2, (0, 1, 3, 2, 4)).reshape(5, 240, 160).astype(dtype)

    # fc1 band: wf1b[i2, 40*j2 + c2, n] = fw1[n, c2*16 + i2*4 + j2]  (c2 < 20)
    fw1r = fw1.astype(f32).reshape(50, 20, 4, 4)                    # [n, c2, i2, j2]
    gf = jnp.transpose(fw1r, (2, 3, 1, 0))                          # [i2, j2, c2, n]
    gf = jnp.pad(gf, ((0, 0), (0, 0), (0, 20), (0, 0)))             # zero junk lanes
    wf1b = gf.reshape(4, 160, 50).astype(dtype)

    wf2t = jnp.transpose(fw2).astype(dtype)                         # [50, 10]

    b1l = jnp.tile(b1.astype(f32), 24).reshape(1, 240)
    b2l = jnp.tile(b2.astype(f32), 8).reshape(1, 160)
    fb1r = fb1.astype(f32).reshape(1, 50)
    fb2r = fb2.astype(f32).reshape(1, 10)

    # lane-shift matrices: (x @ s)[:, L] = x[:, L + k]
    s240 = jnp.eye(240, k=-10, dtype=f32)
    s160 = jnp.eye(160, k=-20, dtype=f32)
    return (w1b, b1l, w2b, b2l, wf1b, fb1r, wf2t, fb2r, s240, s160)


# ------------------------------- forward pass ---------------------------------

@jax.jit
def small_network_forward(x_nchw, prepped):
    (w1b, b1l, w2b, b2l, wf1b, fb1r, wf2t, fb2r, s240, s160) = prepped
    B = x_nchw.shape[0]
    B_pad = ((B + TB - 1) // TB) * TB

    # (h, b, w) layout so rows are (spatial, batch) with batch innermost.
    x = jnp.transpose(x_nchw[:, 0].astype(jnp.float32), (1, 0, 2))  # [28, B, 28]
    if B_pad != B:
        x = jnp.pad(x, ((0, 0), (0, B_pad - B), (0, 0)))

    out = pl.pallas_call(
        lenet_kernel,
        grid=(B_pad // TB,),
        in_specs=[
            pl.BlockSpec((28, TB, 28), lambda i: (0, i, 0)),     # x
            pl.BlockSpec((5, 28, 240), lambda i: (0, 0, 0)),     # w1b
            pl.BlockSpec((1, 240), lambda i: (0, 0)),            # b1 lanes
            pl.BlockSpec((5, 240, 160), lambda i: (0, 0, 0)),    # w2b
            pl.BlockSpec((1, 160), lambda i: (0, 0)),            # b2 lanes
            pl.BlockSpec((4, 160, 50), lambda i: (0, 0, 0)),     # fc1 band
            pl.BlockSpec((1, 50), lambda i: (0, 0)),             # fb1
            pl.BlockSpec((50, 10), lambda i: (0, 0)),            # fc2.T
            pl.BlockSpec((1, 10), lambda i: (0, 0)),             # fb2
            pl.BlockSpec((240, 240), lambda i: (0, 0)),          # lane shift (+10)
            pl.BlockSpec((160, 160), lambda i: (0, 0)),          # lane shift (+20)
        ],
        out_specs=pl.BlockSpec((TB, 10), lambda i: (i, 0)),
        out_shape=jax.ShapeDtypeStruct((B_pad, 10), jnp.float32),
        compiler_params=pltpu.CompilerParams(
            dimension_semantics=("parallel",)),
    )(x, w1b, b1l, w2b, b2l, wf1b, fb1r, wf2t, fb2r, s240, s160)
    return out[:B]


# ------------------------------ params / driver --------------------------------

def init_params(key):
    ks = jax.random.split(key, 8)
    w1 = 0.1 * jax.random.normal(ks[0], (10, 1, 5, 5), jnp.float32)   # Conv2d(1,10,5)
    b1 = 0.1 * jax.random.normal(ks[1], (10,), jnp.float32)
    w2 = 0.1 * jax.random.normal(ks[2], (20, 10, 5, 5), jnp.float32)  # Conv2d(10,20,5)
    b2 = 0.1 * jax.random.normal(ks[3], (20,), jnp.float32)
    fw1 = 0.1 * jax.random.normal(ks[4], (50, 320), jnp.float32)      # Linear(320,50)
    fb1 = 0.1 * jax.random.normal(ks[5], (50,), jnp.float32)
    fw2 = 0.1 * jax.random.normal(ks[6], (10, 50), jnp.float32)       # Linear(50,10)
    fb2 = 0.1 * jax.random.normal(ks[7], (10,), jnp.float32)
    return (w1, b1, w2, b2, fw1, fb1, fw2, fb2)


def reference_forward(x_nchw, params):
    # Pure-XLA f32 reference of the PyTorch module (eval mode).
    w1, b1, w2, b2, fw1, fb1, fw2, fb2 = params
    dn = ('NCHW', 'OIHW', 'NCHW')
    y1 = lax.conv_general_dilated(x_nchw, w1, (1, 1), 'VALID', dimension_numbers=dn)
    y1 = y1 + b1[None, :, None, None]
    p1 = lax.reduce_window(y1, -jnp.inf, lax.max, (1, 1, 2, 2), (1, 1, 2, 2), 'VALID')
    p1 = jnp.maximum(p1, 0.0)
    y2 = lax.conv_general_dilated(p1, w2, (1, 1), 'VALID', dimension_numbers=dn)
    y2 = y2 + b2[None, :, None, None]
    p2 = lax.reduce_window(y2, -jnp.inf, lax.max, (1, 1, 2, 2), (1, 1, 2, 2), 'VALID')
    p2 = jnp.maximum(p2, 0.0)
    h = p2.reshape(p2.shape[0], 320)
    z1 = jnp.maximum(h @ fw1.T + fb1, 0.0)
    z2 = z1 @ fw2.T + fb2
    return jax.nn.log_softmax(z2, axis=-1)


if __name__ == "__main__":
    key = jax.random.PRNGKey(0)
    pkey, xkey = jax.random.split(key)
    params = init_params(pkey)
    # 28x28x1 input is forced by the architecture (20*4*4 == 320 flatten).
    x = jax.random.normal(xkey, (2, 1, 28, 28), jnp.float32)

    prepped = prepare_params(params)
    out = small_network_forward(x, prepped)
    out = jax.block_until_ready(out)

    assert out.shape == (2, 10)
    assert bool(jnp.all(jnp.isfinite(out)))
    ref = reference_forward(x, params)
    assert bool(jnp.allclose(out, ref, atol=1e-1, rtol=1e-1)), \
        float(jnp.max(jnp.abs(out - ref)))
    print("KERNEL_OK")
</pallas_src>

<mosaic_0001>
module attributes {stable_mosaic.version = 11 : i64} {
  func.func @lenet_kernel(%arg0: i32, %arg1: memref<28x8x28xf32, #tpu.memory_space<vmem>>, %arg2: memref<5x28x240xbf16, #tpu.memory_space<vmem>>, %arg3: memref<1x240xf32, #tpu.memory_space<vmem>>, %arg4: memref<5x240x160xbf16, #tpu.memory_space<vmem>>, %arg5: memref<1x160xf32, #tpu.memory_space<vmem>>, %arg6: memref<4x160x50xbf16, #tpu.memory_space<vmem>>, %arg7: memref<1x50xf32, #tpu.memory_space<vmem>>, %arg8: memref<50x10xbf16, #tpu.memory_space<vmem>>, %arg9: memref<1x10xf32, #tpu.memory_space<vmem>>, %arg10: memref<240x240xf32, #tpu.memory_space<vmem>>, %arg11: memref<160x160xf32, #tpu.memory_space<vmem>>, %arg12: memref<8x10xf32, #tpu.memory_space<vmem>>) attributes {dimension_semantics = [#tpu.dimension_semantics<parallel>], iteration_bounds = array<i64: 1>, scalar_prefetch = 0 : i64, scratch_operands = 0 : i64, tpu.core_type = #tpu.core_type<tc>, window_params = [{transform_indices = @transform_0, window_bounds = array<i64: 28, 8, 28>}, {pipeline_mode = #tpu.pipeline_mode<synchronous>, transform_indices = @transform_1, window_bounds = array<i64: 5, 28, 240>}, {pipeline_mode = #tpu.pipeline_mode<synchronous>, transform_indices = @transform_2, window_bounds = array<i64: 1, 240>}, {pipeline_mode = #tpu.pipeline_mode<synchronous>, transform_indices = @transform_3, window_bounds = array<i64: 5, 240, 160>}, {pipeline_mode = #tpu.pipeline_mode<synchronous>, transform_indices = @transform_4, window_bounds = array<i64: 1, 160>}, {pipeline_mode = #tpu.pipeline_mode<synchronous>, transform_indices = @transform_5, window_bounds = array<i64: 4, 160, 50>}, {pipeline_mode = #tpu.pipeline_mode<synchronous>, transform_indices = @transform_6, window_bounds = array<i64: 1, 50>}, {pipeline_mode = #tpu.pipeline_mode<synchronous>, transform_indices = @transform_7, window_bounds = array<i64: 50, 10>}, {pipeline_mode = #tpu.pipeline_mode<synchronous>, transform_indices = @transform_8, window_bounds = array<i64: 1, 10>}, {pipeline_mode = #tpu.pipeline_mode<synchronous>, transform_indices = @transform_9, window_bounds = array<i64: 240, 240>}, {pipeline_mode = #tpu.pipeline_mode<synchronous>, transform_indices = @transform_10, window_bounds = array<i64: 160, 160>}, {transform_indices = @transform_11, window_bounds = array<i64: 8, 10>}]} {
    %c0 = arith.constant 0 : index
    %c0_0 = arith.constant 0 : index
    %c0_1 = arith.constant 0 : index
    %0 = vector.load %arg1[%c0, %c0_0, %c0_1] : memref<28x8x28xf32, #tpu.memory_space<vmem>>, vector<28x8x28xf32>
    %1 = vector.shape_cast %0 : vector<28x8x28xf32> to vector<224x28xf32>
    %cst = arith.constant 0.000000e+00 : f32
    %2 = vector.broadcast %cst : f32 to vector<192x240xf32>
    %3 = vector.extract_strided_slice %1 {offsets = [0, 0], sizes = [192, 28], strides = [1, 1]} : vector<224x28xf32> to vector<192x28xf32>
    %4 = arith.truncf %3 : vector<192x28xf32> to vector<192x28xbf16>
    %c0_2 = arith.constant 0 : index
    %c0_3 = arith.constant 0 : index
    %c0_4 = arith.constant 0 : index
    %5 = vector.load %arg2[%c0_2, %c0_3, %c0_4] : memref<5x28x240xbf16, #tpu.memory_space<vmem>>, vector<1x28x240xbf16>
    %6 = vector.shape_cast %5 : vector<1x28x240xbf16> to vector<28x240xbf16>
    %cst_5 = arith.constant dense<0.000000e+00> : vector<192x240xf32>
    %7 = tpu.matmul %4, %6, %cst_5 {dimension_numbers = #tpu.dot_dimension_numbers<[1], [0], [0], [1], [0, 0, 1, 1], [], []>} : vector<192x28xbf16>, vector<28x240xbf16>, vector<192x240xf32> -> vector<192x240xf32>
    %8 = arith.addf %2, %7 : vector<192x240xf32>
    %9 = vector.extract_strided_slice %1 {offsets = [8, 0], sizes = [192, 28], strides = [1, 1]} : vector<224x28xf32> to vector<192x28xf32>
    %10 = arith.truncf %9 : vector<192x28xf32> to vector<192x28xbf16>
    %c1 = arith.constant 1 : index
    %c0_6 = arith.constant 0 : index
    %c0_7 = arith.constant 0 : index
    %11 = vector.load %arg2[%c1, %c0_6, %c0_7] : memref<5x28x240xbf16, #tpu.memory_space<vmem>>, vector<1x28x240xbf16>
    %12 = vector.shape_cast %11 : vector<1x28x240xbf16> to vector<28x240xbf16>
    %cst_8 = arith.constant dense<0.000000e+00> : vector<192x240xf32>
    %13 = tpu.matmul %10, %12, %cst_8 {dimension_numbers = #tpu.dot_dimension_numbers<[1], [0], [0], [1], [0, 0, 1, 1], [], []>} : vector<192x28xbf16>, vector<28x240xbf16>, vector<192x240xf32> -> vector<192x240xf32>
    %14 = arith.addf %8, %13 : vector<192x240xf32>
    %15 = vector.extract_strided_slice %1 {offsets = [16, 0], sizes = [192, 28], strides = [1, 1]} : vector<224x28xf32> to vector<192x28xf32>
    %16 = arith.truncf %15 : vector<192x28xf32> to vector<192x28xbf16>
    %c2 = arith.constant 2 : index
    %c0_9 = arith.constant 0 : index
    %c0_10 = arith.constant 0 : index
    %17 = vector.load %arg2[%c2, %c0_9, %c0_10] : memref<5x28x240xbf16, #tpu.memory_space<vmem>>, vector<1x28x240xbf16>
    %18 = vector.shape_cast %17 : vector<1x28x240xbf16> to vector<28x240xbf16>
    %cst_11 = arith.constant dense<0.000000e+00> : vector<192x240xf32>
    %19 = tpu.matmul %16, %18, %cst_11 {dimension_numbers = #tpu.dot_dimension_numbers<[1], [0], [0], [1], [0, 0, 1, 1], [], []>} : vector<192x28xbf16>, vector<28x240xbf16>, vector<192x240xf32> -> vector<192x240xf32>
    %20 = arith.addf %14, %19 : vector<192x240xf32>
    %21 = vector.extract_strided_slice %1 {offsets = [24, 0], sizes = [192, 28], strides = [1, 1]} : vector<224x28xf32> to vector<192x28xf32>
    %22 = arith.truncf %21 : vector<192x28xf32> to vector<192x28xbf16>
    %c3 = arith.constant 3 : index
    %c0_12 = arith.constant 0 : index
    %c0_13 = arith.constant 0 : index
    %23 = vector.load %arg2[%c3, %c0_12, %c0_13] : memref<5x28x240xbf16, #tpu.memory_space<vmem>>, vector<1x28x240xbf16>
    %24 = vector.shape_cast %23 : vector<1x28x240xbf16> to vector<28x240xbf16>
    %cst_14 = arith.constant dense<0.000000e+00> : vector<192x240xf32>
    %25 = tpu.matmul %22, %24, %cst_14 {dimension_numbers = #tpu.dot_dimension_numbers<[1], [0], [0], [1], [0, 0, 1, 1], [], []>} : vector<192x28xbf16>, vector<28x240xbf16>, vector<192x240xf32> -> vector<192x240xf32>
    %26 = arith.addf %20, %25 : vector<192x240xf32>
    %27 = vector.extract_strided_slice %1 {offsets = [32, 0], sizes = [192, 28], strides = [1, 1]} : vector<224x28xf32> to vector<192x28xf32>
    %28 = arith.truncf %27 : vector<192x28xf32> to vector<192x28xbf16>
    %c4 = arith.constant 4 : index
    %c0_15 = arith.constant 0 : index
    %c0_16 = arith.constant 0 : index
    %29 = vector.load %arg2[%c4, %c0_15, %c0_16] : memref<5x28x240xbf16, #tpu.memory_space<vmem>>, vector<1x28x240xbf16>
    %30 = vector.shape_cast %29 : vector<1x28x240xbf16> to vector<28x240xbf16>
    %cst_17 = arith.constant dense<0.000000e+00> : vector<192x240xf32>
    %31 = tpu.matmul %28, %30, %cst_17 {dimension_numbers = #tpu.dot_dimension_numbers<[1], [0], [0], [1], [0, 0, 1, 1], [], []>} : vector<192x28xbf16>, vector<28x240xbf16>, vector<192x240xf32> -> vector<192x240xf32>
    %32 = arith.addf %26, %31 : vector<192x240xf32>
    %33 = vector.shape_cast %32 : vector<192x240xf32> to vector<12x16x240xf32>
    %34 = vector.extract_strided_slice %33 {offsets = [0, 0, 0], sizes = [12, 8, 240], strides = [1, 1, 1]} : vector<12x16x240xf32> to vector<12x8x240xf32>
    %35 = vector.extract_strided_slice %33 {offsets = [0, 8, 0], sizes = [12, 8, 240], strides = [1, 1, 1]} : vector<12x16x240xf32> to vector<12x8x240xf32>
    %36 = arith.maximumf %34, %35 : vector<12x8x240xf32>
    %37 = vector.shape_cast %36 : vector<12x8x240xf32> to vector<96x240xf32>
    %c0_18 = arith.constant 0 : index
    %c0_19 = arith.constant 0 : index
    %38 = vector.load %arg10[%c0_18, %c0_19] : memref<240x240xf32, #tpu.memory_space<vmem>>, vector<240x240xf32>
    %cst_20 = arith.constant dense<0.000000e+00> : vector<96x240xf32>
    %39 = tpu.matmul %37, %38, %cst_20 {dimension_numbers = #tpu.dot_dimension_numbers<[1], [0], [0], [1], [0, 0, 1, 1], [], []>} : vector<96x240xf32>, vector<240x240xf32>, vector<96x240xf32> -> vector<96x240xf32>
    %40 = arith.maximumf %37, %39 : vector<96x240xf32>
    %c0_21 = arith.constant 0 : index
    %c0_22 = arith.constant 0 : index
    %41 = vector.load %arg3[%c0_21, %c0_22] : memref<1x240xf32, #tpu.memory_space<vmem>>, vector<1x240xf32>
    %42 = vector.broadcast %41 : vector<1x240xf32> to vector<96x240xf32>
    %43 = arith.addf %40, %42 : vector<96x240xf32>
    %cst_23 = arith.constant 0.000000e+00 : f32
    %44 = vector.broadcast %cst_23 : f32 to vector<96x240xf32>
    %45 = arith.maximumf %43, %44 : vector<96x240xf32>
    %cst_24 = arith.constant 0.000000e+00 : f32
    %46 = vector.broadcast %cst_24 : f32 to vector<64x160xf32>
    %47 = vector.extract_strided_slice %45 {offsets = [0, 0], sizes = [64, 240], strides = [1, 1]} : vector<96x240xf32> to vector<64x240xf32>
    %48 = arith.truncf %47 : vector<64x240xf32> to vector<64x240xbf16>
    %c0_25 = arith.constant 0 : index
    %c0_26 = arith.constant 0 : index
    %c0_27 = arith.constant 0 : index
    %49 = vector.load %arg4[%c0_25, %c0_26, %c0_27] : memref<5x240x160xbf16, #tpu.memory_space<vmem>>, vector<1x240x160xbf16>
    %50 = vector.shape_cast %49 : vector<1x240x160xbf16> to vector<240x160xbf16>
    %cst_28 = arith.constant dense<0.000000e+00> : vector<64x160xf32>
    %51 = tpu.matmul %48, %50, %cst_28 {dimension_numbers = #tpu.dot_dimension_numbers<[1], [0], [0], [1], [0, 0, 1, 1], [], []>} : vector<64x240xbf16>, vector<240x160xbf16>, vector<64x160xf32> -> vector<64x160xf32>
    %52 = arith.addf %46, %51 : vector<64x160xf32>
    %53 = vector.extract_strided_slice %45 {offsets = [8, 0], sizes = [64, 240], strides = [1, 1]} : vector<96x240xf32> to vector<64x240xf32>
    %54 = arith.truncf %53 : vector<64x240xf32> to vector<64x240xbf16>
    %c1_29 = arith.constant 1 : index
    %c0_30 = arith.constant 0 : index
    %c0_31 = arith.constant 0 : index
    %55 = vector.load %arg4[%c1_29, %c0_30, %c0_31] : memref<5x240x160xbf16, #tpu.memory_space<vmem>>, vector<1x240x160xbf16>
    %56 = vector.shape_cast %55 : vector<1x240x160xbf16> to vector<240x160xbf16>
    %cst_32 = arith.constant dense<0.000000e+00> : vector<64x160xf32>
    %57 = tpu.matmul %54, %56, %cst_32 {dimension_numbers = #tpu.dot_dimension_numbers<[1], [0], [0], [1], [0, 0, 1, 1], [], []>} : vector<64x240xbf16>, vector<240x160xbf16>, vector<64x160xf32> -> vector<64x160xf32>
    %58 = arith.addf %52, %57 : vector<64x160xf32>
    %59 = vector.extract_strided_slice %45 {offsets = [16, 0], sizes = [64, 240], strides = [1, 1]} : vector<96x240xf32> to vector<64x240xf32>
    %60 = arith.truncf %59 : vector<64x240xf32> to vector<64x240xbf16>
    %c2_33 = arith.constant 2 : index
    %c0_34 = arith.constant 0 : index
    %c0_35 = arith.constant 0 : index
    %61 = vector.load %arg4[%c2_33, %c0_34, %c0_35] : memref<5x240x160xbf16, #tpu.memory_space<vmem>>, vector<1x240x160xbf16>
    %62 = vector.shape_cast %61 : vector<1x240x160xbf16> to vector<240x160xbf16>
    %cst_36 = arith.constant dense<0.000000e+00> : vector<64x160xf32>
    %63 = tpu.matmul %60, %62, %cst_36 {dimension_numbers = #tpu.dot_dimension_numbers<[1], [0], [0], [1], [0, 0, 1, 1], [], []>} : vector<64x240xbf16>, vector<240x160xbf16>, vector<64x160xf32> -> vector<64x160xf32>
    %64 = arith.addf %58, %63 : vector<64x160xf32>
    %65 = vector.extract_strided_slice %45 {offsets = [24, 0], sizes = [64, 240], strides = [1, 1]} : vector<96x240xf32> to vector<64x240xf32>
    %66 = arith.truncf %65 : vector<64x240xf32> to vector<64x240xbf16>
    %c3_37 = arith.constant 3 : index
    %c0_38 = arith.constant 0 : index
    %c0_39 = arith.constant 0 : index
    %67 = vector.load %arg4[%c3_37, %c0_38, %c0_39] : memref<5x240x160xbf16, #tpu.memory_space<vmem>>, vector<1x240x160xbf16>
    %68 = vector.shape_cast %67 : vector<1x240x160xbf16> to vector<240x160xbf16>
    %cst_40 = arith.constant dense<0.000000e+00> : vector<64x160xf32>
    %69 = tpu.matmul %66, %68, %cst_40 {dimension_numbers = #tpu.dot_dimension_numbers<[1], [0], [0], [1], [0, 0, 1, 1], [], []>} : vector<64x240xbf16>, vector<240x160xbf16>, vector<64x160xf32> -> vector<64x160xf32>
    %70 = arith.addf %64, %69 : vector<64x160xf32>
    %71 = vector.extract_strided_slice %45 {offsets = [32, 0], sizes = [64, 240], strides = [1, 1]} : vector<96x240xf32> to vector<64x240xf32>
    %72 = arith.truncf %71 : vector<64x240xf32> to vector<64x240xbf16>
    %c4_41 = arith.constant 4 : index
    %c0_42 = arith.constant 0 : index
    %c0_43 = arith.constant 0 : index
    %73 = vector.load %arg4[%c4_41, %c0_42, %c0_43] : memref<5x240x160xbf16, #tpu.memory_space<vmem>>, vector<1x240x160xbf16>
    %74 = vector.shape_cast %73 : vector<1x240x160xbf16> to vector<240x160xbf16>
    %cst_44 = arith.constant dense<0.000000e+00> : vector<64x160xf32>
    %75 = tpu.matmul %72, %74, %cst_44 {dimension_numbers = #tpu.dot_dimension_numbers<[1], [0], [0], [1], [0, 0, 1, 1], [], []>} : vector<64x240xbf16>, vector<240x160xbf16>, vector<64x160xf32> -> vector<64x160xf32>
    %76 = arith.addf %70, %75 : vector<64x160xf32>
    %77 = vector.shape_cast %76 : vector<64x160xf32> to vector<4x16x160xf32>
    %78 = vector.extract_strided_slice %77 {offsets = [0, 0, 0], sizes = [4, 8, 160], strides = [1, 1, 1]} : vector<4x16x160xf32> to vector<4x8x160xf32>
    %79 = vector.extract_strided_slice %77 {offsets = [0, 8, 0], sizes = [4, 8, 160], strides = [1, 1, 1]} : vector<4x16x160xf32> to vector<4x8x160xf32>
    %80 = arith.maximumf %78, %79 : vector<4x8x160xf32>
    %81 = vector.shape_cast %80 : vector<4x8x160xf32> to vector<32x160xf32>
    %c0_45 = arith.constant 0 : index
    %c0_46 = arith.constant 0 : index
    %82 = vector.load %arg11[%c0_45, %c0_46] : memref<160x160xf32, #tpu.memory_space<vmem>>, vector<160x160xf32>
    %cst_47 = arith.constant dense<0.000000e+00> : vector<32x160xf32>
    %83 = tpu.matmul %81, %82, %cst_47 {dimension_numbers = #tpu.dot_dimension_numbers<[1], [0], [0], [1], [0, 0, 1, 1], [], []>} : vector<32x160xf32>, vector<160x160xf32>, vector<32x160xf32> -> vector<32x160xf32>
    %84 = arith.maximumf %81, %83 : vector<32x160xf32>
    %c0_48 = arith.constant 0 : index
    %c0_49 = arith.constant 0 : index
    %85 = vector.load %arg5[%c0_48, %c0_49] : memref<1x160xf32, #tpu.memory_space<vmem>>, vector<1x160xf32>
    %86 = vector.broadcast %85 : vector<1x160xf32> to vector<32x160xf32>
    %87 = arith.addf %84, %86 : vector<32x160xf32>
    %cst_50 = arith.constant 0.000000e+00 : f32
    %88 = vector.broadcast %cst_50 : f32 to vector<32x160xf32>
    %89 = arith.maximumf %87, %88 : vector<32x160xf32>
    %cst_51 = arith.constant 0.000000e+00 : f32
    %90 = vector.broadcast %cst_51 : f32 to vector<8x50xf32>
    %91 = vector.extract_strided_slice %89 {offsets = [0, 0], sizes = [8, 160], strides = [1, 1]} : vector<32x160xf32> to vector<8x160xf32>
    %92 = arith.truncf %91 : vector<8x160xf32> to vector<8x160xbf16>
    %c0_52 = arith.constant 0 : index
    %c0_53 = arith.constant 0 : index
    %c0_54 = arith.constant 0 : index
    %93 = vector.load %arg6[%c0_52, %c0_53, %c0_54] : memref<4x160x50xbf16, #tpu.memory_space<vmem>>, vector<1x160x50xbf16>
    %94 = vector.shape_cast %93 : vector<1x160x50xbf16> to vector<160x50xbf16>
    %cst_55 = arith.constant dense<0.000000e+00> : vector<8x50xf32>
    %95 = tpu.matmul %92, %94, %cst_55 {dimension_numbers = #tpu.dot_dimension_numbers<[1], [0], [0], [1], [0, 0, 1, 1], [], []>} : vector<8x160xbf16>, vector<160x50xbf16>, vector<8x50xf32> -> vector<8x50xf32>
    %96 = arith.addf %90, %95 : vector<8x50xf32>
    %97 = vector.extract_strided_slice %89 {offsets = [8, 0], sizes = [8, 160], strides = [1, 1]} : vector<32x160xf32> to vector<8x160xf32>
    %98 = arith.truncf %97 : vector<8x160xf32> to vector<8x160xbf16>
    %c1_56 = arith.constant 1 : index
    %c0_57 = arith.constant 0 : index
    %c0_58 = arith.constant 0 : index
    %99 = vector.load %arg6[%c1_56, %c0_57, %c0_58] : memref<4x160x50xbf16, #tpu.memory_space<vmem>>, vector<1x160x50xbf16>
    %100 = vector.shape_cast %99 : vector<1x160x50xbf16> to vector<160x50xbf16>
    %cst_59 = arith.constant dense<0.000000e+00> : vector<8x50xf32>
    %101 = tpu.matmul %98, %100, %cst_59 {dimension_numbers = #tpu.dot_dimension_numbers<[1], [0], [0], [1], [0, 0, 1, 1], [], []>} : vector<8x160xbf16>, vector<160x50xbf16>, vector<8x50xf32> -> vector<8x50xf32>
    %102 = arith.addf %96, %101 : vector<8x50xf32>
    %103 = vector.extract_strided_slice %89 {offsets = [16, 0], sizes = [8, 160], strides = [1, 1]} : vector<32x160xf32> to vector<8x160xf32>
    %104 = arith.truncf %103 : vector<8x160xf32> to vector<8x160xbf16>
    %c2_60 = arith.constant 2 : index
    %c0_61 = arith.constant 0 : index
    %c0_62 = arith.constant 0 : index
    %105 = vector.load %arg6[%c2_60, %c0_61, %c0_62] : memref<4x160x50xbf16, #tpu.memory_space<vmem>>, vector<1x160x50xbf16>
    %106 = vector.shape_cast %105 : vector<1x160x50xbf16> to vector<160x50xbf16>
    %cst_63 = arith.constant dense<0.000000e+00> : vector<8x50xf32>
    %107 = tpu.matmul %104, %106, %cst_63 {dimension_numbers = #tpu.dot_dimension_numbers<[1], [0], [0], [1], [0, 0, 1, 1], [], []>} : vector<8x160xbf16>, vector<160x50xbf16>, vector<8x50xf32> -> vector<8x50xf32>
    %108 = arith.addf %102, %107 : vector<8x50xf32>
    %109 = vector.extract_strided_slice %89 {offsets = [24, 0], sizes = [8, 160], strides = [1, 1]} : vector<32x160xf32> to vector<8x160xf32>
    %110 = arith.truncf %109 : vector<8x160xf32> to vector<8x160xbf16>
    %c3_64 = arith.constant 3 : index
    %c0_65 = arith.constant 0 : index
    %c0_66 = arith.constant 0 : index
    %111 = vector.load %arg6[%c3_64, %c0_65, %c0_66] : memref<4x160x50xbf16, #tpu.memory_space<vmem>>, vector<1x160x50xbf16>
    %112 = vector.shape_cast %111 : vector<1x160x50xbf16> to vector<160x50xbf16>
    %cst_67 = arith.constant dense<0.000000e+00> : vector<8x50xf32>
    %113 = tpu.matmul %110, %112, %cst_67 {dimension_numbers = #tpu.dot_dimension_numbers<[1], [0], [0], [1], [0, 0, 1, 1], [], []>} : vector<8x160xbf16>, vector<160x50xbf16>, vector<8x50xf32> -> vector<8x50xf32>
    %114 = arith.addf %108, %113 : vector<8x50xf32>
    %c0_68 = arith.constant 0 : index
    %c0_69 = arith.constant 0 : index
    %115 = vector.load %arg7[%c0_68, %c0_69] : memref<1x50xf32, #tpu.memory_space<vmem>>, vector<1x50xf32>
    %116 = vector.broadcast %115 : vector<1x50xf32> to vector<8x50xf32>
    %117 = arith.addf %114, %116 : vector<8x50xf32>
    %cst_70 = arith.constant 0.000000e+00 : f32
    %118 = vector.broadcast %cst_70 : f32 to vector<8x50xf32>
    %119 = arith.maximumf %117, %118 : vector<8x50xf32>
    %120 = arith.truncf %119 : vector<8x50xf32> to vector<8x50xbf16>
    %c0_71 = arith.constant 0 : index
    %c0_72 = arith.constant 0 : index
    %121 = vector.load %arg8[%c0_71, %c0_72] : memref<50x10xbf16, #tpu.memory_space<vmem>>, vector<50x10xbf16>
    %cst_73 = arith.constant dense<0.000000e+00> : vector<8x10xf32>
    %122 = tpu.matmul %120, %121, %cst_73 {dimension_numbers = #tpu.dot_dimension_numbers<[1], [0], [0], [1], [0, 0, 1, 1], [], []>} : vector<8x50xbf16>, vector<50x10xbf16>, vector<8x10xf32> -> vector<8x10xf32>
    %c0_74 = arith.constant 0 : index
    %c0_75 = arith.constant 0 : index
    %123 = vector.load %arg9[%c0_74, %c0_75] : memref<1x10xf32, #tpu.memory_space<vmem>>, vector<1x10xf32>
    %124 = vector.broadcast %123 : vector<1x10xf32> to vector<8x10xf32>
    %125 = arith.addf %122, %124 : vector<8x10xf32>
    %cst_76 = arith.constant dense<0xFF800000> : vector<8xf32>
    %126 = vector.multi_reduction <maximumf>, %125, %cst_76 [1] : vector<8x10xf32> to vector<8xf32>
    %127 = vector.shape_cast %126 : vector<8xf32> to vector<8x1xf32>
    %128 = vector.broadcast %127 : vector<8x1xf32> to vector<8x10xf32>
    %129 = arith.subf %125, %128 : vector<8x10xf32>
    %130 = math.exp %129 : vector<8x10xf32>
    %cst_77 = arith.constant dense<0.000000e+00> : vector<8xf32>
    %131 = vector.multi_reduction <add>, %130, %cst_77 [1] : vector<8x10xf32> to vector<8xf32>
    %132 = vector.shape_cast %131 : vector<8xf32> to vector<8x1xf32>
    %133 = math.log %132 : vector<8x1xf32>
    %134 = vector.broadcast %127 : vector<8x1xf32> to vector<8x10xf32>
    %135 = arith.subf %125, %134 : vector<8x10xf32>
    %136 = vector.broadcast %133 : vector<8x1xf32> to vector<8x10xf32>
    %137 = arith.subf %135, %136 : vector<8x10xf32>
    %c0_78 = arith.constant 0 : index
    %c0_79 = arith.constant 0 : index
    %138 = vector.load %arg12[%c0_78, %c0_79] : memref<8x10xf32, #tpu.memory_space<vmem>>, vector<8x10xf32>
    tpu.vector_store %arg12[%c0_78, %c0_79], %137 {strides = array<i32>} : memref<8x10xf32, #tpu.memory_space<vmem>>, vector<8x10xf32>,
    return
  }
  func.func @transform_0(%arg0: i32) -> (i32, i32, i32) {
    %c0_i32 = arith.constant 0 : i32
    %c0_i32_0 = arith.constant 0 : i32
    %c0_i32_1 = arith.constant 0 : i32
    return %c0_i32, %arg0, %c0_i32_0 : i32, i32, i32
  }
  func.func @transform_1(%arg0: i32) -> (i32, i32, i32) {
    %c0_i32 = arith.constant 0 : i32
    %c0_i32_0 = arith.constant 0 : i32
    %c0_i32_1 = arith.constant 0 : i32
    %c0_i32_2 = arith.constant 0 : i32
    return %c0_i32, %c0_i32_0, %c0_i32_1 : i32, i32, i32
  }
  func.func @transform_2(%arg0: i32) -> (i32, i32) {
    %c0_i32 = arith.constant 0 : i32
    %c0_i32_0 = arith.constant 0 : i32
    %c0_i32_1 = arith.constant 0 : i32
    return %c0_i32, %c0_i32_0 : i32, i32
  }
  func.func @transform_3(%arg0: i32) -> (i32, i32, i32) {
    %c0_i32 = arith.constant 0 : i32
    %c0_i32_0 = arith.constant 0 : i32
    %c0_i32_1 = arith.constant 0 : i32
    %c0_i32_2 = arith.constant 0 : i32
    return %c0_i32, %c0_i32_0, %c0_i32_1 : i32, i32, i32
  }
  func.func @transform_4(%arg0: i32) -> (i32, i32) {
    %c0_i32 = arith.constant 0 : i32
    %c0_i32_0 = arith.constant 0 : i32
    %c0_i32_1 = arith.constant 0 : i32
    return %c0_i32, %c0_i32_0 : i32, i32
  }
  func.func @transform_5(%arg0: i32) -> (i32, i32, i32) {
    %c0_i32 = arith.constant 0 : i32
    %c0_i32_0 = arith.constant 0 : i32
    %c0_i32_1 = arith.constant 0 : i32
    %c0_i32_2 = arith.constant 0 : i32
    return %c0_i32, %c0_i32_0, %c0_i32_1 : i32, i32, i32
  }
  func.func @transform_6(%arg0: i32) -> (i32, i32) {
    %c0_i32 = arith.constant 0 : i32
    %c0_i32_0 = arith.constant 0 : i32
    %c0_i32_1 = arith.constant 0 : i32
    return %c0_i32, %c0_i32_0 : i32, i32
  }
  func.func @transform_7(%arg0: i32) -> (i32, i32) {
    %c0_i32 = arith.constant 0 : i32
    %c0_i32_0 = arith.constant 0 : i32
    %c0_i32_1 = arith.constant 0 : i32
    return %c0_i32, %c0_i32_0 : i32, i32
  }
  func.func @transform_8(%arg0: i32) -> (i32, i32) {
    %c0_i32 = arith.constant 0 : i32
    %c0_i32_0 = arith.constant 0 : i32
    %c0_i32_1 = arith.constant 0 : i32
    return %c0_i32, %c0_i32_0 : i32, i32
  }
  func.func @transform_9(%arg0: i32) -> (i32, i32) {
    %c0_i32 = arith.constant 0 : i32
    %c0_i32_0 = arith.constant 0 : i32
    %c0_i32_1 = arith.constant 0 : i32
    return %c0_i32, %c0_i32_0 : i32, i32
  }
  func.func @transform_10(%arg0: i32) -> (i32, i32) {
    %c0_i32 = arith.constant 0 : i32
    %c0_i32_0 = arith.constant 0 : i32
    %c0_i32_1 = arith.constant 0 : i32
    return %c0_i32, %c0_i32_0 : i32, i32
  }
  func.func @transform_11(%arg0: i32) -> (i32, i32) {
    %c0_i32 = arith.constant 0 : i32
    %c0_i32_0 = arith.constant 0 : i32
    return %arg0, %c0_i32 : i32, i32
  }
}

</mosaic_0001>

<llo_original>
// kernel: small_network_forward.1
$region0: #{small_network_forward.1}
  #allocation0 [shape = 'u32[]', space=smem, size = 0x4, offset = 0x4, fixed_abs, tag = 'smem constant byte address 0x4 - core index']
  #allocation1 [shape = 'u32[144,128]{1,0:T(1,128)}', space=vmem, size = 0x12000, scoped, tag = 'internal scratch']
  %s0 = inlined_call_operand.vmem [shape: f32[28,8,28], index: 0, kind: input, shape index: {}]
  %s1 = inlined_call_operand.vmem [shape: bf16[5,28,240], index: 1, kind: input, shape index: {}]
  %s2 = inlined_call_operand.vmem [shape: f32[1,240], index: 2, kind: input, shape index: {}]
  %s3 = inlined_call_operand.vmem [shape: bf16[5,240,160], index: 3, kind: input, shape index: {}]
  %s4 = inlined_call_operand.vmem [shape: f32[1,160], index: 4, kind: input, shape index: {}]
  %s5 = inlined_call_operand.vmem [shape: bf16[4,160,50], index: 5, kind: input, shape index: {}]
  %s6 = inlined_call_operand.vmem [shape: f32[1,50], index: 6, kind: input, shape index: {}]
  %s7 = inlined_call_operand.vmem [shape: bf16[50,10], index: 7, kind: input, shape index: {}]
  %s8 = inlined_call_operand.vmem [shape: f32[1,10], index: 8, kind: input, shape index: {}]
  %s9 = inlined_call_operand.vmem [shape: f32[240,240], index: 9, kind: input, shape index: {}]
  %s10 = inlined_call_operand.vmem [shape: f32[160,160], index: 10, kind: input, shape index: {}]
  %s11 = inlined_call_operand.vmem [shape: f32[8,10], index: 11, kind: output, shape index: {}]
  %s12 = sld [smem:[#allocation0]]
  $region54: #{small_network_forward.1} parent=0
    _
  %s14 = ssub.s32 1, %s12
  %s15 = scalar_select 0, %s14, %s12
  // Predicated region
  $region2: #{small_network_forward.1} parent=0 // pred_check
    _
  $region3: #{small_network_forward.1} parent=0 // pred_check_branch
    %17 = sbr.rel (0) target = $region5
  $region4: #{small_network_forward.1} parent=0 // pred_region
    _
  $region5: #{small_network_forward.1} parent=0 // pred_fallthru
    _
  // Predicated region
  $region6: #{small_network_forward.1} parent=0 // pred_check
    _
  $region7: #{small_network_forward.1} parent=0 // pred_check_branch
    %19 = sbr.rel (0) target = $region9
  $region8: #{small_network_forward.1} parent=0 // pred_region
    _
  $region9: #{small_network_forward.1} parent=0 // pred_fallthru
    _
  // Predicated region
  $region10: #{small_network_forward.1} parent=0 // pred_check
    _
  $region11: #{small_network_forward.1} parent=0 // pred_check_branch
    %21 = sbr.rel (0) target = $region13
  $region12: #{small_network_forward.1} parent=0 // pred_region
    _
  $region13: #{small_network_forward.1} parent=0 // pred_fallthru
    _
  // Predicated region
  $region14: #{small_network_forward.1} parent=0 // pred_check
    _
  $region15: #{small_network_forward.1} parent=0 // pred_check_branch
    %23 = sbr.rel (0) target = $region17
  $region16: #{small_network_forward.1} parent=0 // pred_region
    _
  $region17: #{small_network_forward.1} parent=0 // pred_fallthru
    _
  // Predicated region
  $region18: #{small_network_forward.1} parent=0 // pred_check
    _
  $region19: #{small_network_forward.1} parent=0 // pred_check_branch
    %25 = sbr.rel (0) target = $region21
  $region20: #{small_network_forward.1} parent=0 // pred_region
    _
  $region21: #{small_network_forward.1} parent=0 // pred_fallthru
    _
  // Predicated region
  $region22: #{small_network_forward.1} parent=0 // pred_check
    _
  $region23: #{small_network_forward.1} parent=0 // pred_check_branch
    %27 = sbr.rel (0) target = $region25
  $region24: #{small_network_forward.1} parent=0 // pred_region
    _
  $region25: #{small_network_forward.1} parent=0 // pred_fallthru
    _
  // Predicated region
  $region26: #{small_network_forward.1} parent=0 // pred_check
    _
  $region27: #{small_network_forward.1} parent=0 // pred_check_branch
    %29 = sbr.rel (0) target = $region29
  $region28: #{small_network_forward.1} parent=0 // pred_region
    _
  $region29: #{small_network_forward.1} parent=0 // pred_fallthru
    _
  // Predicated region
  $region30: #{small_network_forward.1} parent=0 // pred_check
    _
  $region31: #{small_network_forward.1} parent=0 // pred_check_branch
    %31 = sbr.rel (0) target = $region33
  $region32: #{small_network_forward.1} parent=0 // pred_region
    _
  $region33: #{small_network_forward.1} parent=0 // pred_fallthru
    _
  // Predicated region
  $region34: #{small_network_forward.1} parent=0 // pred_check
    _
  $region35: #{small_network_forward.1} parent=0 // pred_check_branch
    %33 = sbr.rel (0) target = $region37
  $region36: #{small_network_forward.1} parent=0 // pred_region
    _
  $region37: #{small_network_forward.1} parent=0 // pred_fallthru
    _
  // Predicated region
  $region38: #{small_network_forward.1} parent=0 // pred_check
    _
  $region39: #{small_network_forward.1} parent=0 // pred_check_branch
    %35 = sbr.rel (0) target = $region41
  $region40: #{small_network_forward.1} parent=0 // pred_region
    _
  $region41: #{small_network_forward.1} parent=0 // pred_fallthru
    _
  // Predicated region
  $region42: #{small_network_forward.1} parent=0 // pred_check
    _
  $region43: #{small_network_forward.1} parent=0 // pred_check_branch
    %37 = sbr.rel (0) target = $region45
  $region44: #{small_network_forward.1} parent=0 // pred_region
    _
  $region45: #{small_network_forward.1} parent=0 // pred_fallthru
    _
  %v39 = vld [vmem:[%s0] sm:$0xff]
  %v40 = vld [vmem:[%s0 + $0x8] sm:$0xff]
  %v41 = vld [vmem:[%s0 + $0x10] sm:$0xff]
  %v42 = vld [vmem:[%s0 + $0x18] sm:$0xff]
  %v43 = vld [vmem:[%s0 + $0x20] sm:$0xff]
  %v44 = vld [vmem:[%s0 + $0x28] sm:$0xff]
  %v45 = vld [vmem:[%s0 + $0x30] sm:$0xff]
  %v46 = vld [vmem:[%s0 + $0x38] sm:$0xff]
  %v47 = vld [vmem:[%s0 + $0x40] sm:$0xff]
  %v48 = vld [vmem:[%s0 + $0x48] sm:$0xff]
  %v49 = vld [vmem:[%s0 + $0x50] sm:$0xff]
  %v50 = vld [vmem:[%s0 + $0x58] sm:$0xff]
  %v51 = vld [vmem:[%s0 + $0x60] sm:$0xff]
  %v52 = vld [vmem:[%s0 + $0x68] sm:$0xff]
  %v53 = vld [vmem:[%s0 + $0x70] sm:$0xff]
  %v54 = vld [vmem:[%s0 + $0x78] sm:$0xff]
  %v55 = vld [vmem:[%s0 + $0x80] sm:$0xff]
  %v56 = vld [vmem:[%s0 + $0x88] sm:$0xff]
  %v57 = vld [vmem:[%s0 + $0x90] sm:$0xff]
  %v58 = vld [vmem:[%s0 + $0x98] sm:$0xff]
  %v59 = vld [vmem:[%s0 + $0xa0] sm:$0xff]
  %v60 = vld [vmem:[%s0 + $0xa8] sm:$0xff]
  %v61 = vld [vmem:[%s0 + $0xb0] sm:$0xff]
  %v62 = vld [vmem:[%s0 + $0xb8] sm:$0xff]
  %v63 = vld [vmem:[%s0 + $0xc0] sm:$0xff]
  %v64 = vld [vmem:[%s0 + $0xc8] sm:$0xff]
  %v65 = vld [vmem:[%s0 + $0xd0] sm:$0xff]
  %v66 = vld [vmem:[%s0 + $0xd8] sm:$0xff]
  %v67 = vpack.c.bf16 %v40, %v39
  %v68 = vpack.c.bf16 %v42, %v41
  %v69 = vpack.c.bf16 %v44, %v43
  %v70 = vpack.c.bf16 %v46, %v45
  %v71 = vpack.c.bf16 %v48, %v47
  %v72 = vpack.c.bf16 %v50, %v49
  %v73 = vpack.c.bf16 %v52, %v51
  %v74 = vpack.c.bf16 %v54, %v53
  %v75 = vpack.c.bf16 %v56, %v55
  %v76 = vpack.c.bf16 %v58, %v57
  %v77 = vpack.c.bf16 %v60, %v59
  %v78 = vpack.c.bf16 %v62, %v61
  %v79 = vld [vmem:[%s1] sm:$0xff]
  %v80 = vld [vmem:[%s1 + $0x8] sm:$0xff]
  %v81 = vld [vmem:[%s1 + $0x10] sm:$0xff]
  %v82 = vld [vmem:[%s1 + $0x18] sm:$0x33]
  %v83 = vpack.c.bf16 %v41, %v40
  %v84 = vpack.c.bf16 %v43, %v42
  %v85 = vpack.c.bf16 %v45, %v44
  %v86 = vpack.c.bf16 %v47, %v46
  %v87 = vpack.c.bf16 %v49, %v48
  %v88 = vpack.c.bf16 %v51, %v50
  %v89 = vpack.c.bf16 %v53, %v52
  %v90 = vpack.c.bf16 %v55, %v54
  %v91 = vpack.c.bf16 %v57, %v56
  %v92 = vpack.c.bf16 %v59, %v58
  %v93 = vpack.c.bf16 %v61, %v60
  %v94 = vpack.c.bf16 %v63, %v62
  %s95 = scalar_lea.vmem %s1, 32
  %v96 = vld [vmem:[%s95] sm:$0xff]
  %v97 = vld [vmem:[%s95 + $0x8] sm:$0xff]
  %v98 = vld [vmem:[%s95 + $0x10] sm:$0xff]
  %v99 = vld [vmem:[%s95 + $0x18] sm:$0x33]
  %v104 = vunpack.c.l.b16 %v96
  %v105 = vunpack.c.h.b16 %v96
  %v106 = vunpack.c.l.b16 %v97
  %v107 = vunpack.c.h.b16 %v97
  %v108 = vunpack.c.l.b16 %v98
  %v109 = vunpack.c.h.b16 %v98
  %v110 = vunpack.c.l.b16 %v99
  %v111 = vunpack.c.h.b16 %v99
  %v112 = vpack.c.b16 %v106, %v104
  %v113 = vpack.c.b16 %v107, %v105
  %v114 = vpack.c.b16 %v110, %v108
  %v115 = vpack.c.b16 %v111, %v109
  %vm118 = vcmask 228352
  %v120 = vsel %vm118, %v83, 0
  %v123 = vsel %vm118, %v84, 0
  %v126 = vsel %vm118, %v85, 0
  %v129 = vsel %vm118, %v86, 0
  %v132 = vsel %vm118, %v87, 0
  %v135 = vsel %vm118, %v88, 0
  %v138 = vsel %vm118, %v89, 0
  %v141 = vsel %vm118, %v90, 0
  %v144 = vsel %vm118, %v91, 0
  %v147 = vsel %vm118, %v92, 0
  %v150 = vsel %vm118, %v93, 0
  %v153 = vsel %vm118, %v94, 0
  %vm155 = vcmask 1045504
  %v157 = vsel %vm155, %v114, 0
  %v160 = vsel %vm155, %v115, 0
  %162 = vmatprep.subr.bf16.mxu0 %v113
  %163 = vmatpush1.bf16.msra.mxu0 %v112
  %164 = vmatprep.subr.bf16.mxu0 %v160
  %165 = vmatpush1.bf16.msra.mxu0 %v157
  %166 = vmatprep.subr.bf16.mxu0 0
  %167 = vmatpush1.bf16.msra.mxu0 0
  %168 = vmatprep.subr.bf16.mxu0 0
  %169 = vmatpush1.bf16.msra.mxu0 0
  %170 = vmatprep.subr.bf16.mxu0 0
  %171 = vmatpush1.bf16.msra.mxu0 0
  %172 = vmatprep.subr.bf16.mxu0 0
  %173 = vmatpush1.bf16.msra.mxu0 0
  %174 = vmatprep.subr.bf16.mxu0 0
  %175 = vmatpush1.bf16.msra.mxu0 0
  %176 = vmatprep.subr.bf16.mxu0 0
  %177 = vmatpush1.bf16.msra.mxu0 0
  %178 = vmatprep.subr.bf16.mxu0 0
  %179 = vmatpush1.bf16.msra.mxu0 0
  %180 = vmatprep.subr.bf16.mxu0 0
  %181 = vmatpush1.bf16.msra.mxu0 0
  %182 = vmatprep.subr.bf16.mxu0 0
  %183 = vmatpush1.bf16.msra.mxu0 0
  %184 = vmatprep.subr.bf16.mxu0 0
  %185 = vmatpush1.bf16.msra.mxu0 0
  %186 = vmatprep.subr.bf16.mxu0 0
  %187 = vmatpush1.bf16.msra.mxu0 0
  %188 = vmatprep.subr.bf16.mxu0 0
  %189 = vmatpush1.bf16.msra.mxu0 0
  %190 = vmatprep.subr.bf16.mxu0 0
  %191 = vmatpush1.bf16.msra.mxu0 0
  %192 = vmatprep.subr.bf16.mxu0 0
  %193 = vmatpush1.bf16.msra.mxu0 0
  %194 = vmatprep.mubr.bf16.mxu0 0
  %195 = vmatmul.mubr.bf16.gmra.mrb[0].mxu0 %v120
  %v196 = vpop.f32.mrb[0].mxu0
  %v197 = vadd.f32 0.0, %v196
  %v198 = vpop.f32.mrb[0].mxu0
  %v199 = vadd.f32 0.0, %v198
  %v200 = vpop.f32.mrb[0].mxu0
  %v201 = vadd.f32 0.0, %v200
  %v202 = vpop.f32.mrb[0].mxu0
  %v203 = vadd.f32 0.0, %v202
  %204 = vmatprep.mubr.bf16.mxu0 0
  %205 = vmatmul.mubr.bf16.gmra.mrb[0].mxu0 %v123
  %v206 = vpop.f32.mrb[0].mxu0
  %v207 = vadd.f32 0.0, %v206
  %v208 = vpop.f32.mrb[0].mxu0
  %v209 = vadd.f32 0.0, %v208
  %v210 = vpop.f32.mrb[0].mxu0
  %v211 = vadd.f32 0.0, %v210
  %v212 = vpop.f32.mrb[0].mxu0
  %v213 = vadd.f32 0.0, %v212
  %214 = vmatprep.mubr.bf16.mxu0 0
  %215 = vmatmul.mubr.bf16.gmra.mrb[0].mxu0 %v126
  %v216 = vpop.f32.mrb[0].mxu0
  %v217 = vadd.f32 0.0, %v216
  %v218 = vpop.f32.mrb[0].mxu0
  %v219 = vadd.f32 0.0, %v218
  %v220 = vpop.f32.mrb[0].mxu0
  %v221 = vadd.f32 0.0, %v220
  %v222 = vpop.f32.mrb[0].mxu0
  %v223 = vadd.f32 0.0, %v222
  %224 = vmatprep.mubr.bf16.mxu0 0
  %225 = vmatmul.mubr.bf16.gmra.mrb[0].mxu0 %v129
  %v226 = vpop.f32.mrb[0].mxu0
  %v227 = vadd.f32 0.0, %v226
  %v228 = vpop.f32.mrb[0].mxu0
  %v229 = vadd.f32 0.0, %v228
  %v230 = vpop.f32.mrb[0].mxu0
  %v231 = vadd.f32 0.0, %v230
  %v232 = vpop.f32.mrb[0].mxu0
  %v233 = vadd.f32 0.0, %v232
  %234 = vmatprep.mubr.bf16.mxu0 0
  %235 = vmatmul.mubr.bf16.gmra.mrb[0].mxu0 %v132
  %v236 = vpop.f32.mrb[0].mxu0
  %v237 = vadd.f32 0.0, %v236
  %v238 = vpop.f32.mrb[0].mxu0
  %v239 = vadd.f32 0.0, %v238
  %v240 = vpop.f32.mrb[0].mxu0
  %v241 = vadd.f32 0.0, %v240
  %v242 = vpop.f32.mrb[0].mxu0
  %v243 = vadd.f32 0.0, %v242
  %244 = vmatprep.mubr.bf16.mxu0 0
  %245 = vmatmul.mubr.bf16.gmra.mrb[0].mxu0 %v135
  %v246 = vpop.f32.mrb[0].mxu0
  %v247 = vadd.f32 0.0, %v246
  %v248 = vpop.f32.mrb[0].mxu0
  %v249 = vadd.f32 0.0, %v248
  %v250 = vpop.f32.mrb[0].mxu0
  %v251 = vadd.f32 0.0, %v250
  %v252 = vpop.f32.mrb[0].mxu0
  %v253 = vadd.f32 0.0, %v252
  %254 = vmatprep.mubr.bf16.mxu0 0
  %255 = vmatmul.mubr.bf16.gmra.mrb[0].mxu0 %v138
  %v256 = vpop.f32.mrb[0].mxu0
  %v257 = vadd.f32 0.0, %v256
  %v258 = vpop.f32.mrb[0].mxu0
  %v259 = vadd.f32 0.0, %v258
  %v260 = vpop.f32.mrb[0].mxu0
  %v261 = vadd.f32 0.0, %v260
  %v262 = vpop.f32.mrb[0].mxu0
  %v263 = vadd.f32 0.0, %v262
  %264 = vmatprep.mubr.bf16.mxu0 0
  %265 = vmatmul.mubr.bf16.gmra.mrb[0].mxu0 %v141
  %v266 = vpop.f32.mrb[0].mxu0
  %v267 = vadd.f32 0.0, %v266
  %v268 = vpop.f32.mrb[0].mxu0
  %v269 = vadd.f32 0.0, %v268
  %v270 = vpop.f32.mrb[0].mxu0
  %v271 = vadd.f32 0.0, %v270
  %v272 = vpop.f32.mrb[0].mxu0
  %v273 = vadd.f32 0.0, %v272
  %274 = vmatprep.mubr.bf16.mxu0 0
  %275 = vmatmul.mubr.bf16.gmra.mrb[0].mxu0 %v144
  %v276 = vpop.f32.mrb[0].mxu0
  %v277 = vadd.f32 0.0, %v276
  %v278 = vpop.f32.mrb[0].mxu0
  %v279 = vadd.f32 0.0, %v278
  %v280 = vpop.f32.mrb[0].mxu0
  %v281 = vadd.f32 0.0, %v280
  %v282 = vpop.f32.mrb[0].mxu0
  %v283 = vadd.f32 0.0, %v282
  %284 = vmatprep.mubr.bf16.mxu0 0
  %285 = vmatmul.mubr.bf16.gmra.mrb[0].mxu0 %v147
  %v286 = vpop.f32.mrb[0].mxu0
  %v287 = vadd.f32 0.0, %v286
  %v288 = vpop.f32.mrb[0].mxu0
  %v289 = vadd.f32 0.0, %v288
  %v290 = vpop.f32.mrb[0].mxu0
  %v291 = vadd.f32 0.0, %v290
  %v292 = vpop.f32.mrb[0].mxu0
  %v293 = vadd.f32 0.0, %v292
  %294 = vmatprep.mubr.bf16.mxu0 0
  %295 = vmatmul.mubr.bf16.gmra.mrb[0].mxu0 %v150
  %v296 = vpop.f32.mrb[0].mxu0
  %v297 = vadd.f32 0.0, %v296
  %v298 = vpop.f32.mrb[0].mxu0
  %v299 = vadd.f32 0.0, %v298
  %v300 = vpop.f32.mrb[0].mxu0
  %v301 = vadd.f32 0.0, %v300
  %v302 = vpop.f32.mrb[0].mxu0
  %v303 = vadd.f32 0.0, %v302
  %304 = vmatprep.mubr.bf16.mxu0 0
  %305 = vmatmul.mubr.bf16.gmra.mrb[0].mxu0 %v153
  %v306 = vpop.f32.mrb[0].mxu0
  %v307 = vadd.f32 0.0, %v306
  %v308 = vpop.f32.mrb[0].mxu0
  %v309 = vadd.f32 0.0, %v308
  %v310 = vpop.f32.mrb[0].mxu0
  %v311 = vadd.f32 0.0, %v310
  %v312 = vpop.f32.mrb[0].mxu0
  %v313 = vadd.f32 0.0, %v312
  %314 = vdwg.mxu0
  %v319 = vunpack.c.l.b16 %v79
  %v320 = vunpack.c.h.b16 %v79
  %v321 = vunpack.c.l.b16 %v80
  %v322 = vunpack.c.h.b16 %v80
  %v323 = vunpack.c.l.b16 %v81
  %v324 = vunpack.c.h.b16 %v81
  %v325 = vunpack.c.l.b16 %v82
  %v326 = vunpack.c.h.b16 %v82
  %v327 = vpack.c.b16 %v321, %v319
  %v328 = vpack.c.b16 %v322, %v320
  %v329 = vpack.c.b16 %v325, %v323
  %v330 = vpack.c.b16 %v326, %v324
  %v334 = vsel %vm118, %v67, 0
  %v337 = vsel %vm118, %v68, 0
  %v340 = vsel %vm118, %v69, 0
  %v343 = vsel %vm118, %v70, 0
  %v346 = vsel %vm118, %v71, 0
  %v349 = vsel %vm118, %v72, 0
  %v352 = vsel %vm118, %v73, 0
  %v355 = vsel %vm118, %v74, 0
  %v358 = vsel %vm118, %v75, 0
  %v361 = vsel %vm118, %v76, 0
  %v364 = vsel %vm118, %v77, 0
  %v367 = vsel %vm118, %v78, 0
  %v370 = vsel %vm155, %v329, 0
  %v373 = vsel %vm155, %v330, 0
  %375 = vmatprep.subr.bf16.mxu0 %v328
  %376 = vmatpush1.bf16.msra.mxu0 %v327
  %377 = vmatprep.subr.bf16.mxu0 %v373
  %378 = vmatpush1.bf16.msra.mxu0 %v370
  %379 = vmatprep.subr.bf16.mxu0 0
  %380 = vmatpush1.bf16.msra.mxu0 0
  %381 = vmatprep.subr.bf16.mxu0 0
  %382 = vmatpush1.bf16.msra.mxu0 0
  %383 = vmatprep.subr.bf16.mxu0 0
  %384 = vmatpush1.bf16.msra.mxu0 0
  %385 = vmatprep.subr.bf16.mxu0 0
  %386 = vmatpush1.bf16.msra.mxu0 0
  %387 = vmatprep.subr.bf16.mxu0 0
  %388 = vmatpush1.bf16.msra.mxu0 0
  %389 = vmatprep.subr.bf16.mxu0 0
  %390 = vmatpush1.bf16.msra.mxu0 0
  %391 = vmatprep.subr.bf16.mxu0 0
  %392 = vmatpush1.bf16.msra.mxu0 0
  %393 = vmatprep.subr.bf16.mxu0 0
  %394 = vmatpush1.bf16.msra.mxu0 0
  %395 = vmatprep.subr.bf16.mxu0 0
  %396 = vmatpush1.bf16.msra.mxu0 0
  %397 = vmatprep.subr.bf16.mxu0 0
  %398 = vmatpush1.bf16.msra.mxu0 0
  %399 = vmatprep.subr.bf16.mxu0 0
  %400 = vmatpush1.bf16.msra.mxu0 0
  %401 = vmatprep.subr.bf16.mxu0 0
  %402 = vmatpush1.bf16.msra.mxu0 0
  %403 = vmatprep.subr.bf16.mxu0 0
  %404 = vmatpush1.bf16.msra.mxu0 0
  %405 = vmatprep.subr.bf16.mxu0 0
  %406 = vmatpush1.bf16.msra.mxu0 0
  %407 = vmatprep.mubr.bf16.mxu0 0
  %408 = vmatmul.mubr.bf16.gmra.mrb[0].mxu0 %v334
  %v409 = vpop.f32.mrb[0].mxu0
  %v410 = vadd.f32 %v197, %v409
  %v411 = vpop.f32.mrb[0].mxu0
  %v412 = vadd.f32 %v199, %v411
  %v413 = vpop.f32.mrb[0].mxu0
  %v414 = vadd.f32 %v201, %v413
  %v415 = vpop.f32.mrb[0].mxu0
  %v416 = vadd.f32 %v203, %v415
  %417 = vmatprep.mubr.bf16.mxu0 0
  %418 = vmatmul.mubr.bf16.gmra.mrb[0].mxu0 %v337
  %v419 = vpop.f32.mrb[0].mxu0
  %v420 = vadd.f32 %v207, %v419
  %v421 = vpop.f32.mrb[0].mxu0
  %v422 = vadd.f32 %v209, %v421
  %v423 = vpop.f32.mrb[0].mxu0
  %v424 = vadd.f32 %v211, %v423
  %v425 = vpop.f32.mrb[0].mxu0
  %v426 = vadd.f32 %v213, %v425
  %427 = vmatprep.mubr.bf16.mxu0 0
  %428 = vmatmul.mubr.bf16.gmra.mrb[0].mxu0 %v340
  %v429 = vpop.f32.mrb[0].mxu0
  %v430 = vadd.f32 %v217, %v429
  %v431 = vpop.f32.mrb[0].mxu0
  %v432 = vadd.f32 %v219, %v431
  %v433 = vpop.f32.mrb[0].mxu0
  %v434 = vadd.f32 %v221, %v433
  %v435 = vpop.f32.mrb[0].mxu0
  %v436 = vadd.f32 %v223, %v435
  %437 = vmatprep.mubr.bf16.mxu0 0
  %438 = vmatmul.mubr.bf16.gmra.mrb[0].mxu0 %v343
  %v439 = vpop.f32.mrb[0].mxu0
  %v440 = vadd.f32 %v227, %v439
  %v441 = vpop.f32.mrb[0].mxu0
  %v442 = vadd.f32 %v229, %v441
  %v443 = vpop.f32.mrb[0].mxu0
  %v444 = vadd.f32 %v231, %v443
  %v445 = vpop.f32.mrb[0].mxu0
  %v446 = vadd.f32 %v233, %v445
  %447 = vmatprep.mubr.bf16.mxu0 0
  %448 = vmatmul.mubr.bf16.gmra.mrb[0].mxu0 %v346
  %v449 = vpop.f32.mrb[0].mxu0
  %v450 = vadd.f32 %v237, %v449
  %v451 = vpop.f32.mrb[0].mxu0
  %v452 = vadd.f32 %v239, %v451
  %v453 = vpop.f32.mrb[0].mxu0
  %v454 = vadd.f32 %v241, %v453
  %v455 = vpop.f32.mrb[0].mxu0
  %v456 = vadd.f32 %v243, %v455
  %457 = vmatprep.mubr.bf16.mxu0 0
  %458 = vmatmul.mubr.bf16.gmra.mrb[0].mxu0 %v349
  %v459 = vpop.f32.mrb[0].mxu0
  %v460 = vadd.f32 %v247, %v459
  %v461 = vpop.f32.mrb[0].mxu0
  %v462 = vadd.f32 %v249, %v461
  %v463 = vpop.f32.mrb[0].mxu0
  %v464 = vadd.f32 %v251, %v463
  %v465 = vpop.f32.mrb[0].mxu0
  %v466 = vadd.f32 %v253, %v465
  %467 = vmatprep.mubr.bf16.mxu0 0
  %468 = vmatmul.mubr.bf16.gmra.mrb[0].mxu0 %v352
  %v469 = vpop.f32.mrb[0].mxu0
  %v470 = vadd.f32 %v257, %v469
  %v471 = vpop.f32.mrb[0].mxu0
  %v472 = vadd.f32 %v259, %v471
  %v473 = vpop.f32.mrb[0].mxu0
  %v474 = vadd.f32 %v261, %v473
  %v475 = vpop.f32.mrb[0].mxu0
  %v476 = vadd.f32 %v263, %v475
  %477 = vmatprep.mubr.bf16.mxu0 0
  %478 = vmatmul.mubr.bf16.gmra.mrb[0].mxu0 %v355
  %v479 = vpop.f32.mrb[0].mxu0
  %v480 = vadd.f32 %v267, %v479
  %v481 = vpop.f32.mrb[0].mxu0
  %v482 = vadd.f32 %v269, %v481
  %v483 = vpop.f32.mrb[0].mxu0
  %v484 = vadd.f32 %v271, %v483
  %v485 = vpop.f32.mrb[0].mxu0
  %v486 = vadd.f32 %v273, %v485
  %487 = vmatprep.mubr.bf16.mxu0 0
  %488 = vmatmul.mubr.bf16.gmra.mrb[0].mxu0 %v358
  %v489 = vpop.f32.mrb[0].mxu0
  %v490 = vadd.f32 %v277, %v489
  %v491 = vpop.f32.mrb[0].mxu0
  %v492 = vadd.f32 %v279, %v491
  %v493 = vpop.f32.mrb[0].mxu0
  %v494 = vadd.f32 %v281, %v493
  %v495 = vpop.f32.mrb[0].mxu0
  %v496 = vadd.f32 %v283, %v495
  %497 = vmatprep.mubr.bf16.mxu0 0
  %498 = vmatmul.mubr.bf16.gmra.mrb[0].mxu0 %v361
  %v499 = vpop.f32.mrb[0].mxu0
  %v500 = vadd.f32 %v287, %v499
  %v501 = vpop.f32.mrb[0].mxu0
  %v502 = vadd.f32 %v289, %v501
  %v503 = vpop.f32.mrb[0].mxu0
  %v504 = vadd.f32 %v291, %v503
  %v505 = vpop.f32.mrb[0].mxu0
  %v506 = vadd.f32 %v293, %v505
  %507 = vmatprep.mubr.bf16.mxu0 0
  %508 = vmatmul.mubr.bf16.gmra.mrb[0].mxu0 %v364
  %v509 = vpop.f32.mrb[0].mxu0
  %v510 = vadd.f32 %v297, %v509
  %v511 = vpop.f32.mrb[0].mxu0
  %v512 = vadd.f32 %v299, %v511
  %v513 = vpop.f32.mrb[0].mxu0
  %v514 = vadd.f32 %v301, %v513
  %v515 = vpop.f32.mrb[0].mxu0
  %v516 = vadd.f32 %v303, %v515
  %517 = vmatprep.mubr.bf16.mxu0 0
  %518 = vmatmul.mubr.bf16.gmra.mrb[0].mxu0 %v367
  %v519 = vpop.f32.mrb[0].mxu0
  %v520 = vadd.f32 %v307, %v519
  %v521 = vpop.f32.mrb[0].mxu0
  %v522 = vadd.f32 %v309, %v521
  %v523 = vpop.f32.mrb[0].mxu0
  %v524 = vadd.f32 %v311, %v523
  %v525 = vpop.f32.mrb[0].mxu0
  %v526 = vadd.f32 %v313, %v525
  %527 = vdwg.mxu0
  %v528 = vpack.c.bf16 %v64, %v63
  %s529 = scalar_lea.vmem %s1, 64
  %v530 = vld [vmem:[%s529] sm:$0xff]
  %v531 = vld [vmem:[%s529 + $0x8] sm:$0xff]
  %v532 = vld [vmem:[%s529 + $0x10] sm:$0xff]
  %v533 = vld [vmem:[%s529 + $0x18] sm:$0x33]
  %v538 = vunpack.c.l.b16 %v530
  %v539 = vunpack.c.h.b16 %v530
  %v540 = vunpack.c.l.b16 %v531
  %v541 = vunpack.c.h.b16 %v531
  %v542 = vunpack.c.l.b16 %v532
  %v543 = vunpack.c.h.b16 %v532
  %v544 = vunpack.c.l.b16 %v533
  %v545 = vunpack.c.h.b16 %v533
  %v546 = vpack.c.b16 %v540, %v538
  %v547 = vpack.c.b16 %v541, %v539
  %v548 = vpack.c.b16 %v544, %v542
  %v549 = vpack.c.b16 %v545, %v543
  %v553 = vsel %vm118, %v528, 0
  %v556 = vsel %vm155, %v548, 0
  %v559 = vsel %vm155, %v549, 0
  %561 = vmatprep.subr.bf16.mxu0 %v547
  %562 = vmatpush1.bf16.msra.mxu0 %v546
  %563 = vmatprep.subr.bf16.mxu0 %v559
  %564 = vmatpush1.bf16.msra.mxu0 %v556
  %565 = vmatprep.subr.bf16.mxu0 0
  %566 = vmatpush1.bf16.msra.mxu0 0
  %567 = vmatprep.subr.bf16.mxu0 0
  %568 = vmatpush1.bf16.msra.mxu0 0
  %569 = vmatprep.subr.bf16.mxu0 0
  %570 = vmatpush1.bf16.msra.mxu0 0
  %571 = vmatprep.subr.bf16.mxu0 0
  %572 = vmatpush1.bf16.msra.mxu0 0
  %573 = vmatprep.subr.bf16.mxu0 0
  %574 = vmatpush1.bf16.msra.mxu0 0
  %575 = vmatprep.subr.bf16.mxu0 0
  %576 = vmatpush1.bf16.msra.mxu0 0
  %577 = vmatprep.subr.bf16.mxu0 0
  %578 = vmatpush1.bf16.msra.mxu0 0
  %579 = vmatprep.subr.bf16.mxu0 0
  %580 = vmatpush1.bf16.msra.mxu0 0
  %581 = vmatprep.subr.bf16.mxu0 0
  %582 = vmatpush1.bf16.msra.mxu0 0
  %583 = vmatprep.subr.bf16.mxu0 0
  %584 = vmatpush1.bf16.msra.mxu0 0
  %585 = vmatprep.subr.bf16.mxu0 0
  %586 = vmatpush1.bf16.msra.mxu0 0
  %587 = vmatprep.subr.bf16.mxu0 0
  %588 = vmatpush1.bf16.msra.mxu0 0
  %589 = vmatprep.subr.bf16.mxu0 0
  %590 = vmatpush1.bf16.msra.mxu0 0
  %591 = vmatprep.subr.bf16.mxu0 0
  %592 = vmatpush1.bf16.msra.mxu0 0
  %593 = vmatprep.mubr.bf16.mxu0 0
  %594 = vmatmul.mubr.bf16.gmra.mrb[0].mxu0 %v337
  %v595 = vpop.f32.mrb[0].mxu0
  %v596 = vadd.f32 0.0, %v595
  %v597 = vpop.f32.mrb[0].mxu0
  %v598 = vadd.f32 0.0, %v597
  %v599 = vpop.f32.mrb[0].mxu0
  %v600 = vadd.f32 0.0, %v599
  %v601 = vpop.f32.mrb[0].mxu0
  %v602 = vadd.f32 0.0, %v601
  %603 = vmatprep.mubr.bf16.mxu0 0
  %604 = vmatmul.mubr.bf16.gmra.mrb[0].mxu0 %v340
  %v605 = vpop.f32.mrb[0].mxu0
  %v606 = vadd.f32 0.0, %v605
  %v607 = vpop.f32.mrb[0].mxu0
  %v608 = vadd.f32 0.0, %v607
  %v609 = vpop.f32.mrb[0].mxu0
  %v610 = vadd.f32 0.0, %v609
  %v611 = vpop.f32.mrb[0].mxu0
  %v612 = vadd.f32 0.0, %v611
  %613 = vmatprep.mubr.bf16.mxu0 0
  %614 = vmatmul.mubr.bf16.gmra.mrb[0].mxu0 %v343
  %v615 = vpop.f32.mrb[0].mxu0
  %v616 = vadd.f32 0.0, %v615
  %v617 = vpop.f32.mrb[0].mxu0
  %v618 = vadd.f32 0.0, %v617
  %v619 = vpop.f32.mrb[0].mxu0
  %v620 = vadd.f32 0.0, %v619
  %v621 = vpop.f32.mrb[0].mxu0
  %v622 = vadd.f32 0.0, %v621
  %623 = vmatprep.mubr.bf16.mxu0 0
  %624 = vmatmul.mubr.bf16.gmra.mrb[0].mxu0 %v346
  %v625 = vpop.f32.mrb[0].mxu0
  %v626 = vadd.f32 0.0, %v625
  %v627 = vpop.f32.mrb[0].mxu0
  %v628 = vadd.f32 0.0, %v627
  %v629 = vpop.f32.mrb[0].mxu0
  %v630 = vadd.f32 0.0, %v629
  %v631 = vpop.f32.mrb[0].mxu0
  %v632 = vadd.f32 0.0, %v631
  %633 = vmatprep.mubr.bf16.mxu0 0
  %634 = vmatmul.mubr.bf16.gmra.mrb[0].mxu0 %v349
  %v635 = vpop.f32.mrb[0].mxu0
  %v636 = vadd.f32 0.0, %v635
  %v637 = vpop.f32.mrb[0].mxu0
  %v638 = vadd.f32 0.0, %v637
  %v639 = vpop.f32.mrb[0].mxu0
  %v640 = vadd.f32 0.0, %v639
  %v641 = vpop.f32.mrb[0].mxu0
  %v642 = vadd.f32 0.0, %v641
  %643 = vmatprep.mubr.bf16.mxu0 0
  %644 = vmatmul.mubr.bf16.gmra.mrb[0].mxu0 %v352
  %v645 = vpop.f32.mrb[0].mxu0
  %v646 = vadd.f32 0.0, %v645
  %v647 = vpop.f32.mrb[0].mxu0
  %v648 = vadd.f32 0.0, %v647
  %v649 = vpop.f32.mrb[0].mxu0
  %v650 = vadd.f32 0.0, %v649
  %v651 = vpop.f32.mrb[0].mxu0
  %v652 = vadd.f32 0.0, %v651
  %653 = vmatprep.mubr.bf16.mxu0 0
  %654 = vmatmul.mubr.bf16.gmra.mrb[0].mxu0 %v355
  %v655 = vpop.f32.mrb[0].mxu0
  %v656 = vadd.f32 0.0, %v655
  %v657 = vpop.f32.mrb[0].mxu0
  %v658 = vadd.f32 0.0, %v657
  %v659 = vpop.f32.mrb[0].mxu0
  %v660 = vadd.f32 0.0, %v659
  %v661 = vpop.f32.mrb[0].mxu0
  %v662 = vadd.f32 0.0, %v661
  %663 = vmatprep.mubr.bf16.mxu0 0
  %664 = vmatmul.mubr.bf16.gmra.mrb[0].mxu0 %v358
  %v665 = vpop.f32.mrb[0].mxu0
  %v666 = vadd.f32 0.0, %v665
  %v667 = vpop.f32.mrb[0].mxu0
  %v668 = vadd.f32 0.0, %v667
  %v669 = vpop.f32.mrb[0].mxu0
  %v670 = vadd.f32 0.0, %v669
  %v671 = vpop.f32.mrb[0].mxu0
  %v672 = vadd.f32 0.0, %v671
  %673 = vmatprep.mubr.bf16.mxu0 0
  %674 = vmatmul.mubr.bf16.gmra.mrb[0].mxu0 %v361
  %v675 = vpop.f32.mrb[0].mxu0
  %v676 = vadd.f32 0.0, %v675
  %v677 = vpop.f32.mrb[0].mxu0
  %v678 = vadd.f32 0.0, %v677
  %v679 = vpop.f32.mrb[0].mxu0
  %v680 = vadd.f32 0.0, %v679
  %v681 = vpop.f32.mrb[0].mxu0
  %v682 = vadd.f32 0.0, %v681
  %683 = vmatprep.mubr.bf16.mxu0 0
  %684 = vmatmul.mubr.bf16.gmra.mrb[0].mxu0 %v364
  %v685 = vpop.f32.mrb[0].mxu0
  %v686 = vadd.f32 0.0, %v685
  %v687 = vpop.f32.mrb[0].mxu0
  %v688 = vadd.f32 0.0, %v687
  %v689 = vpop.f32.mrb[0].mxu0
  %v690 = vadd.f32 0.0, %v689
  %v691 = vpop.f32.mrb[0].mxu0
  %v692 = vadd.f32 0.0, %v691
  %693 = vmatprep.mubr.bf16.mxu0 0
  %694 = vmatmul.mubr.bf16.gmra.mrb[0].mxu0 %v367
  %v695 = vpop.f32.mrb[0].mxu0
  %v696 = vadd.f32 0.0, %v695
  %v697 = vpop.f32.mrb[0].mxu0
  %v698 = vadd.f32 0.0, %v697
  %v699 = vpop.f32.mrb[0].mxu0
  %v700 = vadd.f32 0.0, %v699
  %v701 = vpop.f32.mrb[0].mxu0
  %v702 = vadd.f32 0.0, %v701
  %703 = vmatprep.mubr.bf16.mxu0 0
  %704 = vmatmul.mubr.bf16.gmra.mrb[0].mxu0 %v553
  %v705 = vpop.f32.mrb[0].mxu0
  %v706 = vadd.f32 0.0, %v705
  %v707 = vpop.f32.mrb[0].mxu0
  %v708 = vadd.f32 0.0, %v707
  %v709 = vpop.f32.mrb[0].mxu0
  %v710 = vadd.f32 0.0, %v709
  %v711 = vpop.f32.mrb[0].mxu0
  %v712 = vadd.f32 0.0, %v711
  %713 = vdwg.mxu0
  %v714 = vadd.f32 %v410, %v596
  %v715 = vadd.f32 %v412, %v598
  %v716 = vadd.f32 %v414, %v600
  %v717 = vadd.f32 %v416, %v602
  %v718 = vadd.f32 %v420, %v606
  %v719 = vadd.f32 %v422, %v608
  %v720 = vadd.f32 %v424, %v610
  %v721 = vadd.f32 %v426, %v612
  %v722 = vadd.f32 %v430, %v616
  %v723 = vadd.f32 %v432, %v618
  %v724 = vadd.f32 %v434, %v620
  %v725 = vadd.f32 %v436, %v622
  %v726 = vadd.f32 %v440, %v626
  %v727 = vadd.f32 %v442, %v628
  %v728 = vadd.f32 %v444, %v630
  %v729 = vadd.f32 %v446, %v632
  %v730 = vadd.f32 %v450, %v636
  %v731 = vadd.f32 %v452, %v638
  %v732 = vadd.f32 %v454, %v640
  %v733 = vadd.f32 %v456, %v642
  %v734 = vadd.f32 %v460, %v646
  %v735 = vadd.f32 %v462, %v648
  %v736 = vadd.f32 %v464, %v650
  %v737 = vadd.f32 %v466, %v652
  %v738 = vadd.f32 %v470, %v656
  %v739 = vadd.f32 %v472, %v658
  %v740 = vadd.f32 %v474, %v660
  %v741 = vadd.f32 %v476, %v662
  %v742 = vadd.f32 %v480, %v666
  %v743 = vadd.f32 %v482, %v668
  %v744 = vadd.f32 %v484, %v670
  %v745 = vadd.f32 %v486, %v672
  %v746 = vadd.f32 %v490, %v676
  %v747 = vadd.f32 %v492, %v678
  %v748 = vadd.f32 %v494, %v680
  %v749 = vadd.f32 %v496, %v682
  %v750 = vadd.f32 %v500, %v686
  %v751 = vadd.f32 %v502, %v688
  %v752 = vadd.f32 %v504, %v690
  %v753 = vadd.f32 %v506, %v692
  %v754 = vadd.f32 %v510, %v696
  %v755 = vadd.f32 %v512, %v698
  %v756 = vadd.f32 %v514, %v700
  %v757 = vadd.f32 %v516, %v702
  %v758 = vadd.f32 %v520, %v706
  %v759 = vadd.f32 %v522, %v708
  %v760 = vadd.f32 %v524, %v710
  %v761 = vadd.f32 %v526, %v712
  %v762 = vpack.c.bf16 %v65, %v64
  %s763 = scalar_lea.vmem %s1, 96
  %v764 = vld [vmem:[%s763] sm:$0xff]
  %v765 = vld [vmem:[%s763 + $0x8] sm:$0xff]
  %v766 = vld [vmem:[%s763 + $0x10] sm:$0xff]
  %v767 = vld [vmem:[%s763 + $0x18] sm:$0x33]
  %v772 = vunpack.c.l.b16 %v764
  %v773 = vunpack.c.h.b16 %v764
  %v774 = vunpack.c.l.b16 %v765
  %v775 = vunpack.c.h.b16 %v765
  %v776 = vunpack.c.l.b16 %v766
  %v777 = vunpack.c.h.b16 %v766
  %v778 = vunpack.c.l.b16 %v767
  %v779 = vunpack.c.h.b16 %v767
  %v780 = vpack.c.b16 %v774, %v772
  %v781 = vpack.c.b16 %v775, %v773
  %v782 = vpack.c.b16 %v778, %v776
  %v783 = vpack.c.b16 %v779, %v777
  %v787 = vsel %vm118, %v762, 0
  %v790 = vsel %vm155, %v782, 0
  %v793 = vsel %vm155, %v783, 0
  %795 = vmatprep.subr.bf16.mxu0 %v781
  %796 = vmatpush1.bf16.msra.mxu0 %v780
  %797 = vmatprep.subr.bf16.mxu0 %v793
  %798 = vmatpush1.bf16.msra.mxu0 %v790
  %799 = vmatprep.subr.bf16.mxu0 0
  %800 = vmatpush1.bf16.msra.mxu0 0
  %801 = vmatprep.subr.bf16.mxu0 0
  %802 = vmatpush1.bf16.msra.mxu0 0
  %803 = vmatprep.subr.bf16.mxu0 0
  %804 = vmatpush1.bf16.msra.mxu0 0
  %805 = vmatprep.subr.bf16.mxu0 0
  %806 = vmatpush1.bf16.msra.mxu0 0
  %807 = vmatprep.subr.bf16.mxu0 0
  %808 = vmatpush1.bf16.msra.mxu0 0
  %809 = vmatprep.subr.bf16.mxu0 0
  %810 = vmatpush1.bf16.msra.mxu0 0
  %811 = vmatprep.subr.bf16.mxu0 0
  %812 = vmatpush1.bf16.msra.mxu0 0
  %813 = vmatprep.subr.bf16.mxu0 0
  %814 = vmatpush1.bf16.msra.mxu0 0
  %815 = vmatprep.subr.bf16.mxu0 0
  %816 = vmatpush1.bf16.msra.mxu0 0
  %817 = vmatprep.subr.bf16.mxu0 0
  %818 = vmatpush1.bf16.msra.mxu0 0
  %819 = vmatprep.subr.bf16.mxu0 0
  %820 = vmatpush1.bf16.msra.mxu0 0
  %821 = vmatprep.subr.bf16.mxu0 0
  %822 = vmatpush1.bf16.msra.mxu0 0
  %823 = vmatprep.subr.bf16.mxu0 0
  %824 = vmatpush1.bf16.msra.mxu0 0
  %825 = vmatprep.subr.bf16.mxu0 0
  %826 = vmatpush1.bf16.msra.mxu0 0
  %827 = vmatprep.mubr.bf16.mxu0 0
  %828 = vmatmul.mubr.bf16.gmra.mrb[0].mxu0 %v123
  %v829 = vpop.f32.mrb[0].mxu0
  %v830 = vadd.f32 0.0, %v829
  %v831 = vpop.f32.mrb[0].mxu0
  %v832 = vadd.f32 0.0, %v831
  %v833 = vpop.f32.mrb[0].mxu0
  %v834 = vadd.f32 0.0, %v833
  %v835 = vpop.f32.mrb[0].mxu0
  %v836 = vadd.f32 0.0, %v835
  %837 = vmatprep.mubr.bf16.mxu0 0
  %838 = vmatmul.mubr.bf16.gmra.mrb[0].mxu0 %v126
  %v839 = vpop.f32.mrb[0].mxu0
  %v840 = vadd.f32 0.0, %v839
  %v841 = vpop.f32.mrb[0].mxu0
  %v842 = vadd.f32 0.0, %v841
  %v843 = vpop.f32.mrb[0].mxu0
  %v844 = vadd.f32 0.0, %v843
  %v845 = vpop.f32.mrb[0].mxu0
  %v846 = vadd.f32 0.0, %v845
  %847 = vmatprep.mubr.bf16.mxu0 0
  %848 = vmatmul.mubr.bf16.gmra.mrb[0].mxu0 %v129
  %v849 = vpop.f32.mrb[0].mxu0
  %v850 = vadd.f32 0.0, %v849
  %v851 = vpop.f32.mrb[0].mxu0
  %v852 = vadd.f32 0.0, %v851
  %v853 = vpop.f32.mrb[0].mxu0
  %v854 = vadd.f32 0.0, %v853
  %v855 = vpop.f32.mrb[0].mxu0
  %v856 = vadd.f32 0.0, %v855
  %857 = vmatprep.mubr.bf16.mxu0 0
  %858 = vmatmul.mubr.bf16.gmra.mrb[0].mxu0 %v132
  %v859 = vpop.f32.mrb[0].mxu0
  %v860 = vadd.f32 0.0, %v859
  %v861 = vpop.f32.mrb[0].mxu0
  %v862 = vadd.f32 0.0, %v861
  %v863 = vpop.f32.mrb[0].mxu0
  %v864 = vadd.f32 0.0, %v863
  %v865 = vpop.f32.mrb[0].mxu0
  %v866 = vadd.f32 0.0, %v865
  %867 = vmatprep.mubr.bf16.mxu0 0
  %868 = vmatmul.mubr.bf16.gmra.mrb[0].mxu0 %v135
  %v869 = vpop.f32.mrb[0].mxu0
  %v870 = vadd.f32 0.0, %v869
  %v871 = vpop.f32.mrb[0].mxu0
  %v872 = vadd.f32 0.0, %v871
  %v873 = vpop.f32.mrb[0].mxu0
  %v874 = vadd.f32 0.0, %v873
  %v875 = vpop.f32.mrb[0].mxu0
  %v876 = vadd.f32 0.0, %v875
  %877 = vmatprep.mubr.bf16.mxu0 0
  %878 = vmatmul.mubr.bf16.gmra.mrb[0].mxu0 %v138
  %v879 = vpop.f32.mrb[0].mxu0
  %v880 = vadd.f32 0.0, %v879
  %v881 = vpop.f32.mrb[0].mxu0
  %v882 = vadd.f32 0.0, %v881
  %v883 = vpop.f32.mrb[0].mxu0
  %v884 = vadd.f32 0.0, %v883
  %v885 = vpop.f32.mrb[0].mxu0
  %v886 = vadd.f32 0.0, %v885
  %887 = vmatprep.mubr.bf16.mxu0 0
  %888 = vmatmul.mubr.bf16.gmra.mrb[0].mxu0 %v141
  %v889 = vpop.f32.mrb[0].mxu0
  %v890 = vadd.f32 0.0, %v889
  %v891 = vpop.f32.mrb[0].mxu0
  %v892 = vadd.f32 0.0, %v891
  %v893 = vpop.f32.mrb[0].mxu0
  %v894 = vadd.f32 0.0, %v893
  %v895 = vpop.f32.mrb[0].mxu0
  %v896 = vadd.f32 0.0, %v895
  %897 = vmatprep.mubr.bf16.mxu0 0
  %898 = vmatmul.mubr.bf16.gmra.mrb[0].mxu0 %v144
  %v899 = vpop.f32.mrb[0].mxu0
  %v900 = vadd.f32 0.0, %v899
  %v901 = vpop.f32.mrb[0].mxu0
  %v902 = vadd.f32 0.0, %v901
  %v903 = vpop.f32.mrb[0].mxu0
  %v904 = vadd.f32 0.0, %v903
  %v905 = vpop.f32.mrb[0].mxu0
  %v906 = vadd.f32 0.0, %v905
  %907 = vmatprep.mubr.bf16.mxu0 0
  %908 = vmatmul.mubr.bf16.gmra.mrb[0].mxu0 %v147
  %v909 = vpop.f32.mrb[0].mxu0
  %v910 = vadd.f32 0.0, %v909
  %v911 = vpop.f32.mrb[0].mxu0
  %v912 = vadd.f32 0.0, %v911
  %v913 = vpop.f32.mrb[0].mxu0
  %v914 = vadd.f32 0.0, %v913
  %v915 = vpop.f32.mrb[0].mxu0
  %v916 = vadd.f32 0.0, %v915
  %917 = vmatprep.mubr.bf16.mxu0 0
  %918 = vmatmul.mubr.bf16.gmra.mrb[0].mxu0 %v150
  %v919 = vpop.f32.mrb[0].mxu0
  %v920 = vadd.f32 0.0, %v919
  %v921 = vpop.f32.mrb[0].mxu0
  %v922 = vadd.f32 0.0, %v921
  %v923 = vpop.f32.mrb[0].mxu0
  %v924 = vadd.f32 0.0, %v923
  %v925 = vpop.f32.mrb[0].mxu0
  %v926 = vadd.f32 0.0, %v925
  %927 = vmatprep.mubr.bf16.mxu0 0
  %928 = vmatmul.mubr.bf16.gmra.mrb[0].mxu0 %v153
  %v929 = vpop.f32.mrb[0].mxu0
  %v930 = vadd.f32 0.0, %v929
  %v931 = vpop.f32.mrb[0].mxu0
  %v932 = vadd.f32 0.0, %v931
  %v933 = vpop.f32.mrb[0].mxu0
  %v934 = vadd.f32 0.0, %v933
  %v935 = vpop.f32.mrb[0].mxu0
  %v936 = vadd.f32 0.0, %v935
  %937 = vmatprep.mubr.bf16.mxu0 0
  %938 = vmatmul.mubr.bf16.gmra.mrb[0].mxu0 %v787
  %v939 = vpop.f32.mrb[0].mxu0
  %v940 = vadd.f32 0.0, %v939
  %v941 = vpop.f32.mrb[0].mxu0
  %v942 = vadd.f32 0.0, %v941
  %v943 = vpop.f32.mrb[0].mxu0
  %v944 = vadd.f32 0.0, %v943
  %v945 = vpop.f32.mrb[0].mxu0
  %v946 = vadd.f32 0.0, %v945
  %947 = vdwg.mxu0
  %v948 = vadd.f32 %v714, %v830
  %v949 = vadd.f32 %v715, %v832
  %v950 = vadd.f32 %v716, %v834
  %v951 = vadd.f32 %v717, %v836
  %v952 = vadd.f32 %v718, %v840
  %v953 = vadd.f32 %v719, %v842
  %v954 = vadd.f32 %v720, %v844
  %v955 = vadd.f32 %v721, %v846
  %v956 = vadd.f32 %v722, %v850
  %v957 = vadd.f32 %v723, %v852
  %v958 = vadd.f32 %v724, %v854
  %v959 = vadd.f32 %v725, %v856
  %v960 = vadd.f32 %v726, %v860
  %v961 = vadd.f32 %v727, %v862
  %v962 = vadd.f32 %v728, %v864
  %v963 = vadd.f32 %v729, %v866
  %v964 = vadd.f32 %v730, %v870
  %v965 = vadd.f32 %v731, %v872
  %v966 = vadd.f32 %v732, %v874
  %v967 = vadd.f32 %v733, %v876
  %v968 = vadd.f32 %v734, %v880
  %v969 = vadd.f32 %v735, %v882
  %v970 = vadd.f32 %v736, %v884
  %v971 = vadd.f32 %v737, %v886
  %v972 = vadd.f32 %v738, %v890
  %v973 = vadd.f32 %v739, %v892
  %v974 = vadd.f32 %v740, %v894
  %v975 = vadd.f32 %v741, %v896
  %v976 = vadd.f32 %v742, %v900
  %v977 = vadd.f32 %v743, %v902
  %v978 = vadd.f32 %v744, %v904
  %v979 = vadd.f32 %v745, %v906
  %v980 = vadd.f32 %v746, %v910
  %v981 = vadd.f32 %v747, %v912
  %v982 = vadd.f32 %v748, %v914
  %v983 = vadd.f32 %v749, %v916
  %v984 = vadd.f32 %v750, %v920
  %v985 = vadd.f32 %v751, %v922
  %v986 = vadd.f32 %v752, %v924
  %v987 = vadd.f32 %v753, %v926
  %v988 = vadd.f32 %v754, %v930
  %v989 = vadd.f32 %v755, %v932
  %v990 = vadd.f32 %v756, %v934
  %v991 = vadd.f32 %v757, %v936
  %v992 = vadd.f32 %v758, %v940
  %v993 = vadd.f32 %v759, %v942
  %v994 = vadd.f32 %v760, %v944
  %v995 = vadd.f32 %v761, %v946
  %v996 = vpack.c.bf16 %v66, %v65
  %s997 = scalar_lea.vmem %s1, 128
  %v998 = vld [vmem:[%s997] sm:$0xff]
  %v999 = vld [vmem:[%s997 + $0x8] sm:$0xff]
  %v1000 = vld [vmem:[%s997 + $0x10] sm:$0xff]
  %v1001 = vld [vmem:[%s997 + $0x18] sm:$0x33]
  %v1006 = vunpack.c.l.b16 %v998
  %v1007 = vunpack.c.h.b16 %v998
  %v1008 = vunpack.c.l.b16 %v999
  %v1009 = vunpack.c.h.b16 %v999
  %v1010 = vunpack.c.l.b16 %v1000
  %v1011 = vunpack.c.h.b16 %v1000
  %v1012 = vunpack.c.l.b16 %v1001
  %v1013 = vunpack.c.h.b16 %v1001
  %v1014 = vpack.c.b16 %v1008, %v1006
  %v1015 = vpack.c.b16 %v1009, %v1007
  %v1016 = vpack.c.b16 %v1012, %v1010
  %v1017 = vpack.c.b16 %v1013, %v1011
  %v1021 = vsel %vm118, %v996, 0
  %v1024 = vsel %vm155, %v1016, 0
  %v1027 = vsel %vm155, %v1017, 0
  %1029 = vmatprep.subr.bf16.mxu0 %v1015
  %1030 = vmatpush1.bf16.msra.mxu0 %v1014
  %1031 = vmatprep.subr.bf16.mxu0 %v1027
  %1032 = vmatpush1.bf16.msra.mxu0 %v1024
  %1033 = vmatprep.subr.bf16.mxu0 0
  %1034 = vmatpush1.bf16.msra.mxu0 0
  %1035 = vmatprep.subr.bf16.mxu0 0
  %1036 = vmatpush1.bf16.msra.mxu0 0
  %1037 = vmatprep.subr.bf16.mxu0 0
  %1038 = vmatpush1.bf16.msra.mxu0 0
  %1039 = vmatprep.subr.bf16.mxu0 0
  %1040 = vmatpush1.bf16.msra.mxu0 0
  %1041 = vmatprep.subr.bf16.mxu0 0
  %1042 = vmatpush1.bf16.msra.mxu0 0
  %1043 = vmatprep.subr.bf16.mxu0 0
  %1044 = vmatpush1.bf16.msra.mxu0 0
  %1045 = vmatprep.subr.bf16.mxu0 0
  %1046 = vmatpush1.bf16.msra.mxu0 0
  %1047 = vmatprep.subr.bf16.mxu0 0
  %1048 = vmatpush1.bf16.msra.mxu0 0
  %1049 = vmatprep.subr.bf16.mxu0 0
  %1050 = vmatpush1.bf16.msra.mxu0 0
  %1051 = vmatprep.subr.bf16.mxu0 0
  %1052 = vmatpush1.bf16.msra.mxu0 0
  %1053 = vmatprep.subr.bf16.mxu0 0
  %1054 = vmatpush1.bf16.msra.mxu0 0
  %1055 = vmatprep.subr.bf16.mxu0 0
  %1056 = vmatpush1.bf16.msra.mxu0 0
  %1057 = vmatprep.subr.bf16.mxu0 0
  %1058 = vmatpush1.bf16.msra.mxu0 0
  %1059 = vmatprep.subr.bf16.mxu0 0
  %1060 = vmatpush1.bf16.msra.mxu0 0
  %1061 = vmatprep.mubr.bf16.mxu0 0
  %1062 = vmatmul.mubr.bf16.gmra.mrb[0].mxu0 %v340
  %v1063 = vpop.f32.mrb[0].mxu0
  %v1064 = vadd.f32 0.0, %v1063
  %v1065 = vpop.f32.mrb[0].mxu0
  %v1066 = vadd.f32 0.0, %v1065
  %v1067 = vpop.f32.mrb[0].mxu0
  %v1068 = vadd.f32 0.0, %v1067
  %v1069 = vpop.f32.mrb[0].mxu0
  %v1070 = vadd.f32 0.0, %v1069
  %1071 = vmatprep.mubr.bf16.mxu0 0
  %1072 = vmatmul.mubr.bf16.gmra.mrb[0].mxu0 %v343
  %v1073 = vpop.f32.mrb[0].mxu0
  %v1074 = vadd.f32 0.0, %v1073
  %v1075 = vpop.f32.mrb[0].mxu0
  %v1076 = vadd.f32 0.0, %v1075
  %v1077 = vpop.f32.mrb[0].mxu0
  %v1078 = vadd.f32 0.0, %v1077
  %v1079 = vpop.f32.mrb[0].mxu0
  %v1080 = vadd.f32 0.0, %v1079
  %1081 = vmatprep.mubr.bf16.mxu0 0
  %1082 = vmatmul.mubr.bf16.gmra.mrb[0].mxu0 %v346
  %v1083 = vpop.f32.mrb[0].mxu0
  %v1084 = vadd.f32 0.0, %v1083
  %v1085 = vpop.f32.mrb[0].mxu0
  %v1086 = vadd.f32 0.0, %v1085
  %v1087 = vpop.f32.mrb[0].mxu0
  %v1088 = vadd.f32 0.0, %v1087
  %v1089 = vpop.f32.mrb[0].mxu0
  %v1090 = vadd.f32 0.0, %v1089
  %1091 = vmatprep.mubr.bf16.mxu0 0
  %1092 = vmatmul.mubr.bf16.gmra.mrb[0].mxu0 %v349
  %v1093 = vpop.f32.mrb[0].mxu0
  %v1094 = vadd.f32 0.0, %v1093
  %v1095 = vpop.f32.mrb[0].mxu0
  %v1096 = vadd.f32 0.0, %v1095
  %v1097 = vpop.f32.mrb[0].mxu0
  %v1098 = vadd.f32 0.0, %v1097
  %v1099 = vpop.f32.mrb[0].mxu0
  %v1100 = vadd.f32 0.0, %v1099
  %1101 = vmatprep.mubr.bf16.mxu0 0
  %1102 = vmatmul.mubr.bf16.gmra.mrb[0].mxu0 %v352
  %v1103 = vpop.f32.mrb[0].mxu0
  %v1104 = vadd.f32 0.0, %v1103
  %v1105 = vpop.f32.mrb[0].mxu0
  %v1106 = vadd.f32 0.0, %v1105
  %v1107 = vpop.f32.mrb[0].mxu0
  %v1108 = vadd.f32 0.0, %v1107
  %v1109 = vpop.f32.mrb[0].mxu0
  %v1110 = vadd.f32 0.0, %v1109
  %1111 = vmatprep.mubr.bf16.mxu0 0
  %1112 = vmatmul.mubr.bf16.gmra.mrb[0].mxu0 %v355
  %v1113 = vpop.f32.mrb[0].mxu0
  %v1114 = vadd.f32 0.0, %v1113
  %v1115 = vpop.f32.mrb[0].mxu0
  %v1116 = vadd.f32 0.0, %v1115
  %v1117 = vpop.f32.mrb[0].mxu0
  %v1118 = vadd.f32 0.0, %v1117
  %v1119 = vpop.f32.mrb[0].mxu0
  %v1120 = vadd.f32 0.0, %v1119
  %1121 = vmatprep.mubr.bf16.mxu0 0
  %1122 = vmatmul.mubr.bf16.gmra.mrb[0].mxu0 %v358
  %v1123 = vpop.f32.mrb[0].mxu0
  %v1124 = vadd.f32 0.0, %v1123
  %v1125 = vpop.f32.mrb[0].mxu0
  %v1126 = vadd.f32 0.0, %v1125
  %v1127 = vpop.f32.mrb[0].mxu0
  %v1128 = vadd.f32 0.0, %v1127
  %v1129 = vpop.f32.mrb[0].mxu0
  %v1130 = vadd.f32 0.0, %v1129
  %1131 = vmatprep.mubr.bf16.mxu0 0
  %1132 = vmatmul.mubr.bf16.gmra.mrb[0].mxu0 %v361
  %v1133 = vpop.f32.mrb[0].mxu0
  %v1134 = vadd.f32 0.0, %v1133
  %v1135 = vpop.f32.mrb[0].mxu0
  %v1136 = vadd.f32 0.0, %v1135
  %v1137 = vpop.f32.mrb[0].mxu0
  %v1138 = vadd.f32 0.0, %v1137
  %v1139 = vpop.f32.mrb[0].mxu0
  %v1140 = vadd.f32 0.0, %v1139
  %1141 = vmatprep.mubr.bf16.mxu0 0
  %1142 = vmatmul.mubr.bf16.gmra.mrb[0].mxu0 %v364
  %v1143 = vpop.f32.mrb[0].mxu0
  %v1144 = vadd.f32 0.0, %v1143
  %v1145 = vpop.f32.mrb[0].mxu0
  %v1146 = vadd.f32 0.0, %v1145
  %v1147 = vpop.f32.mrb[0].mxu0
  %v1148 = vadd.f32 0.0, %v1147
  %v1149 = vpop.f32.mrb[0].mxu0
  %v1150 = vadd.f32 0.0, %v1149
  %1151 = vmatprep.mubr.bf16.mxu0 0
  %1152 = vmatmul.mubr.bf16.gmra.mrb[0].mxu0 %v367
  %v1153 = vpop.f32.mrb[0].mxu0
  %v1154 = vadd.f32 0.0, %v1153
  %v1155 = vpop.f32.mrb[0].mxu0
  %v1156 = vadd.f32 0.0, %v1155
  %v1157 = vpop.f32.mrb[0].mxu0
  %v1158 = vadd.f32 0.0, %v1157
  %v1159 = vpop.f32.mrb[0].mxu0
  %v1160 = vadd.f32 0.0, %v1159
  %1161 = vmatprep.mubr.bf16.mxu0 0
  %1162 = vmatmul.mubr.bf16.gmra.mrb[0].mxu0 %v553
  %v1163 = vpop.f32.mrb[0].mxu0
  %v1164 = vadd.f32 0.0, %v1163
  %v1165 = vpop.f32.mrb[0].mxu0
  %v1166 = vadd.f32 0.0, %v1165
  %v1167 = vpop.f32.mrb[0].mxu0
  %v1168 = vadd.f32 0.0, %v1167
  %v1169 = vpop.f32.mrb[0].mxu0
  %v1170 = vadd.f32 0.0, %v1169
  %1171 = vmatprep.mubr.bf16.mxu0 0
  %1172 = vmatmul.mubr.bf16.gmra.mrb[0].mxu0 %v1021
  %v1173 = vpop.f32.mrb[0].mxu0
  %v1174 = vadd.f32 0.0, %v1173
  %v1175 = vpop.f32.mrb[0].mxu0
  %v1176 = vadd.f32 0.0, %v1175
  %v1177 = vpop.f32.mrb[0].mxu0
  %v1178 = vadd.f32 0.0, %v1177
  %v1179 = vpop.f32.mrb[0].mxu0
  %v1180 = vadd.f32 0.0, %v1179
  %1181 = vdwg.mxu0
  %v1182 = vadd.f32 %v948, %v1064
  %v1183 = vadd.f32 %v949, %v1066
  %v1184 = vadd.f32 %v950, %v1068
  %v1185 = vadd.f32 %v951, %v1070
  %v1186 = vadd.f32 %v952, %v1074
  %v1187 = vadd.f32 %v953, %v1076
  %v1188 = vadd.f32 %v954, %v1078
  %v1189 = vadd.f32 %v955, %v1080
  %v1190 = vadd.f32 %v956, %v1084
  %v1191 = vadd.f32 %v957, %v1086
  %v1192 = vadd.f32 %v958, %v1088
  %v1193 = vadd.f32 %v959, %v1090
  %v1194 = vadd.f32 %v960, %v1094
  %v1195 = vadd.f32 %v961, %v1096
  %v1196 = vadd.f32 %v962, %v1098
  %v1197 = vadd.f32 %v963, %v1100
  %v1198 = vadd.f32 %v964, %v1104
  %v1199 = vadd.f32 %v965, %v1106
  %v1200 = vadd.f32 %v966, %v1108
  %v1201 = vadd.f32 %v967, %v1110
  %v1202 = vadd.f32 %v968, %v1114
  %v1203 = vadd.f32 %v969, %v1116
  %v1204 = vadd.f32 %v970, %v1118
  %v1205 = vadd.f32 %v971, %v1120
  %v1206 = vadd.f32 %v972, %v1124
  %v1207 = vadd.f32 %v973, %v1126
  %v1208 = vadd.f32 %v974, %v1128
  %v1209 = vadd.f32 %v975, %v1130
  %v1210 = vadd.f32 %v976, %v1134
  %v1211 = vadd.f32 %v977, %v1136
  %v1212 = vadd.f32 %v978, %v1138
  %v1213 = vadd.f32 %v979, %v1140
  %v1214 = vadd.f32 %v980, %v1144
  %v1215 = vadd.f32 %v981, %v1146
  %v1216 = vadd.f32 %v982, %v1148
  %v1217 = vadd.f32 %v983, %v1150
  %v1218 = vadd.f32 %v984, %v1154
  %v1219 = vadd.f32 %v985, %v1156
  %v1220 = vadd.f32 %v986, %v1158
  %v1221 = vadd.f32 %v987, %v1160
  %v1222 = vadd.f32 %v988, %v1164
  %v1223 = vadd.f32 %v989, %v1166
  %v1224 = vadd.f32 %v990, %v1168
  %v1225 = vadd.f32 %v991, %v1170
  %v1226 = vadd.f32 %v992, %v1174
  %v1227 = vadd.f32 %v993, %v1176
  %v1228 = vadd.f32 %v994, %v1178
  %v1229 = vadd.f32 %v995, %v1180
  %v1230 = vmax.f32 %v1182, %v1184
  %v1231 = vmax.f32 %v1183, %v1185
  %v1232 = vmax.f32 %v1186, %v1188
  %v1233 = vmax.f32 %v1187, %v1189
  %v1234 = vmax.f32 %v1190, %v1192
  %v1235 = vmax.f32 %v1191, %v1193
  %v1236 = vmax.f32 %v1194, %v1196
  %v1237 = vmax.f32 %v1195, %v1197
  %v1238 = vmax.f32 %v1198, %v1200
  %v1239 = vmax.f32 %v1199, %v1201
  %v1240 = vmax.f32 %v1202, %v1204
  %v1241 = vmax.f32 %v1203, %v1205
  %v1242 = vmax.f32 %v1206, %v1208
  %v1243 = vmax.f32 %v1207, %v1209
  %v1244 = vmax.f32 %v1210, %v1212
  %v1245 = vmax.f32 %v1211, %v1213
  %v1246 = vmax.f32 %v1214, %v1216
  %v1247 = vmax.f32 %v1215, %v1217
  %v1248 = vmax.f32 %v1218, %v1220
  %v1249 = vmax.f32 %v1219, %v1221
  %v1250 = vmax.f32 %v1222, %v1224
  %v1251 = vmax.f32 %v1223, %v1225
  %v1252 = vmax.f32 %v1226, %v1228
  %v1253 = vmax.f32 %v1227, %v1229
  %v1254 = vld [vmem:[%s9] sm:$0xff]
  %v1255 = vld [vmem:[%s9 + $0x8] sm:$0xff]
  %v1256 = vld [vmem:[%s9 + $0x10] sm:$0xff]
  %v1257 = vld [vmem:[%s9 + $0x18] sm:$0xff]
  %v1258 = vld [vmem:[%s9 + $0x20] sm:$0xff]
  %v1259 = vld [vmem:[%s9 + $0x28] sm:$0xff]
  %v1260 = vld [vmem:[%s9 + $0x30] sm:$0xff]
  %v1261 = vld [vmem:[%s9 + $0x38] sm:$0xff]
  %v1262 = vld [vmem:[%s9 + $0x40] sm:$0xff]
  %v1263 = vld [vmem:[%s9 + $0x48] sm:$0xff]
  %v1264 = vld [vmem:[%s9 + $0x50] sm:$0xff]
  %v1265 = vld [vmem:[%s9 + $0x58] sm:$0xff]
  %v1266 = vld [vmem:[%s9 + $0x60] sm:$0xff]
  %v1267 = vld [vmem:[%s9 + $0x68] sm:$0xff]
  %v1268 = vld [vmem:[%s9 + $0x70] sm:$0xff]
  %v1269 = vld [vmem:[%s9 + $0x78] sm:$0xff]
  %v1270 = vld [vmem:[%s9 + $0x80] sm:$0xff]
  %v1271 = vld [vmem:[%s9 + $0x88] sm:$0xff]
  %v1272 = vld [vmem:[%s9 + $0x90] sm:$0xff]
  %v1273 = vld [vmem:[%s9 + $0x98] sm:$0xff]
  %v1274 = vld [vmem:[%s9 + $0xa0] sm:$0xff]
  %v1275 = vld [vmem:[%s9 + $0xa8] sm:$0xff]
  %v1276 = vld [vmem:[%s9 + $0xb0] sm:$0xff]
  %v1277 = vld [vmem:[%s9 + $0xb8] sm:$0xff]
  %v1278 = vld [vmem:[%s9 + $0xc0] sm:$0xff]
  %v1279 = vld [vmem:[%s9 + $0xc8] sm:$0xff]
  %v1280 = vld [vmem:[%s9 + $0xd0] sm:$0xff]
  %v1281 = vld [vmem:[%s9 + $0xd8] sm:$0xff]
  %v1282 = vld [vmem:[%s9 + $0xe0] sm:$0xff]
  %v1283 = vld [vmem:[%s9 + $0xe8] sm:$0xff]
  %v1284 = vld [vmem:[%s9 + $0xf0] sm:$0xff]
  %v1285 = vld [vmem:[%s9 + $0xf8] sm:$0xff]
  %v1286 = vld [vmem:[%s9 + $0x100] sm:$0xff]
  %v1287 = vld [vmem:[%s9 + $0x108] sm:$0xff]
  %v1288 = vld [vmem:[%s9 + $0x110] sm:$0xff]
  %v1289 = vld [vmem:[%s9 + $0x118] sm:$0xff]
  %v1290 = vld [vmem:[%s9 + $0x120] sm:$0xff]
  %v1291 = vld [vmem:[%s9 + $0x128] sm:$0xff]
  %v1292 = vld [vmem:[%s9 + $0x130] sm:$0xff]
  %v1293 = vld [vmem:[%s9 + $0x138] sm:$0xff]
  %v1294 = vld [vmem:[%s9 + $0x140] sm:$0xff]
  %v1295 = vld [vmem:[%s9 + $0x148] sm:$0xff]
  %v1296 = vld [vmem:[%s9 + $0x150] sm:$0xff]
  %v1297 = vld [vmem:[%s9 + $0x158] sm:$0xff]
  %v1298 = vld [vmem:[%s9 + $0x160] sm:$0xff]
  %v1299 = vld [vmem:[%s9 + $0x168] sm:$0xff]
  %v1300 = vld [vmem:[%s9 + $0x170] sm:$0xff]
  %v1301 = vld [vmem:[%s9 + $0x178] sm:$0xff]
  %v1302 = vld [vmem:[%s9 + $0x180] sm:$0xff]
  %v1303 = vld [vmem:[%s9 + $0x188] sm:$0xff]
  %v1304 = vld [vmem:[%s9 + $0x190] sm:$0xff]
  %v1305 = vld [vmem:[%s9 + $0x198] sm:$0xff]
  %v1306 = vld [vmem:[%s9 + $0x1a0] sm:$0xff]
  %v1307 = vld [vmem:[%s9 + $0x1a8] sm:$0xff]
  %v1308 = vld [vmem:[%s9 + $0x1b0] sm:$0xff]
  %v1309 = vld [vmem:[%s9 + $0x1b8] sm:$0xff]
  %v1310 = vld [vmem:[%s9 + $0x1c0] sm:$0xff]
  %v1311 = vld [vmem:[%s9 + $0x1c8] sm:$0xff]
  %v1312 = vld [vmem:[%s9 + $0x1d0] sm:$0xff]
  %v1313 = vld [vmem:[%s9 + $0x1d8] sm:$0xff]
  %vm1314 = vcmask 916480
  %v1316 = vsel %vm1314, %v1231, 0
  %v1319 = vsel %vm1314, %v1233, 0
  %v1322 = vsel %vm1314, %v1235, 0
  %v1325 = vsel %vm1314, %v1237, 0
  %v1328 = vsel %vm1314, %v1239, 0
  %v1331 = vsel %vm1314, %v1241, 0
  %v1334 = vsel %vm1314, %v1243, 0
  %v1337 = vsel %vm1314, %v1245, 0
  %v1340 = vsel %vm1314, %v1247, 0
  %v1343 = vsel %vm1314, %v1249, 0
  %v1346 = vsel %vm1314, %v1251, 0
  %v1349 = vsel %vm1314, %v1253, 0
  %1351 = vmatprep.subr.mxu0 %v1255
  %1352 = vmatpush1.msra.mxu0 %v1254
  %1353 = vmatprep.subr.mxu0 %v1257
  %1354 = vmatpush1.msra.mxu0 %v1256
  %1355 = vmatprep.subr.mxu0 %v1259
  %1356 = vmatpush1.msra.mxu0 %v1258
  %1357 = vmatprep.subr.mxu0 %v1261
  %1358 = vmatpush1.msra.mxu0 %v1260
  %1359 = vmatprep.subr.mxu0 %v1263
  %1360 = vmatpush1.msra.mxu0 %v1262
  %1361 = vmatprep.subr.mxu0 %v1265
  %1362 = vmatpush1.msra.mxu0 %v1264
  %1363 = vmatprep.subr.mxu0 %v1267
  %1364 = vmatpush1.msra.mxu0 %v1266
  %1365 = vmatprep.subr.mxu0 %v1269
  %1366 = vmatpush1.msra.mxu0 %v1268
  %1367 = vmatprep.subr.mxu0 %v1271
  %1368 = vmatpush1.msra.mxu0 %v1270
  %1369 = vmatprep.subr.mxu0 %v1273
  %1370 = vmatpush1.msra.mxu0 %v1272
  %1371 = vmatprep.subr.mxu0 %v1275
  %1372 = vmatpush1.msra.mxu0 %v1274
  %1373 = vmatprep.subr.mxu0 %v1277
  %1374 = vmatpush1.msra.mxu0 %v1276
  %1375 = vmatprep.subr.mxu0 %v1279
  %1376 = vmatpush1.msra.mxu0 %v1278
  %1377 = vmatprep.subr.mxu0 %v1281
  %1378 = vmatpush1.msra.mxu0 %v1280
  %1379 = vmatprep.subr.mxu0 %v1283
  %1380 = vmatpush1.msra.mxu0 %v1282
  %1381 = vmatprep.subr.mxu0 %v1285
  %1382 = vmatpush1.msra.mxu0 %v1284
  %1383 = vmatprep.subr.mxu0 %v1287
  %1384 = vmatpush1.msra.mxu0 %v1286
  %1385 = vmatprep.subr.mxu0 %v1289
  %1386 = vmatpush1.msra.mxu0 %v1288
  %1387 = vmatprep.subr.mxu0 %v1291
  %1388 = vmatpush1.msra.mxu0 %v1290
  %1389 = vmatprep.subr.mxu0 %v1293
  %1390 = vmatpush1.msra.mxu0 %v1292
  %1391 = vmatprep.subr.mxu0 %v1295
  %1392 = vmatpush1.msra.mxu0 %v1294
  %1393 = vmatprep.subr.mxu0 %v1297
  %1394 = vmatpush1.msra.mxu0 %v1296
  %1395 = vmatprep.subr.mxu0 %v1299
  %1396 = vmatpush1.msra.mxu0 %v1298
  %1397 = vmatprep.subr.mxu0 %v1301
  %1398 = vmatpush1.msra.mxu0 %v1300
  %1399 = vmatprep.subr.mxu0 %v1303
  %1400 = vmatpush1.msra.mxu0 %v1302
  %1401 = vmatprep.subr.mxu0 %v1305
  %1402 = vmatpush1.msra.mxu0 %v1304
  %1403 = vmatprep.subr.mxu0 %v1307
  %1404 = vmatpush1.msra.mxu0 %v1306
  %1405 = vmatprep.subr.mxu0 %v1309
  %1406 = vmatpush1.msra.mxu0 %v1308
  %1407 = vmatprep.subr.mxu0 %v1311
  %1408 = vmatpush1.msra.mxu0 %v1310
  %1409 = vmatprep.subr.mxu0 %v1313
  %1410 = vmatpush1.msra.mxu0 %v1312
  %1411 = vmatprep.subr.mxu0 0.0
  %1412 = vmatpush1.msra.mxu0 0.0
  %1413 = vmatprep.subr.mxu0 0.0
  %1414 = vmatpush1.msra.mxu0 0.0
  %1415 = vmatprep.mubr.f32.mxu0 %v1316
  %1416 = vmatmul.mubr.f32.gmra.mrb[0].mxu0 %v1230
  %v1417 = vpop.f32.mrb[0].mxu0
  %v1418 = vadd.f32 0.0, %v1417
  %v1419 = vpop.f32.mrb[0].mxu0
  %v1420 = vadd.f32 0.0, %v1419
  %1421 = vmatprep.mubr.f32.mxu0 %v1319
  %1422 = vmatmul.mubr.f32.gmra.mrb[0].mxu0 %v1232
  %v1423 = vpop.f32.mrb[0].mxu0
  %v1424 = vadd.f32 0.0, %v1423
  %v1425 = vpop.f32.mrb[0].mxu0
  %v1426 = vadd.f32 0.0, %v1425
  %1427 = vmatprep.mubr.f32.mxu0 %v1322
  %1428 = vmatmul.mubr.f32.gmra.mrb[0].mxu0 %v1234
  %v1429 = vpop.f32.mrb[0].mxu0
  %v1430 = vadd.f32 0.0, %v1429
  %v1431 = vpop.f32.mrb[0].mxu0
  %v1432 = vadd.f32 0.0, %v1431
  %1433 = vmatprep.mubr.f32.mxu0 %v1325
  %1434 = vmatmul.mubr.f32.gmra.mrb[0].mxu0 %v1236
  %v1435 = vpop.f32.mrb[0].mxu0
  %v1436 = vadd.f32 0.0, %v1435
  %v1437 = vpop.f32.mrb[0].mxu0
  %v1438 = vadd.f32 0.0, %v1437
  %1439 = vmatprep.mubr.f32.mxu0 %v1328
  %1440 = vmatmul.mubr.f32.gmra.mrb[0].mxu0 %v1238
  %v1441 = vpop.f32.mrb[0].mxu0
  %v1442 = vadd.f32 0.0, %v1441
  %v1443 = vpop.f32.mrb[0].mxu0
  %v1444 = vadd.f32 0.0, %v1443
  %1445 = vmatprep.mubr.f32.mxu0 %v1331
  %1446 = vmatmul.mubr.f32.gmra.mrb[0].mxu0 %v1240
  %v1447 = vpop.f32.mrb[0].mxu0
  %v1448 = vadd.f32 0.0, %v1447
  %v1449 = vpop.f32.mrb[0].mxu0
  %v1450 = vadd.f32 0.0, %v1449
  %1451 = vmatprep.mubr.f32.mxu0 %v1334
  %1452 = vmatmul.mubr.f32.gmra.mrb[0].mxu0 %v1242
  %v1453 = vpop.f32.mrb[0].mxu0
  %v1454 = vadd.f32 0.0, %v1453
  %v1455 = vpop.f32.mrb[0].mxu0
  %v1456 = vadd.f32 0.0, %v1455
  %1457 = vmatprep.mubr.f32.mxu0 %v1337
  %1458 = vmatmul.mubr.f32.gmra.mrb[0].mxu0 %v1244
  %v1459 = vpop.f32.mrb[0].mxu0
  %v1460 = vadd.f32 0.0, %v1459
  %v1461 = vpop.f32.mrb[0].mxu0
  %v1462 = vadd.f32 0.0, %v1461
  %1463 = vmatprep.mubr.f32.mxu0 %v1340
  %1464 = vmatmul.mubr.f32.gmra.mrb[0].mxu0 %v1246
  %v1465 = vpop.f32.mrb[0].mxu0
  %v1466 = vadd.f32 0.0, %v1465
  %v1467 = vpop.f32.mrb[0].mxu0
  %v1468 = vadd.f32 0.0, %v1467
  %1469 = vmatprep.mubr.f32.mxu0 %v1343
  %1470 = vmatmul.mubr.f32.gmra.mrb[0].mxu0 %v1248
  %v1471 = vpop.f32.mrb[0].mxu0
  %v1472 = vadd.f32 0.0, %v1471
  %v1473 = vpop.f32.mrb[0].mxu0
  %v1474 = vadd.f32 0.0, %v1473
  %1475 = vmatprep.mubr.f32.mxu0 %v1346
  %1476 = vmatmul.mubr.f32.gmra.mrb[0].mxu0 %v1250
  %v1477 = vpop.f32.mrb[0].mxu0
  %v1478 = vadd.f32 0.0, %v1477
  %v1479 = vpop.f32.mrb[0].mxu0
  %v1480 = vadd.f32 0.0, %v1479
  %1481 = vmatprep.mubr.f32.mxu0 %v1349
  %1482 = vmatmul.mubr.f32.gmra.mrb[0].mxu0 %v1252
  %v1483 = vpop.f32.mrb[0].mxu0
  %v1484 = vadd.f32 0.0, %v1483
  %v1485 = vpop.f32.mrb[0].mxu0
  %v1486 = vadd.f32 0.0, %v1485
  %1487 = vdwg.mxu0
  %v1488 = vmax.f32 %v1230, %v1418
  %v1489 = vmax.f32 %v1231, %v1420
  %v1490 = vmax.f32 %v1232, %v1424
  %v1491 = vmax.f32 %v1233, %v1426
  %v1492 = vmax.f32 %v1234, %v1430
  %v1493 = vmax.f32 %v1235, %v1432
  %v1494 = vmax.f32 %v1236, %v1436
  %v1495 = vmax.f32 %v1237, %v1438
  %v1496 = vmax.f32 %v1238, %v1442
  %v1497 = vmax.f32 %v1239, %v1444
  %v1498 = vmax.f32 %v1240, %v1448
  %v1499 = vmax.f32 %v1241, %v1450
  %v1500 = vmax.f32 %v1242, %v1454
  %v1501 = vmax.f32 %v1243, %v1456
  %v1502 = vmax.f32 %v1244, %v1460
  %v1503 = vmax.f32 %v1245, %v1462
  %v1504 = vmax.f32 %v1246, %v1466
  %v1505 = vmax.f32 %v1247, %v1468
  %v1506 = vmax.f32 %v1248, %v1472
  %v1507 = vmax.f32 %v1249, %v1474
  %v1508 = vmax.f32 %v1250, %v1478
  %v1509 = vmax.f32 %v1251, %v1480
  %v1510 = vmax.f32 %v1252, %v1484
  %v1511 = vmax.f32 %v1253, %v1486
  %v1512 = vld [vmem:[%s2] sm:$0x3]
  %v1514 = vlaneseq
  %v1515 = vshrl.u32 %v1514, 7
  %v1516 = vsub.s32 0, %v1515
  %v1517 = vrot.slane %v1512, %v1516
  %v1518 = vlaneseq
  %v1519 = vshrl.u32 %v1518, 7
  %v1520 = vsub.s32 1, %v1519
  %v1521 = vrot.slane %v1512, %v1520
  %v1524 = vadd.f32 %v1488, %v1517
  %v1525 = vadd.f32 %v1489, %v1521
  %v1526 = vadd.f32 %v1490, %v1517
  %v1527 = vadd.f32 %v1491, %v1521
  %v1528 = vadd.f32 %v1492, %v1517
  %v1529 = vadd.f32 %v1493, %v1521
  %v1530 = vadd.f32 %v1494, %v1517
  %v1531 = vadd.f32 %v1495, %v1521
  %v1532 = vadd.f32 %v1496, %v1517
  %v1533 = vadd.f32 %v1497, %v1521
  %v1534 = vadd.f32 %v1498, %v1517
  %v1535 = vadd.f32 %v1499, %v1521
  %v1536 = vadd.f32 %v1500, %v1517
  %v1537 = vadd.f32 %v1501, %v1521
  %v1538 = vadd.f32 %v1502, %v1517
  %v1539 = vadd.f32 %v1503, %v1521
  %v1540 = vadd.f32 %v1504, %v1517
  %v1541 = vadd.f32 %v1505, %v1521
  %v1542 = vadd.f32 %v1506, %v1517
  %v1543 = vadd.f32 %v1507, %v1521
  %v1544 = vadd.f32 %v1508, %v1517
  %v1545 = vadd.f32 %v1509, %v1521
  %v1546 = vadd.f32 %v1510, %v1517
  %v1547 = vadd.f32 %v1511, %v1521
  %v1548 = vmax.f32 %v1524, 0.0
  %v1549 = vmax.f32 %v1525, 0.0
  %v1550 = vmax.f32 %v1526, 0.0
  %v1551 = vmax.f32 %v1527, 0.0
  %v1552 = vmax.f32 %v1528, 0.0
  %v1553 = vmax.f32 %v1529, 0.0
  %v1554 = vmax.f32 %v1530, 0.0
  %v1555 = vmax.f32 %v1531, 0.0
  %v1556 = vmax.f32 %v1532, 0.0
  %v1557 = vmax.f32 %v1533, 0.0
  %v1558 = vmax.f32 %v1534, 0.0
  %v1559 = vmax.f32 %v1535, 0.0
  %v1560 = vmax.f32 %v1536, 0.0
  %v1561 = vmax.f32 %v1537, 0.0
  %v1562 = vmax.f32 %v1538, 0.0
  %v1563 = vmax.f32 %v1539, 0.0
  %v1564 = vmax.f32 %v1540, 0.0
  %v1565 = vmax.f32 %v1541, 0.0
  %v1566 = vmax.f32 %v1542, 0.0
  %v1567 = vmax.f32 %v1543, 0.0
  %v1568 = vmax.f32 %v1544, 0.0
  %v1569 = vmax.f32 %v1545, 0.0
  %v1570 = vmax.f32 %v1546, 0.0
  %v1571 = vmax.f32 %v1547, 0.0
  %v1572 = vpack.c.bf16 %v1550, %v1548
  %v1573 = vpack.c.bf16 %v1551, %v1549
  %v1574 = vpack.c.bf16 %v1554, %v1552
  %v1575 = vpack.c.bf16 %v1555, %v1553
  %v1576 = vpack.c.bf16 %v1558, %v1556
  %v1577 = vpack.c.bf16 %v1559, %v1557
  %v1578 = vpack.c.bf16 %v1562, %v1560
  %v1579 = vpack.c.bf16 %v1563, %v1561
  %v1580 = vld [vmem:[%s3] sm:$0xff]
  %v1581 = vld [vmem:[%s3 + $0x8] sm:$0xff]
  %v1582 = vld [vmem:[%s3 + $0x10] sm:$0xff]
  %v1583 = vld [vmem:[%s3 + $0x18] sm:$0xff]
  %v1584 = vld [vmem:[%s3 + $0x20] sm:$0xff]
  %v1585 = vld [vmem:[%s3 + $0x28] sm:$0xff]
  %v1586 = vld [vmem:[%s3 + $0x30] sm:$0xff]
  %v1587 = vld [vmem:[%s3 + $0x38] sm:$0xff]
  %v1588 = vld [vmem:[%s3 + $0x40] sm:$0xff]
  %v1589 = vld [vmem:[%s3 + $0x48] sm:$0xff]
  %v1590 = vld [vmem:[%s3 + $0x50] sm:$0xff]
  %v1591 = vld [vmem:[%s3 + $0x58] sm:$0xff]
  %v1592 = vld [vmem:[%s3 + $0x60] sm:$0xff]
  %v1593 = vld [vmem:[%s3 + $0x68] sm:$0xff]
  %v1594 = vld [vmem:[%s3 + $0x70] sm:$0xff]
  %v1595 = vld [vmem:[%s3 + $0x78] sm:$0xff]
  %v1596 = vld [vmem:[%s3 + $0x80] sm:$0xff]
  %v1597 = vld [vmem:[%s3 + $0x88] sm:$0xff]
  %v1598 = vld [vmem:[%s3 + $0x90] sm:$0xff]
  %v1599 = vld [vmem:[%s3 + $0x98] sm:$0xff]
  %v1600 = vld [vmem:[%s3 + $0xa0] sm:$0xff]
  %v1601 = vld [vmem:[%s3 + $0xa8] sm:$0xff]
  %v1602 = vld [vmem:[%s3 + $0xb0] sm:$0xff]
  %v1603 = vld [vmem:[%s3 + $0xb8] sm:$0xff]
  %v1604 = vld [vmem:[%s3 + $0xc0] sm:$0xff]
  %v1605 = vld [vmem:[%s3 + $0xc8] sm:$0xff]
  %v1606 = vld [vmem:[%s3 + $0xd0] sm:$0xff]
  %v1607 = vld [vmem:[%s3 + $0xd8] sm:$0xff]
  %v1608 = vld [vmem:[%s3 + $0xe0] sm:$0xff]
  %v1609 = vld [vmem:[%s3 + $0xe8] sm:$0xff]
  %v1610 = vpack.c.bf16 %v1552, %v1550
  %v1611 = vpack.c.bf16 %v1553, %v1551
  %v1612 = vpack.c.bf16 %v1556, %v1554
  %v1613 = vpack.c.bf16 %v1557, %v1555
  %v1614 = vpack.c.bf16 %v1560, %v1558
  %v1615 = vpack.c.bf16 %v1561, %v1559
  %v1616 = vpack.c.bf16 %v1564, %v1562
  %v1617 = vpack.c.bf16 %v1565, %v1563
  %s1618 = scalar_lea.vmem %s3, 240
  %v1619 = vld [vmem:[%s1618] sm:$0xff]
  %v1620 = vld [vmem:[%s1618 + $0x8] sm:$0xff]
  %v1621 = vld [vmem:[%s1618 + $0x10] sm:$0xff]
  %v1622 = vld [vmem:[%s1618 + $0x18] sm:$0xff]
  %v1623 = vld [vmem:[%s1618 + $0x20] sm:$0xff]
  %v1624 = vld [vmem:[%s1618 + $0x28] sm:$0xff]
  %v1625 = vld [vmem:[%s1618 + $0x30] sm:$0xff]
  %v1626 = vld [vmem:[%s1618 + $0x38] sm:$0xff]
  %v1627 = vld [vmem:[%s1618 + $0x40] sm:$0xff]
  %v1628 = vld [vmem:[%s1618 + $0x48] sm:$0xff]
  %v1629 = vld [vmem:[%s1618 + $0x50] sm:$0xff]
  %v1630 = vld [vmem:[%s1618 + $0x58] sm:$0xff]
  %v1631 = vld [vmem:[%s1618 + $0x60] sm:$0xff]
  %v1632 = vld [vmem:[%s1618 + $0x68] sm:$0xff]
  %v1633 = vld [vmem:[%s1618 + $0x70] sm:$0xff]
  %v1634 = vld [vmem:[%s1618 + $0x78] sm:$0xff]
  %v1635 = vld [vmem:[%s1618 + $0x80] sm:$0xff]
  %v1636 = vld [vmem:[%s1618 + $0x88] sm:$0xff]
  %v1637 = vld [vmem:[%s1618 + $0x90] sm:$0xff]
  %v1638 = vld [vmem:[%s1618 + $0x98] sm:$0xff]
  %v1639 = vld [vmem:[%s1618 + $0xa0] sm:$0xff]
  %v1640 = vld [vmem:[%s1618 + $0xa8] sm:$0xff]
  %v1641 = vld [vmem:[%s1618 + $0xb0] sm:$0xff]
  %v1642 = vld [vmem:[%s1618 + $0xb8] sm:$0xff]
  %v1643 = vld [vmem:[%s1618 + $0xc0] sm:$0xff]
  %v1644 = vld [vmem:[%s1618 + $0xc8] sm:$0xff]
  %v1645 = vld [vmem:[%s1618 + $0xd0] sm:$0xff]
  %v1646 = vld [vmem:[%s1618 + $0xd8] sm:$0xff]
  %v1647 = vld [vmem:[%s1618 + $0xe0] sm:$0xff]
  %v1648 = vld [vmem:[%s1618 + $0xe8] sm:$0xff]
  %v1679 = vunpack.c.l.b16 %v1619
  %v1680 = vunpack.c.h.b16 %v1619
  %v1681 = vunpack.c.l.b16 %v1620
  %v1682 = vunpack.c.h.b16 %v1620
  %v1683 = vunpack.c.l.b16 %v1621
  %v1684 = vunpack.c.h.b16 %v1621
  %v1685 = vunpack.c.l.b16 %v1622
  %v1686 = vunpack.c.h.b16 %v1622
  %v1687 = vunpack.c.l.b16 %v1623
  %v1688 = vunpack.c.h.b16 %v1623
  %v1689 = vunpack.c.l.b16 %v1624
  %v1690 = vunpack.c.h.b16 %v1624
  %v1691 = vunpack.c.l.b16 %v1625
  %v1692 = vunpack.c.h.b16 %v1625
  %v1693 = vunpack.c.l.b16 %v1626
  %v1694 = vunpack.c.h.b16 %v1626
  %v1695 = vunpack.c.l.b16 %v1627
  %v1696 = vunpack.c.h.b16 %v1627
  %v1697 = vunpack.c.l.b16 %v1628
  %v1698 = vunpack.c.h.b16 %v1628
  %v1699 = vunpack.c.l.b16 %v1629
  %v1700 = vunpack.c.h.b16 %v1629
  %v1701 = vunpack.c.l.b16 %v1630
  %v1702 = vunpack.c.h.b16 %v1630
  %v1703 = vunpack.c.l.b16 %v1631
  %v1704 = vunpack.c.h.b16 %v1631
  %v1705 = vunpack.c.l.b16 %v1632
  %v1706 = vunpack.c.h.b16 %v1632
  %v1707 = vunpack.c.l.b16 %v1633
  %v1708 = vunpack.c.h.b16 %v1633
  %v1709 = vunpack.c.l.b16 %v1634
  %v1710 = vunpack.c.h.b16 %v1634
  %v1711 = vunpack.c.l.b16 %v1635
  %v1712 = vunpack.c.h.b16 %v1635
  %v1713 = vunpack.c.l.b16 %v1636
  %v1714 = vunpack.c.h.b16 %v1636
  %v1715 = vunpack.c.l.b16 %v1637
  %v1716 = vunpack.c.h.b16 %v1637
  %v1717 = vunpack.c.l.b16 %v1638
  %v1718 = vunpack.c.h.b16 %v1638
  %v1719 = vunpack.c.l.b16 %v1639
  %v1720 = vunpack.c.h.b16 %v1639
  %v1721 = vunpack.c.l.b16 %v1640
  %v1722 = vunpack.c.h.b16 %v1640
  %v1723 = vunpack.c.l.b16 %v1641
  %v1724 = vunpack.c.h.b16 %v1641
  %v1725 = vunpack.c.l.b16 %v1642
  %v1726 = vunpack.c.h.b16 %v1642
  %v1727 = vunpack.c.l.b16 %v1643
  %v1728 = vunpack.c.h.b16 %v1643
  %v1729 = vunpack.c.l.b16 %v1644
  %v1730 = vunpack.c.h.b16 %v1644
  %v1731 = vunpack.c.l.b16 %v1645
  %v1732 = vunpack.c.h.b16 %v1645
  %v1733 = vunpack.c.l.b16 %v1646
  %v1734 = vunpack.c.h.b16 %v1646
  %v1735 = vunpack.c.l.b16 %v1647
  %v1736 = vunpack.c.h.b16 %v1647
  %v1737 = vunpack.c.l.b16 %v1648
  %v1738 = vunpack.c.h.b16 %v1648
  %v1739 = vpack.c.b16 %v1681, %v1679
  %v1740 = vpack.c.b16 %v1682, %v1680
  %v1741 = vpack.c.b16 %v1685, %v1683
  %v1742 = vpack.c.b16 %v1686, %v1684
  %v1743 = vpack.c.b16 %v1689, %v1687
  %v1744 = vpack.c.b16 %v1690, %v1688
  %v1745 = vpack.c.b16 %v1693, %v1691
  %v1746 = vpack.c.b16 %v1694, %v1692
  %v1747 = vpack.c.b16 %v1697, %v1695
  %v1748 = vpack.c.b16 %v1698, %v1696
  %v1749 = vpack.c.b16 %v1701, %v1699
  %v1750 = vpack.c.b16 %v1702, %v1700
  %v1751 = vpack.c.b16 %v1705, %v1703
  %v1752 = vpack.c.b16 %v1706, %v1704
  %v1753 = vpack.c.b16 %v1709, %v1707
  %v1754 = vpack.c.b16 %v1710, %v1708
  %v1755 = vpack.c.b16 %v1713, %v1711
  %v1756 = vpack.c.b16 %v1714, %v1712
  %v1757 = vpack.c.b16 %v1717, %v1715
  %v1758 = vpack.c.b16 %v1718, %v1716
  %v1759 = vpack.c.b16 %v1721, %v1719
  %v1760 = vpack.c.b16 %v1722, %v1720
  %v1761 = vpack.c.b16 %v1725, %v1723
  %v1762 = vpack.c.b16 %v1726, %v1724
  %v1763 = vpack.c.b16 %v1729, %v1727
  %v1764 = vpack.c.b16 %v1730, %v1728
  %v1765 = vpack.c.b16 %v1733, %v1731
  %v1766 = vpack.c.b16 %v1734, %v1732
  %v1767 = vpack.c.b16 %v1737, %v1735
  %v1768 = vpack.c.b16 %v1738, %v1736
  %v1800 = vsel %vm1314, %v1611, 0
  %v1803 = vsel %vm1314, %v1613, 0
  %v1806 = vsel %vm1314, %v1615, 0
  %v1809 = vsel %vm1314, %v1617, 0
  %1811 = vmatprep.subr.bf16.mxu0 %v1740
  %1812 = vmatpush1.bf16.msra.mxu0 %v1739
  %1813 = vmatprep.subr.bf16.mxu0 %v1742
  %1814 = vmatpush1.bf16.msra.mxu0 %v1741
  %1815 = vmatprep.subr.bf16.mxu0 %v1744
  %1816 = vmatpush1.bf16.msra.mxu0 %v1743
  %1817 = vmatprep.subr.bf16.mxu0 %v1746
  %1818 = vmatpush1.bf16.msra.mxu0 %v1745
  %1819 = vmatprep.subr.bf16.mxu0 %v1748
  %1820 = vmatpush1.bf16.msra.mxu0 %v1747
  %1821 = vmatprep.subr.bf16.mxu0 %v1750
  %1822 = vmatpush1.bf16.msra.mxu0 %v1749
  %1823 = vmatprep.subr.bf16.mxu0 %v1752
  %1824 = vmatpush1.bf16.msra.mxu0 %v1751
  %1825 = vmatprep.subr.bf16.mxu0 %v1754
  %1826 = vmatpush1.bf16.msra.mxu0 %v1753
  %1827 = vmatprep.subr.bf16.mxu0 %v1756
  %1828 = vmatpush1.bf16.msra.mxu0 %v1755
  %1829 = vmatprep.subr.bf16.mxu0 %v1758
  %1830 = vmatpush1.bf16.msra.mxu0 %v1757
  %1831 = vmatprep.subr.bf16.mxu0 %v1760
  %1832 = vmatpush1.bf16.msra.mxu0 %v1759
  %1833 = vmatprep.subr.bf16.mxu0 %v1762
  %1834 = vmatpush1.bf16.msra.mxu0 %v1761
  %1835 = vmatprep.subr.bf16.mxu0 %v1764
  %1836 = vmatpush1.bf16.msra.mxu0 %v1763
  %1837 = vmatprep.subr.bf16.mxu0 %v1766
  %1838 = vmatpush1.bf16.msra.mxu0 %v1765
  %1839 = vmatprep.subr.bf16.mxu0 %v1768
  %1840 = vmatpush1.bf16.msra.mxu0 %v1767
  %1841 = vmatprep.subr.bf16.mxu0 0
  %1842 = vmatpush1.bf16.msra.mxu0 0
  %1843 = vmatprep.mubr.bf16.mxu0 %v1800
  %1844 = vmatmul.mubr.bf16.gmra.mrb[0].mxu0 %v1610
  %v1845 = vpop.f32.mrb[0].mxu0
  %v1846 = vadd.f32 0.0, %v1845
  %v1847 = vpop.f32.mrb[0].mxu0
  %v1848 = vadd.f32 0.0, %v1847
  %v1849 = vpop.f32.mrb[0].mxu0
  %v1850 = vadd.f32 0.0, %v1849
  %v1851 = vpop.f32.mrb[0].mxu0
  %v1852 = vadd.f32 0.0, %v1851
  %1853 = vmatprep.mubr.bf16.mxu0 %v1803
  %1854 = vmatmul.mubr.bf16.gmra.mrb[0].mxu0 %v1612
  %v1855 = vpop.f32.mrb[0].mxu0
  %v1856 = vadd.f32 0.0, %v1855
  %v1857 = vpop.f32.mrb[0].mxu0
  %v1858 = vadd.f32 0.0, %v1857
  %v1859 = vpop.f32.mrb[0].mxu0
  %v1860 = vadd.f32 0.0, %v1859
  %v1861 = vpop.f32.mrb[0].mxu0
  %v1862 = vadd.f32 0.0, %v1861
  %1863 = vmatprep.mubr.bf16.mxu0 %v1806
  %1864 = vmatmul.mubr.bf16.gmra.mrb[0].mxu0 %v1614
  %v1865 = vpop.f32.mrb[0].mxu0
  %v1866 = vadd.f32 0.0, %v1865
  %v1867 = vpop.f32.mrb[0].mxu0
  %v1868 = vadd.f32 0.0, %v1867
  %v1869 = vpop.f32.mrb[0].mxu0
  %v1870 = vadd.f32 0.0, %v1869
  %v1871 = vpop.f32.mrb[0].mxu0
  %v1872 = vadd.f32 0.0, %v1871
  %1873 = vmatprep.mubr.bf16.mxu0 %v1809
  %1874 = vmatmul.mubr.bf16.gmra.mrb[0].mxu0 %v1616
  %v1875 = vpop.f32.mrb[0].mxu0
  %v1876 = vadd.f32 0.0, %v1875
  %v1877 = vpop.f32.mrb[0].mxu0
  %v1878 = vadd.f32 0.0, %v1877
  %v1879 = vpop.f32.mrb[0].mxu0
  %v1880 = vadd.f32 0.0, %v1879
  %v1881 = vpop.f32.mrb[0].mxu0
  %v1882 = vadd.f32 0.0, %v1881
  %1883 = vdwg.mxu0
  %v1914 = vunpack.c.l.b16 %v1580
  %v1915 = vunpack.c.h.b16 %v1580
  %v1916 = vunpack.c.l.b16 %v1581
  %v1917 = vunpack.c.h.b16 %v1581
  %v1918 = vunpack.c.l.b16 %v1582
  %v1919 = vunpack.c.h.b16 %v1582
  %v1920 = vunpack.c.l.b16 %v1583
  %v1921 = vunpack.c.h.b16 %v1583
  %v1922 = vunpack.c.l.b16 %v1584
  %v1923 = vunpack.c.h.b16 %v1584
  %v1924 = vunpack.c.l.b16 %v1585
  %v1925 = vunpack.c.h.b16 %v1585
  %v1926 = vunpack.c.l.b16 %v1586
  %v1927 = vunpack.c.h.b16 %v1586
  %v1928 = vunpack.c.l.b16 %v1587
  %v1929 = vunpack.c.h.b16 %v1587
  %v1930 = vunpack.c.l.b16 %v1588
  %v1931 = vunpack.c.h.b16 %v1588
  %v1932 = vunpack.c.l.b16 %v1589
  %v1933 = vunpack.c.h.b16 %v1589
  %v1934 = vunpack.c.l.b16 %v1590
  %v1935 = vunpack.c.h.b16 %v1590
  %v1936 = vunpack.c.l.b16 %v1591
  %v1937 = vunpack.c.h.b16 %v1591
  %v1938 = vunpack.c.l.b16 %v1592
  %v1939 = vunpack.c.h.b16 %v1592
  %v1940 = vunpack.c.l.b16 %v1593
  %v1941 = vunpack.c.h.b16 %v1593
  %v1942 = vunpack.c.l.b16 %v1594
  %v1943 = vunpack.c.h.b16 %v1594
  %v1944 = vunpack.c.l.b16 %v1595
  %v1945 = vunpack.c.h.b16 %v1595
  %v1946 = vunpack.c.l.b16 %v1596
  %v1947 = vunpack.c.h.b16 %v1596
  %v1948 = vunpack.c.l.b16 %v1597
  %v1949 = vunpack.c.h.b16 %v1597
  %v1950 = vunpack.c.l.b16 %v1598
  %v1951 = vunpack.c.h.b16 %v1598
  %v1952 = vunpack.c.l.b16 %v1599
  %v1953 = vunpack.c.h.b16 %v1599
  %v1954 = vunpack.c.l.b16 %v1600
  %v1955 = vunpack.c.h.b16 %v1600
  %v1956 = vunpack.c.l.b16 %v1601
  %v1957 = vunpack.c.h.b16 %v1601
  %v1958 = vunpack.c.l.b16 %v1602
  %v1959 = vunpack.c.h.b16 %v1602
  %v1960 = vunpack.c.l.b16 %v1603
  %v1961 = vunpack.c.h.b16 %v1603
  %v1962 = vunpack.c.l.b16 %v1604
  %v1963 = vunpack.c.h.b16 %v1604
  %v1964 = vunpack.c.l.b16 %v1605
  %v1965 = vunpack.c.h.b16 %v1605
  %v1966 = vunpack.c.l.b16 %v1606
  %v1967 = vunpack.c.h.b16 %v1606
  %v1968 = vunpack.c.l.b16 %v1607
  %v1969 = vunpack.c.h.b16 %v1607
  %v1970 = vunpack.c.l.b16 %v1608
  %v1971 = vunpack.c.h.b16 %v1608
  %v1972 = vunpack.c.l.b16 %v1609
  %v1973 = vunpack.c.h.b16 %v1609
  %v1974 = vpack.c.b16 %v1916, %v1914
  %v1975 = vpack.c.b16 %v1917, %v1915
  %v1976 = vpack.c.b16 %v1920, %v1918
  %v1977 = vpack.c.b16 %v1921, %v1919
  %v1978 = vpack.c.b16 %v1924, %v1922
  %v1979 = vpack.c.b16 %v1925, %v1923
  %v1980 = vpack.c.b16 %v1928, %v1926
  %v1981 = vpack.c.b16 %v1929, %v1927
  %v1982 = vpack.c.b16 %v1932, %v1930
  %v1983 = vpack.c.b16 %v1933, %v1931
  %v1984 = vpack.c.b16 %v1936, %v1934
  %v1985 = vpack.c.b16 %v1937, %v1935
  %v1986 = vpack.c.b16 %v1940, %v1938
  %v1987 = vpack.c.b16 %v1941, %v1939
  %v1988 = vpack.c.b16 %v1944, %v1942
  %v1989 = vpack.c.b16 %v1945, %v1943
  %v1990 = vpack.c.b16 %v1948, %v1946
  %v1991 = vpack.c.b16 %v1949, %v1947
  %v1992 = vpack.c.b16 %v1952, %v1950
  %v1993 = vpack.c.b16 %v1953, %v1951
  %v1994 = vpack.c.b16 %v1956, %v1954
  %v1995 = vpack.c.b16 %v1957, %v1955
  %v1996 = vpack.c.b16 %v1960, %v1958
  %v1997 = vpack.c.b16 %v1961, %v1959
  %v1998 = vpack.c.b16 %v1964, %v1962
  %v1999 = vpack.c.b16 %v1965, %v1963
  %v2000 = vpack.c.b16 %v1968, %v1966
  %v2001 = vpack.c.b16 %v1969, %v1967
  %v2002 = vpack.c.b16 %v1972, %v1970
  %v2003 = vpack.c.b16 %v1973, %v1971
  %v2035 = vsel %vm1314, %v1573, 0
  %v2038 = vsel %vm1314, %v1575, 0
  %v2041 = vsel %vm1314, %v1577, 0
  %v2044 = vsel %vm1314, %v1579, 0
  %2046 = vmatprep.subr.bf16.mxu0 %v1975
  %2047 = vmatpush1.bf16.msra.mxu0 %v1974
  %2048 = vmatprep.subr.bf16.mxu0 %v1977
  %2049 = vmatpush1.bf16.msra.mxu0 %v1976
  %2050 = vmatprep.subr.bf16.mxu0 %v1979
  %2051 = vmatpush1.bf16.msra.mxu0 %v1978
  %2052 = vmatprep.subr.bf16.mxu0 %v1981
  %2053 = vmatpush1.bf16.msra.mxu0 %v1980
  %2054 = vmatprep.subr.bf16.mxu0 %v1983
  %2055 = vmatpush1.bf16.msra.mxu0 %v1982
  %2056 = vmatprep.subr.bf16.mxu0 %v1985
  %2057 = vmatpush1.bf16.msra.mxu0 %v1984
  %2058 = vmatprep.subr.bf16.mxu0 %v1987
  %2059 = vmatpush1.bf16.msra.mxu0 %v1986
  %2060 = vmatprep.subr.bf16.mxu0 %v1989
  %2061 = vmatpush1.bf16.msra.mxu0 %v1988
  %2062 = vmatprep.subr.bf16.mxu0 %v1991
  %2063 = vmatpush1.bf16.msra.mxu0 %v1990
  %2064 = vmatprep.subr.bf16.mxu0 %v1993
  %2065 = vmatpush1.bf16.msra.mxu0 %v1992
  %2066 = vmatprep.subr.bf16.mxu0 %v1995
  %2067 = vmatpush1.bf16.msra.mxu0 %v1994
  %2068 = vmatprep.subr.bf16.mxu0 %v1997
  %2069 = vmatpush1.bf16.msra.mxu0 %v1996
  %2070 = vmatprep.subr.bf16.mxu0 %v1999
  %2071 = vmatpush1.bf16.msra.mxu0 %v1998
  %2072 = vmatprep.subr.bf16.mxu0 %v2001
  %2073 = vmatpush1.bf16.msra.mxu0 %v2000
  %2074 = vmatprep.subr.bf16.mxu0 %v2003
  %2075 = vmatpush1.bf16.msra.mxu0 %v2002
  %2076 = vmatprep.subr.bf16.mxu0 0
  %2077 = vmatpush1.bf16.msra.mxu0 0
  %2078 = vmatprep.mubr.bf16.mxu0 %v2035
  %2079 = vmatmul.mubr.bf16.gmra.mrb[0].mxu0 %v1572
  %v2080 = vpop.f32.mrb[0].mxu0
  %v2081 = vadd.f32 %v1846, %v2080
  %v2082 = vpop.f32.mrb[0].mxu0
  %v2083 = vadd.f32 %v1848, %v2082
  %v2084 = vpop.f32.mrb[0].mxu0
  %v2085 = vadd.f32 %v1850, %v2084
  %v2086 = vpop.f32.mrb[0].mxu0
  %v2087 = vadd.f32 %v1852, %v2086
  %2088 = vmatprep.mubr.bf16.mxu0 %v2038
  %2089 = vmatmul.mubr.bf16.gmra.mrb[0].mxu0 %v1574
  %v2090 = vpop.f32.mrb[0].mxu0
  %v2091 = vadd.f32 %v1856, %v2090
  %v2092 = vpop.f32.mrb[0].mxu0
  %v2093 = vadd.f32 %v1858, %v2092
  %v2094 = vpop.f32.mrb[0].mxu0
  %v2095 = vadd.f32 %v1860, %v2094
  %v2096 = vpop.f32.mrb[0].mxu0
  %v2097 = vadd.f32 %v1862, %v2096
  %2098 = vmatprep.mubr.bf16.mxu0 %v2041
  %2099 = vmatmul.mubr.bf16.gmra.mrb[0].mxu0 %v1576
  %v2100 = vpop.f32.mrb[0].mxu0
  %v2101 = vadd.f32 %v1866, %v2100
  %v2102 = vpop.f32.mrb[0].mxu0
  %v2103 = vadd.f32 %v1868, %v2102
  %v2104 = vpop.f32.mrb[0].mxu0
  %v2105 = vadd.f32 %v1870, %v2104
  %v2106 = vpop.f32.mrb[0].mxu0
  %v2107 = vadd.f32 %v1872, %v2106
  %2108 = vmatprep.mubr.bf16.mxu0 %v2044
  %2109 = vmatmul.mubr.bf16.gmra.mrb[0].mxu0 %v1578
  %v2110 = vpop.f32.mrb[0].mxu0
  %v2111 = vadd.f32 %v1876, %v2110
  %v2112 = vpop.f32.mrb[0].mxu0
  %v2113 = vadd.f32 %v1878, %v2112
  %v2114 = vpop.f32.mrb[0].mxu0
  %v2115 = vadd.f32 %v1880, %v2114
  %v2116 = vpop.f32.mrb[0].mxu0
  %v2117 = vadd.f32 %v1882, %v2116
  %2118 = vdwg.mxu0
  %v2119 = vpack.c.bf16 %v1566, %v1564
  %v2120 = vpack.c.bf16 %v1567, %v1565
  %s2121 = scalar_lea.vmem %s3, 480
  %v2122 = vld [vmem:[%s2121] sm:$0xff]
  %v2123 = vld [vmem:[%s2121 + $0x8] sm:$0xff]
  %v2124 = vld [vmem:[%s2121 + $0x10] sm:$0xff]
  %v2125 = vld [vmem:[%s2121 + $0x18] sm:$0xff]
  %v2126 = vld [vmem:[%s2121 + $0x20] sm:$0xff]
  %v2127 = vld [vmem:[%s2121 + $0x28] sm:$0xff]
  %v2128 = vld [vmem:[%s2121 + $0x30] sm:$0xff]
  %v2129 = vld [vmem:[%s2121 + $0x38] sm:$0xff]
  %v2130 = vld [vmem:[%s2121 + $0x40] sm:$0xff]
  %v2131 = vld [vmem:[%s2121 + $0x48] sm:$0xff]
  %v2132 = vld [vmem:[%s2121 + $0x50] sm:$0xff]
  %v2133 = vld [vmem:[%s2121 + $0x58] sm:$0xff]
  %v2134 = vld [vmem:[%s2121 + $0x60] sm:$0xff]
  %v2135 = vld [vmem:[%s2121 + $0x68] sm:$0xff]
  %v2136 = vld [vmem:[%s2121 + $0x70] sm:$0xff]
  %v2137 = vld [vmem:[%s2121 + $0x78] sm:$0xff]
  %v2138 = vld [vmem:[%s2121 + $0x80] sm:$0xff]
  %v2139 = vld [vmem:[%s2121 + $0x88] sm:$0xff]
  %v2140 = vld [vmem:[%s2121 + $0x90] sm:$0xff]
  %v2141 = vld [vmem:[%s2121 + $0x98] sm:$0xff]
  %v2142 = vld [vmem:[%s2121 + $0xa0] sm:$0xff]
  %v2143 = vld [vmem:[%s2121 + $0xa8] sm:$0xff]
  %v2144 = vld [vmem:[%s2121 + $0xb0] sm:$0xff]
  %v2145 = vld [vmem:[%s2121 + $0xb8] sm:$0xff]
  %v2146 = vld [vmem:[%s2121 + $0xc0] sm:$0xff]
  %v2147 = vld [vmem:[%s2121 + $0xc8] sm:$0xff]
  %v2148 = vld [vmem:[%s2121 + $0xd0] sm:$0xff]
  %v2149 = vld [vmem:[%s2121 + $0xd8] sm:$0xff]
  %v2150 = vld [vmem:[%s2121 + $0xe0] sm:$0xff]
  %v2151 = vld [vmem:[%s2121 + $0xe8] sm:$0xff]
  %v2182 = vunpack.c.l.b16 %v2122
  %v2183 = vunpack.c.h.b16 %v2122
  %v2184 = vunpack.c.l.b16 %v2123
  %v2185 = vunpack.c.h.b16 %v2123
  %v2186 = vunpack.c.l.b16 %v2124
  %v2187 = vunpack.c.h.b16 %v2124
  %v2188 = vunpack.c.l.b16 %v2125
  %v2189 = vunpack.c.h.b16 %v2125
  %v2190 = vunpack.c.l.b16 %v2126
  %v2191 = vunpack.c.h.b16 %v2126
  %v2192 = vunpack.c.l.b16 %v2127
  %v2193 = vunpack.c.h.b16 %v2127
  %v2194 = vunpack.c.l.b16 %v2128
  %v2195 = vunpack.c.h.b16 %v2128
  %v2196 = vunpack.c.l.b16 %v2129
  %v2197 = vunpack.c.h.b16 %v2129
  %v2198 = vunpack.c.l.b16 %v2130
  %v2199 = vunpack.c.h.b16 %v2130
  %v2200 = vunpack.c.l.b16 %v2131
  %v2201 = vunpack.c.h.b16 %v2131
  %v2202 = vunpack.c.l.b16 %v2132
  %v2203 = vunpack.c.h.b16 %v2132
  %v2204 = vunpack.c.l.b16 %v2133
  %v2205 = vunpack.c.h.b16 %v2133
  %v2206 = vunpack.c.l.b16 %v2134
  %v2207 = vunpack.c.h.b16 %v2134
  %v2208 = vunpack.c.l.b16 %v2135
  %v2209 = vunpack.c.h.b16 %v2135
  %v2210 = vunpack.c.l.b16 %v2136
  %v2211 = vunpack.c.h.b16 %v2136
  %v2212 = vunpack.c.l.b16 %v2137
  %v2213 = vunpack.c.h.b16 %v2137
  %v2214 = vunpack.c.l.b16 %v2138
  %v2215 = vunpack.c.h.b16 %v2138
  %v2216 = vunpack.c.l.b16 %v2139
  %v2217 = vunpack.c.h.b16 %v2139
  %v2218 = vunpack.c.l.b16 %v2140
  %v2219 = vunpack.c.h.b16 %v2140
  %v2220 = vunpack.c.l.b16 %v2141
  %v2221 = vunpack.c.h.b16 %v2141
  %v2222 = vunpack.c.l.b16 %v2142
  %v2223 = vunpack.c.h.b16 %v2142
  %v2224 = vunpack.c.l.b16 %v2143
  %v2225 = vunpack.c.h.b16 %v2143
  %v2226 = vunpack.c.l.b16 %v2144
  %v2227 = vunpack.c.h.b16 %v2144
  %v2228 = vunpack.c.l.b16 %v2145
  %v2229 = vunpack.c.h.b16 %v2145
  %v2230 = vunpack.c.l.b16 %v2146
  %v2231 = vunpack.c.h.b16 %v2146
  %v2232 = vunpack.c.l.b16 %v2147
  %v2233 = vunpack.c.h.b16 %v2147
  %v2234 = vunpack.c.l.b16 %v2148
  %v2235 = vunpack.c.h.b16 %v2148
  %v2236 = vunpack.c.l.b16 %v2149
  %v2237 = vunpack.c.h.b16 %v2149
  %v2238 = vunpack.c.l.b16 %v2150
  %v2239 = vunpack.c.h.b16 %v2150
  %v2240 = vunpack.c.l.b16 %v2151
  %v2241 = vunpack.c.h.b16 %v2151
  %v2242 = vpack.c.b16 %v2184, %v2182
  %v2243 = vpack.c.b16 %v2185, %v2183
  %v2244 = vpack.c.b16 %v2188, %v2186
  %v2245 = vpack.c.b16 %v2189, %v2187
  %v2246 = vpack.c.b16 %v2192, %v2190
  %v2247 = vpack.c.b16 %v2193, %v2191
  %v2248 = vpack.c.b16 %v2196, %v2194
  %v2249 = vpack.c.b16 %v2197, %v2195
  %v2250 = vpack.c.b16 %v2200, %v2198
  %v2251 = vpack.c.b16 %v2201, %v2199
  %v2252 = vpack.c.b16 %v2204, %v2202
  %v2253 = vpack.c.b16 %v2205, %v2203
  %v2254 = vpack.c.b16 %v2208, %v2206
  %v2255 = vpack.c.b16 %v2209, %v2207
  %v2256 = vpack.c.b16 %v2212, %v2210
  %v2257 = vpack.c.b16 %v2213, %v2211
  %v2258 = vpack.c.b16 %v2216, %v2214
  %v2259 = vpack.c.b16 %v2217, %v2215
  %v2260 = vpack.c.b16 %v2220, %v2218
  %v2261 = vpack.c.b16 %v2221, %v2219
  %v2262 = vpack.c.b16 %v2224, %v2222
  %v2263 = vpack.c.b16 %v2225, %v2223
  %v2264 = vpack.c.b16 %v2228, %v2226
  %v2265 = vpack.c.b16 %v2229, %v2227
  %v2266 = vpack.c.b16 %v2232, %v2230
  %v2267 = vpack.c.b16 %v2233, %v2231
  %v2268 = vpack.c.b16 %v2236, %v2234
  %v2269 = vpack.c.b16 %v2237, %v2235
  %v2270 = vpack.c.b16 %v2240, %v2238
  %v2271 = vpack.c.b16 %v2241, %v2239
  %v2303 = vsel %vm1314, %v2120, 0
  %2305 = vmatprep.subr.bf16.mxu0 %v2243
  %2306 = vmatpush1.bf16.msra.mxu0 %v2242
  %2307 = vmatprep.subr.bf16.mxu0 %v2245
  %2308 = vmatpush1.bf16.msra.mxu0 %v2244
  %2309 = vmatprep.subr.bf16.mxu0 %v2247
  %2310 = vmatpush1.bf16.msra.mxu0 %v2246
  %2311 = vmatprep.subr.bf16.mxu0 %v2249
  %2312 = vmatpush1.bf16.msra.mxu0 %v2248
  %2313 = vmatprep.subr.bf16.mxu0 %v2251
  %2314 = vmatpush1.bf16.msra.mxu0 %v2250
  %2315 = vmatprep.subr.bf16.mxu0 %v2253
  %2316 = vmatpush1.bf16.msra.mxu0 %v2252
  %2317 = vmatprep.subr.bf16.mxu0 %v2255
  %2318 = vmatpush1.bf16.msra.mxu0 %v2254
  %2319 = vmatprep.subr.bf16.mxu0 %v2257
  %2320 = vmatpush1.bf16.msra.mxu0 %v2256
  %2321 = vmatprep.subr.bf16.mxu0 %v2259
  %2322 = vmatpush1.bf16.msra.mxu0 %v2258
  %2323 = vmatprep.subr.bf16.mxu0 %v2261
  %2324 = vmatpush1.bf16.msra.mxu0 %v2260
  %2325 = vmatprep.subr.bf16.mxu0 %v2263
  %2326 = vmatpush1.bf16.msra.mxu0 %v2262
  %2327 = vmatprep.subr.bf16.mxu0 %v2265
  %2328 = vmatpush1.bf16.msra.mxu0 %v2264
  %2329 = vmatprep.subr.bf16.mxu0 %v2267
  %2330 = vmatpush1.bf16.msra.mxu0 %v2266
  %2331 = vmatprep.subr.bf16.mxu0 %v2269
  %2332 = vmatpush1.bf16.msra.mxu0 %v2268
  %2333 = vmatprep.subr.bf16.mxu0 %v2271
  %2334 = vmatpush1.bf16.msra.mxu0 %v2270
  %2335 = vmatprep.subr.bf16.mxu0 0
  %2336 = vmatpush1.bf16.msra.mxu0 0
  %2337 = vmatprep.mubr.bf16.mxu0 %v2038
  %2338 = vmatmul.mubr.bf16.gmra.mrb[0].mxu0 %v1574
  %v2339 = vpop.f32.mrb[0].mxu0
  %v2340 = vadd.f32 0.0, %v2339
  %v2341 = vpop.f32.mrb[0].mxu0
  %v2342 = vadd.f32 0.0, %v2341
  %v2343 = vpop.f32.mrb[0].mxu0
  %v2344 = vadd.f32 0.0, %v2343
  %v2345 = vpop.f32.mrb[0].mxu0
  %v2346 = vadd.f32 0.0, %v2345
  %2347 = vmatprep.mubr.bf16.mxu0 %v2041
  %2348 = vmatmul.mubr.bf16.gmra.mrb[0].mxu0 %v1576
  %v2349 = vpop.f32.mrb[0].mxu0
  %v2350 = vadd.f32 0.0, %v2349
  %v2351 = vpop.f32.mrb[0].mxu0
  %v2352 = vadd.f32 0.0, %v2351
  %v2353 = vpop.f32.mrb[0].mxu0
  %v2354 = vadd.f32 0.0, %v2353
  %v2355 = vpop.f32.mrb[0].mxu0
  %v2356 = vadd.f32 0.0, %v2355
  %2357 = vmatprep.mubr.bf16.mxu0 %v2044
  %2358 = vmatmul.mubr.bf16.gmra.mrb[0].mxu0 %v1578
  %v2359 = vpop.f32.mrb[0].mxu0
  %v2360 = vadd.f32 0.0, %v2359
  %v2361 = vpop.f32.mrb[0].mxu0
  %v2362 = vadd.f32 0.0, %v2361
  %v2363 = vpop.f32.mrb[0].mxu0
  %v2364 = vadd.f32 0.0, %v2363
  %v2365 = vpop.f32.mrb[0].mxu0
  %v2366 = vadd.f32 0.0, %v2365
  %2367 = vmatprep.mubr.bf16.mxu0 %v2303
  %2368 = vmatmul.mubr.bf16.gmra.mrb[0].mxu0 %v2119
  %v2369 = vpop.f32.mrb[0].mxu0
  %v2370 = vadd.f32 0.0, %v2369
  %v2371 = vpop.f32.mrb[0].mxu0
  %v2372 = vadd.f32 0.0, %v2371
  %v2373 = vpop.f32.mrb[0].mxu0
  %v2374 = vadd.f32 0.0, %v2373
  %v2375 = vpop.f32.mrb[0].mxu0
  %v2376 = vadd.f32 0.0, %v2375
  %2377 = vdwg.mxu0
  %v2378 = vadd.f32 %v2081, %v2340
  %v2379 = vadd.f32 %v2083, %v2342
  %v2380 = vadd.f32 %v2085, %v2344
  %v2381 = vadd.f32 %v2087, %v2346
  %v2382 = vadd.f32 %v2091, %v2350
  %v2383 = vadd.f32 %v2093, %v2352
  %v2384 = vadd.f32 %v2095, %v2354
  %v2385 = vadd.f32 %v2097, %v2356
  %v2386 = vadd.f32 %v2101, %v2360
  %v2387 = vadd.f32 %v2103, %v2362
  %v2388 = vadd.f32 %v2105, %v2364
  %v2389 = vadd.f32 %v2107, %v2366
  %v2390 = vadd.f32 %v2111, %v2370
  %v2391 = vadd.f32 %v2113, %v2372
  %v2392 = vadd.f32 %v2115, %v2374
  %v2393 = vadd.f32 %v2117, %v2376
  %v2394 = vpack.c.bf16 %v1568, %v1566
  %v2395 = vpack.c.bf16 %v1569, %v1567
  %s2396 = scalar_lea.vmem %s3, 720
  %v2397 = vld [vmem:[%s2396] sm:$0xff]
  %v2398 = vld [vmem:[%s2396 + $0x8] sm:$0xff]
  %v2399 = vld [vmem:[%s2396 + $0x10] sm:$0xff]
  %v2400 = vld [vmem:[%s2396 + $0x18] sm:$0xff]
  %v2401 = vld [vmem:[%s2396 + $0x20] sm:$0xff]
  %v2402 = vld [vmem:[%s2396 + $0x28] sm:$0xff]
  %v2403 = vld [vmem:[%s2396 + $0x30] sm:$0xff]
  %v2404 = vld [vmem:[%s2396 + $0x38] sm:$0xff]
  %v2405 = vld [vmem:[%s2396 + $0x40] sm:$0xff]
  %v2406 = vld [vmem:[%s2396 + $0x48] sm:$0xff]
  %v2407 = vld [vmem:[%s2396 + $0x50] sm:$0xff]
  %v2408 = vld [vmem:[%s2396 + $0x58] sm:$0xff]
  %v2409 = vld [vmem:[%s2396 + $0x60] sm:$0xff]
  %v2410 = vld [vmem:[%s2396 + $0x68] sm:$0xff]
  %v2411 = vld [vmem:[%s2396 + $0x70] sm:$0xff]
  %v2412 = vld [vmem:[%s2396 + $0x78] sm:$0xff]
  %v2413 = vld [vmem:[%s2396 + $0x80] sm:$0xff]
  %v2414 = vld [vmem:[%s2396 + $0x88] sm:$0xff]
  %v2415 = vld [vmem:[%s2396 + $0x90] sm:$0xff]
  %v2416 = vld [vmem:[%s2396 + $0x98] sm:$0xff]
  %v2417 = vld [vmem:[%s2396 + $0xa0] sm:$0xff]
  %v2418 = vld [vmem:[%s2396 + $0xa8] sm:$0xff]
  %v2419 = vld [vmem:[%s2396 + $0xb0] sm:$0xff]
  %v2420 = vld [vmem:[%s2396 + $0xb8] sm:$0xff]
  %v2421 = vld [vmem:[%s2396 + $0xc0] sm:$0xff]
  %v2422 = vld [vmem:[%s2396 + $0xc8] sm:$0xff]
  %v2423 = vld [vmem:[%s2396 + $0xd0] sm:$0xff]
  %v2424 = vld [vmem:[%s2396 + $0xd8] sm:$0xff]
  %v2425 = vld [vmem:[%s2396 + $0xe0] sm:$0xff]
  %v2426 = vld [vmem:[%s2396 + $0xe8] sm:$0xff]
  %v2457 = vunpack.c.l.b16 %v2397
  %v2458 = vunpack.c.h.b16 %v2397
  %v2459 = vunpack.c.l.b16 %v2398
  %v2460 = vunpack.c.h.b16 %v2398
  %v2461 = vunpack.c.l.b16 %v2399
  %v2462 = vunpack.c.h.b16 %v2399
  %v2463 = vunpack.c.l.b16 %v2400
  %v2464 = vunpack.c.h.b16 %v2400
  %v2465 = vunpack.c.l.b16 %v2401
  %v2466 = vunpack.c.h.b16 %v2401
  %v2467 = vunpack.c.l.b16 %v2402
  %v2468 = vunpack.c.h.b16 %v2402
  %v2469 = vunpack.c.l.b16 %v2403
  %v2470 = vunpack.c.h.b16 %v2403
  %v2471 = vunpack.c.l.b16 %v2404
  %v2472 = vunpack.c.h.b16 %v2404
  %v2473 = vunpack.c.l.b16 %v2405
  %v2474 = vunpack.c.h.b16 %v2405
  %v2475 = vunpack.c.l.b16 %v2406
  %v2476 = vunpack.c.h.b16 %v2406
  %v2477 = vunpack.c.l.b16 %v2407
  %v2478 = vunpack.c.h.b16 %v2407
  %v2479 = vunpack.c.l.b16 %v2408
  %v2480 = vunpack.c.h.b16 %v2408
  %v2481 = vunpack.c.l.b16 %v2409
  %v2482 = vunpack.c.h.b16 %v2409
  %v2483 = vunpack.c.l.b16 %v2410
  %v2484 = vunpack.c.h.b16 %v2410
  %v2485 = vunpack.c.l.b16 %v2411
  %v2486 = vunpack.c.h.b16 %v2411
  %v2487 = vunpack.c.l.b16 %v2412
  %v2488 = vunpack.c.h.b16 %v2412
  %v2489 = vunpack.c.l.b16 %v2413
  %v2490 = vunpack.c.h.b16 %v2413
  %v2491 = vunpack.c.l.b16 %v2414
  %v2492 = vunpack.c.h.b16 %v2414
  %v2493 = vunpack.c.l.b16 %v2415
  %v2494 = vunpack.c.h.b16 %v2415
  %v2495 = vunpack.c.l.b16 %v2416
  %v2496 = vunpack.c.h.b16 %v2416
  %v2497 = vunpack.c.l.b16 %v2417
  %v2498 = vunpack.c.h.b16 %v2417
  %v2499 = vunpack.c.l.b16 %v2418
  %v2500 = vunpack.c.h.b16 %v2418
  %v2501 = vunpack.c.l.b16 %v2419
  %v2502 = vunpack.c.h.b16 %v2419
  %v2503 = vunpack.c.l.b16 %v2420
  %v2504 = vunpack.c.h.b16 %v2420
  %v2505 = vunpack.c.l.b16 %v2421
  %v2506 = vunpack.c.h.b16 %v2421
  %v2507 = vunpack.c.l.b16 %v2422
  %v2508 = vunpack.c.h.b16 %v2422
  %v2509 = vunpack.c.l.b16 %v2423
  %v2510 = vunpack.c.h.b16 %v2423
  %v2511 = vunpack.c.l.b16 %v2424
  %v2512 = vunpack.c.h.b16 %v2424
  %v2513 = vunpack.c.l.b16 %v2425
  %v2514 = vunpack.c.h.b16 %v2425
  %v2515 = vunpack.c.l.b16 %v2426
  %v2516 = vunpack.c.h.b16 %v2426
  %v2517 = vpack.c.b16 %v2459, %v2457
  %v2518 = vpack.c.b16 %v2460, %v2458
  %v2519 = vpack.c.b16 %v2463, %v2461
  %v2520 = vpack.c.b16 %v2464, %v2462
  %v2521 = vpack.c.b16 %v2467, %v2465
  %v2522 = vpack.c.b16 %v2468, %v2466
  %v2523 = vpack.c.b16 %v2471, %v2469
  %v2524 = vpack.c.b16 %v2472, %v2470
  %v2525 = vpack.c.b16 %v2475, %v2473
  %v2526 = vpack.c.b16 %v2476, %v2474
  %v2527 = vpack.c.b16 %v2479, %v2477
  %v2528 = vpack.c.b16 %v2480, %v2478
  %v2529 = vpack.c.b16 %v2483, %v2481
  %v2530 = vpack.c.b16 %v2484, %v2482
  %v2531 = vpack.c.b16 %v2487, %v2485
  %v2532 = vpack.c.b16 %v2488, %v2486
  %v2533 = vpack.c.b16 %v2491, %v2489
  %v2534 = vpack.c.b16 %v2492, %v2490
  %v2535 = vpack.c.b16 %v2495, %v2493
  %v2536 = vpack.c.b16 %v2496, %v2494
  %v2537 = vpack.c.b16 %v2499, %v2497
  %v2538 = vpack.c.b16 %v2500, %v2498
  %v2539 = vpack.c.b16 %v2503, %v2501
  %v2540 = vpack.c.b16 %v2504, %v2502
  %v2541 = vpack.c.b16 %v2507, %v2505
  %v2542 = vpack.c.b16 %v2508, %v2506
  %v2543 = vpack.c.b16 %v2511, %v2509
  %v2544 = vpack.c.b16 %v2512, %v2510
  %v2545 = vpack.c.b16 %v2515, %v2513
  %v2546 = vpack.c.b16 %v2516, %v2514
  %v2578 = vsel %vm1314, %v2395, 0
  %2580 = vmatprep.subr.bf16.mxu0 %v2518
  %2581 = vmatpush1.bf16.msra.mxu0 %v2517
  %2582 = vmatprep.subr.bf16.mxu0 %v2520
  %2583 = vmatpush1.bf16.msra.mxu0 %v2519
  %2584 = vmatprep.subr.bf16.mxu0 %v2522
  %2585 = vmatpush1.bf16.msra.mxu0 %v2521
  %2586 = vmatprep.subr.bf16.mxu0 %v2524
  %2587 = vmatpush1.bf16.msra.mxu0 %v2523
  %2588 = vmatprep.subr.bf16.mxu0 %v2526
  %2589 = vmatpush1.bf16.msra.mxu0 %v2525
  %2590 = vmatprep.subr.bf16.mxu0 %v2528
  %2591 = vmatpush1.bf16.msra.mxu0 %v2527
  %2592 = vmatprep.subr.bf16.mxu0 %v2530
  %2593 = vmatpush1.bf16.msra.mxu0 %v2529
  %2594 = vmatprep.subr.bf16.mxu0 %v2532
  %2595 = vmatpush1.bf16.msra.mxu0 %v2531
  %2596 = vmatprep.subr.bf16.mxu0 %v2534
  %2597 = vmatpush1.bf16.msra.mxu0 %v2533
  %2598 = vmatprep.subr.bf16.mxu0 %v2536
  %2599 = vmatpush1.bf16.msra.mxu0 %v2535
  %2600 = vmatprep.subr.bf16.mxu0 %v2538
  %2601 = vmatpush1.bf16.msra.mxu0 %v2537
  %2602 = vmatprep.subr.bf16.mxu0 %v2540
  %2603 = vmatpush1.bf16.msra.mxu0 %v2539
  %2604 = vmatprep.subr.bf16.mxu0 %v2542
  %2605 = vmatpush1.bf16.msra.mxu0 %v2541
  %2606 = vmatprep.subr.bf16.mxu0 %v2544
  %2607 = vmatpush1.bf16.msra.mxu0 %v2543
  %2608 = vmatprep.subr.bf16.mxu0 %v2546
  %2609 = vmatpush1.bf16.msra.mxu0 %v2545
  %2610 = vmatprep.subr.bf16.mxu0 0
  %2611 = vmatpush1.bf16.msra.mxu0 0
  %2612 = vmatprep.mubr.bf16.mxu0 %v1803
  %2613 = vmatmul.mubr.bf16.gmra.mrb[0].mxu0 %v1612
  %v2614 = vpop.f32.mrb[0].mxu0
  %v2615 = vadd.f32 0.0, %v2614
  %v2616 = vpop.f32.mrb[0].mxu0
  %v2617 = vadd.f32 0.0, %v2616
  %v2618 = vpop.f32.mrb[0].mxu0
  %v2619 = vadd.f32 0.0, %v2618
  %v2620 = vpop.f32.mrb[0].mxu0
  %v2621 = vadd.f32 0.0, %v2620
  %2622 = vmatprep.mubr.bf16.mxu0 %v1806
  %2623 = vmatmul.mubr.bf16.gmra.mrb[0].mxu0 %v1614
  %v2624 = vpop.f32.mrb[0].mxu0
  %v2625 = vadd.f32 0.0, %v2624
  %v2626 = vpop.f32.mrb[0].mxu0
  %v2627 = vadd.f32 0.0, %v2626
  %v2628 = vpop.f32.mrb[0].mxu0
  %v2629 = vadd.f32 0.0, %v2628
  %v2630 = vpop.f32.mrb[0].mxu0
  %v2631 = vadd.f32 0.0, %v2630
  %2632 = vmatprep.mubr.bf16.mxu0 %v1809
  %2633 = vmatmul.mubr.bf16.gmra.mrb[0].mxu0 %v1616
  %v2634 = vpop.f32.mrb[0].mxu0
  %v2635 = vadd.f32 0.0, %v2634
  %v2636 = vpop.f32.mrb[0].mxu0
  %v2637 = vadd.f32 0.0, %v2636
  %v2638 = vpop.f32.mrb[0].mxu0
  %v2639 = vadd.f32 0.0, %v2638
  %v2640 = vpop.f32.mrb[0].mxu0
  %v2641 = vadd.f32 0.0, %v2640
  %2642 = vmatprep.mubr.bf16.mxu0 %v2578
  %2643 = vmatmul.mubr.bf16.gmra.mrb[0].mxu0 %v2394
  %v2644 = vpop.f32.mrb[0].mxu0
  %v2645 = vadd.f32 0.0, %v2644
  %v2646 = vpop.f32.mrb[0].mxu0
  %v2647 = vadd.f32 0.0, %v2646
  %v2648 = vpop.f32.mrb[0].mxu0
  %v2649 = vadd.f32 0.0, %v2648
  %v2650 = vpop.f32.mrb[0].mxu0
  %v2651 = vadd.f32 0.0, %v2650
  %2652 = vdwg.mxu0
  %v2653 = vadd.f32 %v2378, %v2615
  %v2654 = vadd.f32 %v2379, %v2617
  %v2655 = vadd.f32 %v2380, %v2619
  %v2656 = vadd.f32 %v2381, %v2621
  %v2657 = vadd.f32 %v2382, %v2625
  %v2658 = vadd.f32 %v2383, %v2627
  %v2659 = vadd.f32 %v2384, %v2629
  %v2660 = vadd.f32 %v2385, %v2631
  %v2661 = vadd.f32 %v2386, %v2635
  %v2662 = vadd.f32 %v2387, %v2637
  %v2663 = vadd.f32 %v2388, %v2639
  %v2664 = vadd.f32 %v2389, %v2641
  %v2665 = vadd.f32 %v2390, %v2645
  %v2666 = vadd.f32 %v2391, %v2647
  %v2667 = vadd.f32 %v2392, %v2649
  %v2668 = vadd.f32 %v2393, %v2651
  %v2669 = vpack.c.bf16 %v1570, %v1568
  %v2670 = vpack.c.bf16 %v1571, %v1569
  %s2671 = scalar_lea.vmem %s3, 960
  %v2672 = vld [vmem:[%s2671] sm:$0xff]
  %v2673 = vld [vmem:[%s2671 + $0x8] sm:$0xff]
  %v2674 = vld [vmem:[%s2671 + $0x10] sm:$0xff]
  %v2675 = vld [vmem:[%s2671 + $0x18] sm:$0xff]
  %v2676 = vld [vmem:[%s2671 + $0x20] sm:$0xff]
  %v2677 = vld [vmem:[%s2671 + $0x28] sm:$0xff]
  %v2678 = vld [vmem:[%s2671 + $0x30] sm:$0xff]
  %v2679 = vld [vmem:[%s2671 + $0x38] sm:$0xff]
  %v2680 = vld [vmem:[%s2671 + $0x40] sm:$0xff]
  %v2681 = vld [vmem:[%s2671 + $0x48] sm:$0xff]
  %v2682 = vld [vmem:[%s2671 + $0x50] sm:$0xff]
  %v2683 = vld [vmem:[%s2671 + $0x58] sm:$0xff]
  %v2684 = vld [vmem:[%s2671 + $0x60] sm:$0xff]
  %v2685 = vld [vmem:[%s2671 + $0x68] sm:$0xff]
  %v2686 = vld [vmem:[%s2671 + $0x70] sm:$0xff]
  %v2687 = vld [vmem:[%s2671 + $0x78] sm:$0xff]
  %v2688 = vld [vmem:[%s2671 + $0x80] sm:$0xff]
  %v2689 = vld [vmem:[%s2671 + $0x88] sm:$0xff]
  %v2690 = vld [vmem:[%s2671 + $0x90] sm:$0xff]
  %v2691 = vld [vmem:[%s2671 + $0x98] sm:$0xff]
  %v2692 = vld [vmem:[%s2671 + $0xa0] sm:$0xff]
  %v2693 = vld [vmem:[%s2671 + $0xa8] sm:$0xff]
  %v2694 = vld [vmem:[%s2671 + $0xb0] sm:$0xff]
  %v2695 = vld [vmem:[%s2671 + $0xb8] sm:$0xff]
  %v2696 = vld [vmem:[%s2671 + $0xc0] sm:$0xff]
  %v2697 = vld [vmem:[%s2671 + $0xc8] sm:$0xff]
  %v2698 = vld [vmem:[%s2671 + $0xd0] sm:$0xff]
  %v2699 = vld [vmem:[%s2671 + $0xd8] sm:$0xff]
  %v2700 = vld [vmem:[%s2671 + $0xe0] sm:$0xff]
  %v2701 = vld [vmem:[%s2671 + $0xe8] sm:$0xff]
  %v2732 = vunpack.c.l.b16 %v2672
  %v2733 = vunpack.c.h.b16 %v2672
  %v2734 = vunpack.c.l.b16 %v2673
  %v2735 = vunpack.c.h.b16 %v2673
  %v2736 = vunpack.c.l.b16 %v2674
  %v2737 = vunpack.c.h.b16 %v2674
  %v2738 = vunpack.c.l.b16 %v2675
  %v2739 = vunpack.c.h.b16 %v2675
  %v2740 = vunpack.c.l.b16 %v2676
  %v2741 = vunpack.c.h.b16 %v2676
  %v2742 = vunpack.c.l.b16 %v2677
  %v2743 = vunpack.c.h.b16 %v2677
  %v2744 = vunpack.c.l.b16 %v2678
  %v2745 = vunpack.c.h.b16 %v2678
  %v2746 = vunpack.c.l.b16 %v2679
  %v2747 = vunpack.c.h.b16 %v2679
  %v2748 = vunpack.c.l.b16 %v2680
  %v2749 = vunpack.c.h.b16 %v2680
  %v2750 = vunpack.c.l.b16 %v2681
  %v2751 = vunpack.c.h.b16 %v2681
  %v2752 = vunpack.c.l.b16 %v2682
  %v2753 = vunpack.c.h.b16 %v2682
  %v2754 = vunpack.c.l.b16 %v2683
  %v2755 = vunpack.c.h.b16 %v2683
  %v2756 = vunpack.c.l.b16 %v2684
  %v2757 = vunpack.c.h.b16 %v2684
  %v2758 = vunpack.c.l.b16 %v2685
  %v2759 = vunpack.c.h.b16 %v2685
  %v2760 = vunpack.c.l.b16 %v2686
  %v2761 = vunpack.c.h.b16 %v2686
  %v2762 = vunpack.c.l.b16 %v2687
  %v2763 = vunpack.c.h.b16 %v2687
  %v2764 = vunpack.c.l.b16 %v2688
  %v2765 = vunpack.c.h.b16 %v2688
  %v2766 = vunpack.c.l.b16 %v2689
  %v2767 = vunpack.c.h.b16 %v2689
  %v2768 = vunpack.c.l.b16 %v2690
  %v2769 = vunpack.c.h.b16 %v2690
  %v2770 = vunpack.c.l.b16 %v2691
  %v2771 = vunpack.c.h.b16 %v2691
  %v2772 = vunpack.c.l.b16 %v2692
  %v2773 = vunpack.c.h.b16 %v2692
  %v2774 = vunpack.c.l.b16 %v2693
  %v2775 = vunpack.c.h.b16 %v2693
  %v2776 = vunpack.c.l.b16 %v2694
  %v2777 = vunpack.c.h.b16 %v2694
  %v2778 = vunpack.c.l.b16 %v2695
  %v2779 = vunpack.c.h.b16 %v2695
  %v2780 = vunpack.c.l.b16 %v2696
  %v2781 = vunpack.c.h.b16 %v2696
  %v2782 = vunpack.c.l.b16 %v2697
  %v2783 = vunpack.c.h.b16 %v2697
  %v2784 = vunpack.c.l.b16 %v2698
  %v2785 = vunpack.c.h.b16 %v2698
  %v2786 = vunpack.c.l.b16 %v2699
  %v2787 = vunpack.c.h.b16 %v2699
  %v2788 = vunpack.c.l.b16 %v2700
  %v2789 = vunpack.c.h.b16 %v2700
  %v2790 = vunpack.c.l.b16 %v2701
  %v2791 = vunpack.c.h.b16 %v2701
  %v2792 = vpack.c.b16 %v2734, %v2732
  %v2793 = vpack.c.b16 %v2735, %v2733
  %v2794 = vpack.c.b16 %v2738, %v2736
  %v2795 = vpack.c.b16 %v2739, %v2737
  %v2796 = vpack.c.b16 %v2742, %v2740
  %v2797 = vpack.c.b16 %v2743, %v2741
  %v2798 = vpack.c.b16 %v2746, %v2744
  %v2799 = vpack.c.b16 %v2747, %v2745
  %v2800 = vpack.c.b16 %v2750, %v2748
  %v2801 = vpack.c.b16 %v2751, %v2749
  %v2802 = vpack.c.b16 %v2754, %v2752
  %v2803 = vpack.c.b16 %v2755, %v2753
  %v2804 = vpack.c.b16 %v2758, %v2756
  %v2805 = vpack.c.b16 %v2759, %v2757
  %v2806 = vpack.c.b16 %v2762, %v2760
  %v2807 = vpack.c.b16 %v2763, %v2761
  %v2808 = vpack.c.b16 %v2766, %v2764
  %v2809 = vpack.c.b16 %v2767, %v2765
  %v2810 = vpack.c.b16 %v2770, %v2768
  %v2811 = vpack.c.b16 %v2771, %v2769
  %v2812 = vpack.c.b16 %v2774, %v2772
  %v2813 = vpack.c.b16 %v2775, %v2773
  %v2814 = vpack.c.b16 %v2778, %v2776
  %v2815 = vpack.c.b16 %v2779, %v2777
  %v2816 = vpack.c.b16 %v2782, %v2780
  %v2817 = vpack.c.b16 %v2783, %v2781
  %v2818 = vpack.c.b16 %v2786, %v2784
  %v2819 = vpack.c.b16 %v2787, %v2785
  %v2820 = vpack.c.b16 %v2790, %v2788
  %v2821 = vpack.c.b16 %v2791, %v2789
  %v2853 = vsel %vm1314, %v2670, 0
  %2855 = vmatprep.subr.bf16.mxu0 %v2793
  %2856 = vmatpush1.bf16.msra.mxu0 %v2792
  %2857 = vmatprep.subr.bf16.mxu0 %v2795
  %2858 = vmatpush1.bf16.msra.mxu0 %v2794
  %2859 = vmatprep.subr.bf16.mxu0 %v2797
  %2860 = vmatpush1.bf16.msra.mxu0 %v2796
  %2861 = vmatprep.subr.bf16.mxu0 %v2799
  %2862 = vmatpush1.bf16.msra.mxu0 %v2798
  %2863 = vmatprep.subr.bf16.mxu0 %v2801
  %2864 = vmatpush1.bf16.msra.mxu0 %v2800
  %2865 = vmatprep.subr.bf16.mxu0 %v2803
  %2866 = vmatpush1.bf16.msra.mxu0 %v2802
  %2867 = vmatprep.subr.bf16.mxu0 %v2805
  %2868 = vmatpush1.bf16.msra.mxu0 %v2804
  %2869 = vmatprep.subr.bf16.mxu0 %v2807
  %2870 = vmatpush1.bf16.msra.mxu0 %v2806
  %2871 = vmatprep.subr.bf16.mxu0 %v2809
  %2872 = vmatpush1.bf16.msra.mxu0 %v2808
  %2873 = vmatprep.subr.bf16.mxu0 %v2811
  %2874 = vmatpush1.bf16.msra.mxu0 %v2810
  %2875 = vmatprep.subr.bf16.mxu0 %v2813
  %2876 = vmatpush1.bf16.msra.mxu0 %v2812
  %2877 = vmatprep.subr.bf16.mxu0 %v2815
  %2878 = vmatpush1.bf16.msra.mxu0 %v2814
  %2879 = vmatprep.subr.bf16.mxu0 %v2817
  %2880 = vmatpush1.bf16.msra.mxu0 %v2816
  %2881 = vmatprep.subr.bf16.mxu0 %v2819
  %2882 = vmatpush1.bf16.msra.mxu0 %v2818
  %2883 = vmatprep.subr.bf16.mxu0 %v2821
  %2884 = vmatpush1.bf16.msra.mxu0 %v2820
  %2885 = vmatprep.subr.bf16.mxu0 0
  %2886 = vmatpush1.bf16.msra.mxu0 0
  %2887 = vmatprep.mubr.bf16.mxu0 %v2041
  %2888 = vmatmul.mubr.bf16.gmra.mrb[0].mxu0 %v1576
  %v2889 = vpop.f32.mrb[0].mxu0
  %v2890 = vadd.f32 0.0, %v2889
  %v2891 = vpop.f32.mrb[0].mxu0
  %v2892 = vadd.f32 0.0, %v2891
  %v2893 = vpop.f32.mrb[0].mxu0
  %v2894 = vadd.f32 0.0, %v2893
  %v2895 = vpop.f32.mrb[0].mxu0
  %v2896 = vadd.f32 0.0, %v2895
  %2897 = vmatprep.mubr.bf16.mxu0 %v2044
  %2898 = vmatmul.mubr.bf16.gmra.mrb[0].mxu0 %v1578
  %v2899 = vpop.f32.mrb[0].mxu0
  %v2900 = vadd.f32 0.0, %v2899
  %v2901 = vpop.f32.mrb[0].mxu0
  %v2902 = vadd.f32 0.0, %v2901
  %v2903 = vpop.f32.mrb[0].mxu0
  %v2904 = vadd.f32 0.0, %v2903
  %v2905 = vpop.f32.mrb[0].mxu0
  %v2906 = vadd.f32 0.0, %v2905
  %2907 = vmatprep.mubr.bf16.mxu0 %v2303
  %2908 = vmatmul.mubr.bf16.gmra.mrb[0].mxu0 %v2119
  %v2909 = vpop.f32.mrb[0].mxu0
  %v2910 = vadd.f32 0.0, %v2909
  %v2911 = vpop.f32.mrb[0].mxu0
  %v2912 = vadd.f32 0.0, %v2911
  %v2913 = vpop.f32.mrb[0].mxu0
  %v2914 = vadd.f32 0.0, %v2913
  %v2915 = vpop.f32.mrb[0].mxu0
  %v2916 = vadd.f32 0.0, %v2915
  %2917 = vmatprep.mubr.bf16.mxu0 %v2853
  %2918 = vmatmul.mubr.bf16.gmra.mrb[0].mxu0 %v2669
  %v2919 = vpop.f32.mrb[0].mxu0
  %v2920 = vadd.f32 0.0, %v2919
  %v2921 = vpop.f32.mrb[0].mxu0
  %v2922 = vadd.f32 0.0, %v2921
  %v2923 = vpop.f32.mrb[0].mxu0
  %v2924 = vadd.f32 0.0, %v2923
  %v2925 = vpop.f32.mrb[0].mxu0
  %v2926 = vadd.f32 0.0, %v2925
  %2927 = vdwg.mxu0
  %v2928 = vadd.f32 %v2653, %v2890
  %v2929 = vadd.f32 %v2654, %v2892
  %v2930 = vadd.f32 %v2655, %v2894
  %v2931 = vadd.f32 %v2656, %v2896
  %v2932 = vadd.f32 %v2657, %v2900
  %v2933 = vadd.f32 %v2658, %v2902
  %v2934 = vadd.f32 %v2659, %v2904
  %v2935 = vadd.f32 %v2660, %v2906
  %v2936 = vadd.f32 %v2661, %v2910
  %v2937 = vadd.f32 %v2662, %v2912
  %v2938 = vadd.f32 %v2663, %v2914
  %v2939 = vadd.f32 %v2664, %v2916
  %v2940 = vadd.f32 %v2665, %v2920
  %v2941 = vadd.f32 %v2666, %v2922
  %v2942 = vadd.f32 %v2667, %v2924
  %v2943 = vadd.f32 %v2668, %v2926
  %v2944 = vmax.f32 %v2928, %v2930
  %v2945 = vmax.f32 %v2929, %v2931
  %v2946 = vmax.f32 %v2932, %v2934
  %v2947 = vmax.f32 %v2933, %v2935
  %v2948 = vmax.f32 %v2936, %v2938
  %v2949 = vmax.f32 %v2937, %v2939
  %v2950 = vmax.f32 %v2940, %v2942
  %v2951 = vmax.f32 %v2941, %v2943
  %v2952 = vld [vmem:[%s10] sm:$0xff]
  %v2953 = vld [vmem:[%s10 + $0x8] sm:$0xff]
  %v2954 = vld [vmem:[%s10 + $0x10] sm:$0xff]
  %v2955 = vld [vmem:[%s10 + $0x18] sm:$0xff]
  %v2956 = vld [vmem:[%s10 + $0x20] sm:$0xff]
  %v2957 = vld [vmem:[%s10 + $0x28] sm:$0xff]
  %v2958 = vld [vmem:[%s10 + $0x30] sm:$0xff]
  %v2959 = vld [vmem:[%s10 + $0x38] sm:$0xff]
  %v2960 = vld [vmem:[%s10 + $0x40] sm:$0xff]
  %v2961 = vld [vmem:[%s10 + $0x48] sm:$0xff]
  %v2962 = vld [vmem:[%s10 + $0x50] sm:$0xff]
  %v2963 = vld [vmem:[%s10 + $0x58] sm:$0xff]
  %v2964 = vld [vmem:[%s10 + $0x60] sm:$0xff]
  %v2965 = vld [vmem:[%s10 + $0x68] sm:$0xff]
  %v2966 = vld [vmem:[%s10 + $0x70] sm:$0xff]
  %v2967 = vld [vmem:[%s10 + $0x78] sm:$0xff]
  %v2968 = vld [vmem:[%s10 + $0x80] sm:$0xff]
  %v2969 = vld [vmem:[%s10 + $0x88] sm:$0xff]
  %v2970 = vld [vmem:[%s10 + $0x90] sm:$0xff]
  %v2971 = vld [vmem:[%s10 + $0x98] sm:$0xff]
  %v2972 = vld [vmem:[%s10 + $0xa0] sm:$0xff]
  %v2973 = vld [vmem:[%s10 + $0xa8] sm:$0xff]
  %v2974 = vld [vmem:[%s10 + $0xb0] sm:$0xff]
  %v2975 = vld [vmem:[%s10 + $0xb8] sm:$0xff]
  %v2976 = vld [vmem:[%s10 + $0xc0] sm:$0xff]
  %v2977 = vld [vmem:[%s10 + $0xc8] sm:$0xff]
  %v2978 = vld [vmem:[%s10 + $0xd0] sm:$0xff]
  %v2979 = vld [vmem:[%s10 + $0xd8] sm:$0xff]
  %v2980 = vld [vmem:[%s10 + $0xe0] sm:$0xff]
  %v2981 = vld [vmem:[%s10 + $0xe8] sm:$0xff]
  %v2982 = vld [vmem:[%s10 + $0xf0] sm:$0xff]
  %v2983 = vld [vmem:[%s10 + $0xf8] sm:$0xff]
  %v2984 = vld [vmem:[%s10 + $0x100] sm:$0xff]
  %v2985 = vld [vmem:[%s10 + $0x108] sm:$0xff]
  %v2986 = vld [vmem:[%s10 + $0x110] sm:$0xff]
  %v2987 = vld [vmem:[%s10 + $0x118] sm:$0xff]
  %v2988 = vld [vmem:[%s10 + $0x120] sm:$0xff]
  %v2989 = vld [vmem:[%s10 + $0x128] sm:$0xff]
  %v2990 = vld [vmem:[%s10 + $0x130] sm:$0xff]
  %v2991 = vld [vmem:[%s10 + $0x138] sm:$0xff]
  %vm2992 = vcmask 261120
  %v2994 = vsel %vm2992, %v2945, 0
  %v2997 = vsel %vm2992, %v2947, 0
  %v3000 = vsel %vm2992, %v2949, 0
  %v3003 = vsel %vm2992, %v2951, 0
  %3005 = vmatprep.subr.mxu0 %v2953
  %3006 = vmatpush1.msra.mxu0 %v2952
  %3007 = vmatprep.subr.mxu0 %v2955
  %3008 = vmatpush1.msra.mxu0 %v2954
  %3009 = vmatprep.subr.mxu0 %v2957
  %3010 = vmatpush1.msra.mxu0 %v2956
  %3011 = vmatprep.subr.mxu0 %v2959
  %3012 = vmatpush1.msra.mxu0 %v2958
  %3013 = vmatprep.subr.mxu0 %v2961
  %3014 = vmatpush1.msra.mxu0 %v2960
  %3015 = vmatprep.subr.mxu0 %v2963
  %3016 = vmatpush1.msra.mxu0 %v2962
  %3017 = vmatprep.subr.mxu0 %v2965
  %3018 = vmatpush1.msra.mxu0 %v2964
  %3019 = vmatprep.subr.mxu0 %v2967
  %3020 = vmatpush1.msra.mxu0 %v2966
  %3021 = vmatprep.subr.mxu0 %v2969
  %3022 = vmatpush1.msra.mxu0 %v2968
  %3023 = vmatprep.subr.mxu0 %v2971
  %3024 = vmatpush1.msra.mxu0 %v2970
  %3025 = vmatprep.subr.mxu0 %v2973
  %3026 = vmatpush1.msra.mxu0 %v2972
  %3027 = vmatprep.subr.mxu0 %v2975
  %3028 = vmatpush1.msra.mxu0 %v2974
  %3029 = vmatprep.subr.mxu0 %v2977
  %3030 = vmatpush1.msra.mxu0 %v2976
  %3031 = vmatprep.subr.mxu0 %v2979
  %3032 = vmatpush1.msra.mxu0 %v2978
  %3033 = vmatprep.subr.mxu0 %v2981
  %3034 = vmatpush1.msra.mxu0 %v2980
  %3035 = vmatprep.subr.mxu0 %v2983
  %3036 = vmatpush1.msra.mxu0 %v2982
  %3037 = vmatprep.subr.mxu0 %v2985
  %3038 = vmatpush1.msra.mxu0 %v2984
  %3039 = vmatprep.subr.mxu0 %v2987
  %3040 = vmatpush1.msra.mxu0 %v2986
  %3041 = vmatprep.subr.mxu0 %v2989
  %3042 = vmatpush1.msra.mxu0 %v2988
  %3043 = vmatprep.subr.mxu0 %v2991
  %3044 = vmatpush1.msra.mxu0 %v2990
  %3045 = vmatprep.subr.mxu0 0.0
  %3046 = vmatpush1.msra.mxu0 0.0
  %3047 = vmatprep.subr.mxu0 0.0
  %3048 = vmatpush1.msra.mxu0 0.0
  %3049 = vmatprep.subr.mxu0 0.0
  %3050 = vmatpush1.msra.mxu0 0.0
  %3051 = vmatprep.subr.mxu0 0.0
  %3052 = vmatpush1.msra.mxu0 0.0
  %3053 = vmatprep.subr.mxu0 0.0
  %3054 = vmatpush1.msra.mxu0 0.0
  %3055 = vmatprep.subr.mxu0 0.0
  %3056 = vmatpush1.msra.mxu0 0.0
  %3057 = vmatprep.subr.mxu0 0.0
  %3058 = vmatpush1.msra.mxu0 0.0
  %3059 = vmatprep.subr.mxu0 0.0
  %3060 = vmatpush1.msra.mxu0 0.0
  %3061 = vmatprep.subr.mxu0 0.0
  %3062 = vmatpush1.msra.mxu0 0.0
  %3063 = vmatprep.subr.mxu0 0.0
  %3064 = vmatpush1.msra.mxu0 0.0
  %3065 = vmatprep.subr.mxu0 0.0
  %3066 = vmatpush1.msra.mxu0 0.0
  %3067 = vmatprep.subr.mxu0 0.0
  %3068 = vmatpush1.msra.mxu0 0.0
  %3069 = vmatprep.mubr.f32.mxu0 %v2994
  %3070 = vmatmul.mubr.f32.gmra.mrb[0].mxu0 %v2944
  %v3071 = vpop.f32.mrb[0].mxu0
  %v3072 = vadd.f32 0.0, %v3071
  %v3073 = vpop.f32.mrb[0].mxu0
  %v3074 = vadd.f32 0.0, %v3073
  %3075 = vmatprep.mubr.f32.mxu0 %v2997
  %3076 = vmatmul.mubr.f32.gmra.mrb[0].mxu0 %v2946
  %v3077 = vpop.f32.mrb[0].mxu0
  %v3078 = vadd.f32 0.0, %v3077
  %v3079 = vpop.f32.mrb[0].mxu0
  %v3080 = vadd.f32 0.0, %v3079
  %3081 = vmatprep.mubr.f32.mxu0 %v3000
  %3082 = vmatmul.mubr.f32.gmra.mrb[0].mxu0 %v2948
  %v3083 = vpop.f32.mrb[0].mxu0
  %v3084 = vadd.f32 0.0, %v3083
  %v3085 = vpop.f32.mrb[0].mxu0
  %v3086 = vadd.f32 0.0, %v3085
  %3087 = vmatprep.mubr.f32.mxu0 %v3003
  %3088 = vmatmul.mubr.f32.gmra.mrb[0].mxu0 %v2950
  %v3089 = vpop.f32.mrb[0].mxu0
  %v3090 = vadd.f32 0.0, %v3089
  %v3091 = vpop.f32.mrb[0].mxu0
  %v3092 = vadd.f32 0.0, %v3091
  %3093 = vdwg.mxu0
  %v3094 = vmax.f32 %v2944, %v3072
  %v3095 = vmax.f32 %v2945, %v3074
  %v3096 = vmax.f32 %v2946, %v3078
  %v3097 = vmax.f32 %v2947, %v3080
  %v3098 = vmax.f32 %v2948, %v3084
  %v3099 = vmax.f32 %v2949, %v3086
  %v3100 = vmax.f32 %v2950, %v3090
  %v3101 = vmax.f32 %v2951, %v3092
  %v3102 = vld [vmem:[%s4] sm:$0x3]
  %v3104 = vlaneseq
  %v3105 = vshrl.u32 %v3104, 7
  %v3106 = vsub.s32 0, %v3105
  %v3107 = vrot.slane %v3102, %v3106
  %v3108 = vlaneseq
  %v3109 = vshrl.u32 %v3108, 7
  %v3110 = vsub.s32 1, %v3109
  %v3111 = vrot.slane %v3102, %v3110
  %v3114 = vadd.f32 %v3094, %v3107
  %v3115 = vadd.f32 %v3095, %v3111
  %v3116 = vadd.f32 %v3096, %v3107
  %v3117 = vadd.f32 %v3097, %v3111
  %v3118 = vadd.f32 %v3098, %v3107
  %v3119 = vadd.f32 %v3099, %v3111
  %v3120 = vadd.f32 %v3100, %v3107
  %v3121 = vadd.f32 %v3101, %v3111
  %v3122 = vmax.f32 %v3114, 0.0
  %v3123 = vmax.f32 %v3115, 0.0
  %v3124 = vmax.f32 %v3116, 0.0
  %v3125 = vmax.f32 %v3117, 0.0
  %v3126 = vmax.f32 %v3118, 0.0
  %v3127 = vmax.f32 %v3119, 0.0
  %v3128 = vmax.f32 %v3120, 0.0
  %v3129 = vmax.f32 %v3121, 0.0
  %v3130 = vpack.c.bf16 %v3122, %v3122
  %v3131 = vpack.c.bf16 %v3123, %v3123
  %v3132 = vld [vmem:[%s5] sm:$0xf]
  %v3133 = vld [vmem:[%s5 + $0x4] sm:$0xf]
  %v3134 = vld [vmem:[%s5 + $0x8] sm:$0xf]
  %v3135 = vld [vmem:[%s5 + $0xc] sm:$0xf]
  %v3136 = vld [vmem:[%s5 + $0x10] sm:$0xf]
  %v3137 = vld [vmem:[%s5 + $0x14] sm:$0xf]
  %v3138 = vld [vmem:[%s5 + $0x18] sm:$0xf]
  %v3139 = vld [vmem:[%s5 + $0x1c] sm:$0xf]
  %v3140 = vld [vmem:[%s5 + $0x20] sm:$0xf]
  %v3141 = vld [vmem:[%s5 + $0x24] sm:$0xf]
  %v3142 = vld [vmem:[%s5 + $0x28] sm:$0xf]
  %v3143 = vld [vmem:[%s5 + $0x2c] sm:$0xf]
  %v3144 = vld [vmem:[%s5 + $0x30] sm:$0xf]
  %v3145 = vld [vmem:[%s5 + $0x34] sm:$0xf]
  %v3146 = vld [vmem:[%s5 + $0x38] sm:$0xf]
  %v3147 = vld [vmem:[%s5 + $0x3c] sm:$0xf]
  %v3148 = vld [vmem:[%s5 + $0x40] sm:$0xf]
  %v3149 = vld [vmem:[%s5 + $0x44] sm:$0xf]
  %v3150 = vld [vmem:[%s5 + $0x48] sm:$0xf]
  %v3151 = vld [vmem:[%s5 + $0x4c] sm:$0xf]
  %v3152 = vpack.c.bf16 %v3124, %v3124
  %v3153 = vpack.c.bf16 %v3125, %v3125
  %s3154 = scalar_lea.vmem %s5, 80
  %v3155 = vld [vmem:[%s3154] sm:$0xf]
  %v3156 = vld [vmem:[%s3154 + $0x4] sm:$0xf]
  %v3157 = vld [vmem:[%s3154 + $0x8] sm:$0xf]
  %v3158 = vld [vmem:[%s3154 + $0xc] sm:$0xf]
  %v3159 = vld [vmem:[%s3154 + $0x10] sm:$0xf]
  %v3160 = vld [vmem:[%s3154 + $0x14] sm:$0xf]
  %v3161 = vld [vmem:[%s3154 + $0x18] sm:$0xf]
  %v3162 = vld [vmem:[%s3154 + $0x1c] sm:$0xf]
  %v3163 = vld [vmem:[%s3154 + $0x20] sm:$0xf]
  %v3164 = vld [vmem:[%s3154 + $0x24] sm:$0xf]
  %v3165 = vld [vmem:[%s3154 + $0x28] sm:$0xf]
  %v3166 = vld [vmem:[%s3154 + $0x2c] sm:$0xf]
  %v3167 = vld [vmem:[%s3154 + $0x30] sm:$0xf]
  %v3168 = vld [vmem:[%s3154 + $0x34] sm:$0xf]
  %v3169 = vld [vmem:[%s3154 + $0x38] sm:$0xf]
  %v3170 = vld [vmem:[%s3154 + $0x3c] sm:$0xf]
  %v3171 = vld [vmem:[%s3154 + $0x40] sm:$0xf]
  %v3172 = vld [vmem:[%s3154 + $0x44] sm:$0xf]
  %v3173 = vld [vmem:[%s3154 + $0x48] sm:$0xf]
  %v3174 = vld [vmem:[%s3154 + $0x4c] sm:$0xf]
  %v3195 = vunpack.c.l.b16 %v3155
  %v3196 = vunpack.c.l.b16 %v3156
  %v3197 = vunpack.c.l.b16 %v3157
  %v3198 = vunpack.c.l.b16 %v3158
  %v3199 = vunpack.c.l.b16 %v3159
  %v3200 = vunpack.c.l.b16 %v3160
  %v3201 = vunpack.c.l.b16 %v3161
  %v3202 = vunpack.c.l.b16 %v3162
  %v3203 = vunpack.c.l.b16 %v3163
  %v3204 = vunpack.c.l.b16 %v3164
  %v3205 = vunpack.c.l.b16 %v3165
  %v3206 = vunpack.c.l.b16 %v3166
  %v3207 = vunpack.c.l.b16 %v3167
  %v3208 = vunpack.c.l.b16 %v3168
  %v3209 = vunpack.c.l.b16 %v3169
  %v3210 = vunpack.c.l.b16 %v3170
  %v3211 = vunpack.c.l.b16 %v3171
  %v3212 = vunpack.c.l.b16 %v3172
  %v3213 = vunpack.c.l.b16 %v3173
  %v3214 = vunpack.c.l.b16 %v3174
  %v3215 = vpack.c.b16 %v3196, %v3195
  %v3216 = vpack.c.b16 %v3198, %v3197
  %v3217 = vpack.c.b16 %v3200, %v3199
  %v3218 = vpack.c.b16 %v3202, %v3201
  %v3219 = vpack.c.b16 %v3204, %v3203
  %v3220 = vpack.c.b16 %v3206, %v3205
  %v3221 = vpack.c.b16 %v3208, %v3207
  %v3222 = vpack.c.b16 %v3210, %v3209
  %v3223 = vpack.c.b16 %v3212, %v3211
  %v3224 = vpack.c.b16 %v3214, %v3213
  %v3236 = vsel %vm2992, %v3153, 0
  %3238 = vmatprep.subr.bf16.mxu0 0
  %3239 = vmatpush1.bf16.msra.mxu0 %v3215
  %3240 = vmatprep.subr.bf16.mxu0 0
  %3241 = vmatpush1.bf16.msra.mxu0 %v3216
  %3242 = vmatprep.subr.bf16.mxu0 0
  %3243 = vmatpush1.bf16.msra.mxu0 %v3217
  %3244 = vmatprep.subr.bf16.mxu0 0
  %3245 = vmatpush1.bf16.msra.mxu0 %v3218
  %3246 = vmatprep.subr.bf16.mxu0 0
  %3247 = vmatpush1.bf16.msra.mxu0 %v3219
  %3248 = vmatprep.subr.bf16.mxu0 0
  %3249 = vmatpush1.bf16.msra.mxu0 %v3220
  %3250 = vmatprep.subr.bf16.mxu0 0
  %3251 = vmatpush1.bf16.msra.mxu0 %v3221
  %3252 = vmatprep.subr.bf16.mxu0 0
  %3253 = vmatpush1.bf16.msra.mxu0 %v3222
  %3254 = vmatprep.subr.bf16.mxu0 0
  %3255 = vmatpush1.bf16.msra.mxu0 %v3223
  %3256 = vmatprep.subr.bf16.mxu0 0
  %3257 = vmatpush1.bf16.msra.mxu0 %v3224
  %3258 = vmatprep.subr.bf16.mxu0 0
  %3259 = vmatpush1.bf16.msra.mxu0 0
  %3260 = vmatprep.subr.bf16.mxu0 0
  %3261 = vmatpush1.bf16.msra.mxu0 0
  %3262 = vmatprep.subr.bf16.mxu0 0
  %3263 = vmatpush1.bf16.msra.mxu0 0
  %3264 = vmatprep.subr.bf16.mxu0 0
  %3265 = vmatpush1.bf16.msra.mxu0 0
  %3266 = vmatprep.subr.bf16.mxu0 0
  %3267 = vmatpush1.bf16.msra.mxu0 0
  %3268 = vmatprep.subr.bf16.mxu0 0
  %3269 = vmatpush1.bf16.msra.mxu0 0
  %3270 = vmatprep.mubr.bf16.mxu0 %v3236
  %3271 = vmatmul.mubr.bf16.gmra.mrb[0].mxu0 %v3152
  %v3272 = vpop.f32.mrb[0].mxu0
  %v3273 = vadd.f32 0.0, %v3272
  %v3274 = vpop.f32.mrb[0].mxu0
  %v3275 = vpop.f32.mrb[0].mxu0
  %v3276 = vpop.f32.mrb[0].mxu0
  %3277 = vdwg.mxu0
  %v3298 = vunpack.c.l.b16 %v3132
  %v3299 = vunpack.c.l.b16 %v3133
  %v3300 = vunpack.c.l.b16 %v3134
  %v3301 = vunpack.c.l.b16 %v3135
  %v3302 = vunpack.c.l.b16 %v3136
  %v3303 = vunpack.c.l.b16 %v3137
  %v3304 = vunpack.c.l.b16 %v3138
  %v3305 = vunpack.c.l.b16 %v3139
  %v3306 = vunpack.c.l.b16 %v3140
  %v3307 = vunpack.c.l.b16 %v3141
  %v3308 = vunpack.c.l.b16 %v3142
  %v3309 = vunpack.c.l.b16 %v3143
  %v3310 = vunpack.c.l.b16 %v3144
  %v3311 = vunpack.c.l.b16 %v3145
  %v3312 = vunpack.c.l.b16 %v3146
  %v3313 = vunpack.c.l.b16 %v3147
  %v3314 = vunpack.c.l.b16 %v3148
  %v3315 = vunpack.c.l.b16 %v3149
  %v3316 = vunpack.c.l.b16 %v3150
  %v3317 = vunpack.c.l.b16 %v3151
  %v3318 = vpack.c.b16 %v3299, %v3298
  %v3319 = vpack.c.b16 %v3301, %v3300
  %v3320 = vpack.c.b16 %v3303, %v3302
  %v3321 = vpack.c.b16 %v3305, %v3304
  %v3322 = vpack.c.b16 %v3307, %v3306
  %v3323 = vpack.c.b16 %v3309, %v3308
  %v3324 = vpack.c.b16 %v3311, %v3310
  %v3325 = vpack.c.b16 %v3313, %v3312
  %v3326 = vpack.c.b16 %v3315, %v3314
  %v3327 = vpack.c.b16 %v3317, %v3316
  %v3339 = vsel %vm2992, %v3131, 0
  %3341 = vmatprep.subr.bf16.mxu0 0
  %3342 = vmatpush1.bf16.msra.mxu0 %v3318
  %3343 = vmatprep.subr.bf16.mxu0 0
  %3344 = vmatpush1.bf16.msra.mxu0 %v3319
  %3345 = vmatprep.subr.bf16.mxu0 0
  %3346 = vmatpush1.bf16.msra.mxu0 %v3320
  %3347 = vmatprep.subr.bf16.mxu0 0
  %3348 = vmatpush1.bf16.msra.mxu0 %v3321
  %3349 = vmatprep.subr.bf16.mxu0 0
  %3350 = vmatpush1.bf16.msra.mxu0 %v3322
  %3351 = vmatprep.subr.bf16.mxu0 0
  %3352 = vmatpush1.bf16.msra.mxu0 %v3323
  %3353 = vmatprep.subr.bf16.mxu0 0
  %3354 = vmatpush1.bf16.msra.mxu0 %v3324
  %3355 = vmatprep.subr.bf16.mxu0 0
  %3356 = vmatpush1.bf16.msra.mxu0 %v3325
  %3357 = vmatprep.subr.bf16.mxu0 0
  %3358 = vmatpush1.bf16.msra.mxu0 %v3326
  %3359 = vmatprep.subr.bf16.mxu0 0
  %3360 = vmatpush1.bf16.msra.mxu0 %v3327
  %3361 = vmatprep.subr.bf16.mxu0 0
  %3362 = vmatpush1.bf16.msra.mxu0 0
  %3363 = vmatprep.subr.bf16.mxu0 0
  %3364 = vmatpush1.bf16.msra.mxu0 0
  %3365 = vmatprep.subr.bf16.mxu0 0
  %3366 = vmatpush1.bf16.msra.mxu0 0
  %3367 = vmatprep.subr.bf16.mxu0 0
  %3368 = vmatpush1.bf16.msra.mxu0 0
  %3369 = vmatprep.subr.bf16.mxu0 0
  %3370 = vmatpush1.bf16.msra.mxu0 0
  %3371 = vmatprep.subr.bf16.mxu0 0
  %3372 = vmatpush1.bf16.msra.mxu0 0
  %3373 = vmatprep.mubr.bf16.mxu0 %v3339
  %3374 = vmatmul.mubr.bf16.gmra.mrb[0].mxu0 %v3130
  %v3375 = vpop.f32.mrb[0].mxu0
  %v3376 = vadd.f32 %v3273, %v3375
  %v3377 = vpop.f32.mrb[0].mxu0
  %v3378 = vpop.f32.mrb[0].mxu0
  %v3379 = vpop.f32.mrb[0].mxu0
  %3380 = vdwg.mxu0
  %v3381 = vpack.c.bf16 %v3126, %v3126
  %v3382 = vpack.c.bf16 %v3127, %v3127
  %s3383 = scalar_lea.vmem %s5, 160
  %v3384 = vld [vmem:[%s3383] sm:$0xf]
  %v3385 = vld [vmem:[%s3383 + $0x4] sm:$0xf]
  %v3386 = vld [vmem:[%s3383 + $0x8] sm:$0xf]
  %v3387 = vld [vmem:[%s3383 + $0xc] sm:$0xf]
  %v3388 = vld [vmem:[%s3383 + $0x10] sm:$0xf]
  %v3389 = vld [vmem:[%s3383 + $0x14] sm:$0xf]
  %v3390 = vld [vmem:[%s3383 + $0x18] sm:$0xf]
  %v3391 = vld [vmem:[%s3383 + $0x1c] sm:$0xf]
  %v3392 = vld [vmem:[%s3383 + $0x20] sm:$0xf]
  %v3393 = vld [vmem:[%s3383 + $0x24] sm:$0xf]
  %v3394 = vld [vmem:[%s3383 + $0x28] sm:$0xf]
  %v3395 = vld [vmem:[%s3383 + $0x2c] sm:$0xf]
  %v3396 = vld [vmem:[%s3383 + $0x30] sm:$0xf]
  %v3397 = vld [vmem:[%s3383 + $0x34] sm:$0xf]
  %v3398 = vld [vmem:[%s3383 + $0x38] sm:$0xf]
  %v3399 = vld [vmem:[%s3383 + $0x3c] sm:$0xf]
  %v3400 = vld [vmem:[%s3383 + $0x40] sm:$0xf]
  %v3401 = vld [vmem:[%s3383 + $0x44] sm:$0xf]
  %v3402 = vld [vmem:[%s3383 + $0x48] sm:$0xf]
  %v3403 = vld [vmem:[%s3383 + $0x4c] sm:$0xf]
  %v3424 = vunpack.c.l.b16 %v3384
  %v3425 = vunpack.c.l.b16 %v3385
  %v3426 = vunpack.c.l.b16 %v3386
  %v3427 = vunpack.c.l.b16 %v3387
  %v3428 = vunpack.c.l.b16 %v3388
  %v3429 = vunpack.c.l.b16 %v3389
  %v3430 = vunpack.c.l.b16 %v3390
  %v3431 = vunpack.c.l.b16 %v3391
  %v3432 = vunpack.c.l.b16 %v3392
  %v3433 = vunpack.c.l.b16 %v3393
  %v3434 = vunpack.c.l.b16 %v3394
  %v3435 = vunpack.c.l.b16 %v3395
  %v3436 = vunpack.c.l.b16 %v3396
  %v3437 = vunpack.c.l.b16 %v3397
  %v3438 = vunpack.c.l.b16 %v3398
  %v3439 = vunpack.c.l.b16 %v3399
  %v3440 = vunpack.c.l.b16 %v3400
  %v3441 = vunpack.c.l.b16 %v3401
  %v3442 = vunpack.c.l.b16 %v3402
  %v3443 = vunpack.c.l.b16 %v3403
  %v3444 = vpack.c.b16 %v3425, %v3424
  %v3445 = vpack.c.b16 %v3427, %v3426
  %v3446 = vpack.c.b16 %v3429, %v3428
  %v3447 = vpack.c.b16 %v3431, %v3430
  %v3448 = vpack.c.b16 %v3433, %v3432
  %v3449 = vpack.c.b16 %v3435, %v3434
  %v3450 = vpack.c.b16 %v3437, %v3436
  %v3451 = vpack.c.b16 %v3439, %v3438
  %v3452 = vpack.c.b16 %v3441, %v3440
  %v3453 = vpack.c.b16 %v3443, %v3442
  %v3465 = vsel %vm2992, %v3382, 0
  %3467 = vmatprep.subr.bf16.mxu0 0
  %3468 = vmatpush1.bf16.msra.mxu0 %v3444
  %3469 = vmatprep.subr.bf16.mxu0 0
  %3470 = vmatpush1.bf16.msra.mxu0 %v3445
  %3471 = vmatprep.subr.bf16.mxu0 0
  %3472 = vmatpush1.bf16.msra.mxu0 %v3446
  %3473 = vmatprep.subr.bf16.mxu0 0
  %3474 = vmatpush1.bf16.msra.mxu0 %v3447
  %3475 = vmatprep.subr.bf16.mxu0 0
  %3476 = vmatpush1.bf16.msra.mxu0 %v3448
  %3477 = vmatprep.subr.bf16.mxu0 0
  %3478 = vmatpush1.bf16.msra.mxu0 %v3449
  %3479 = vmatprep.subr.bf16.mxu0 0
  %3480 = vmatpush1.bf16.msra.mxu0 %v3450
  %3481 = vmatprep.subr.bf16.mxu0 0
  %3482 = vmatpush1.bf16.msra.mxu0 %v3451
  %3483 = vmatprep.subr.bf16.mxu0 0
  %3484 = vmatpush1.bf16.msra.mxu0 %v3452
  %3485 = vmatprep.subr.bf16.mxu0 0
  %3486 = vmatpush1.bf16.msra.mxu0 %v3453
  %3487 = vmatprep.subr.bf16.mxu0 0
  %3488 = vmatpush1.bf16.msra.mxu0 0
  %3489 = vmatprep.subr.bf16.mxu0 0
  %3490 = vmatpush1.bf16.msra.mxu0 0
  %3491 = vmatprep.subr.bf16.mxu0 0
  %3492 = vmatpush1.bf16.msra.mxu0 0
  %3493 = vmatprep.subr.bf16.mxu0 0
  %3494 = vmatpush1.bf16.msra.mxu0 0
  %3495 = vmatprep.subr.bf16.mxu0 0
  %3496 = vmatpush1.bf16.msra.mxu0 0
  %3497 = vmatprep.subr.bf16.mxu0 0
  %3498 = vmatpush1.bf16.msra.mxu0 0
  %3499 = vmatprep.mubr.bf16.mxu0 %v3465
  %3500 = vmatmul.mubr.bf16.gmra.mrb[0].mxu0 %v3381
  %v3501 = vpop.f32.mrb[0].mxu0
  %v3502 = vadd.f32 0.0, %v3501
  %v3503 = vpop.f32.mrb[0].mxu0
  %v3504 = vpop.f32.mrb[0].mxu0
  %v3505 = vpop.f32.mrb[0].mxu0
  %3506 = vdwg.mxu0
  %v3507 = vadd.f32 %v3376, %v3502
  %v3508 = vpack.c.bf16 %v3128, %v3128
  %v3509 = vpack.c.bf16 %v3129, %v3129
  %s3510 = scalar_lea.vmem %s5, 240
  %v3511 = vld [vmem:[%s3510] sm:$0xf]
  %v3512 = vld [vmem:[%s3510 + $0x4] sm:$0xf]
  %v3513 = vld [vmem:[%s3510 + $0x8] sm:$0xf]
  %v3514 = vld [vmem:[%s3510 + $0xc] sm:$0xf]
  %v3515 = vld [vmem:[%s3510 + $0x10] sm:$0xf]
  %v3516 = vld [vmem:[%s3510 + $0x14] sm:$0xf]
  %v3517 = vld [vmem:[%s3510 + $0x18] sm:$0xf]
  %v3518 = vld [vmem:[%s3510 + $0x1c] sm:$0xf]
  %v3519 = vld [vmem:[%s3510 + $0x20] sm:$0xf]
  %v3520 = vld [vmem:[%s3510 + $0x24] sm:$0xf]
  %v3521 = vld [vmem:[%s3510 + $0x28] sm:$0xf]
  %v3522 = vld [vmem:[%s3510 + $0x2c] sm:$0xf]
  %v3523 = vld [vmem:[%s3510 + $0x30] sm:$0xf]
  %v3524 = vld [vmem:[%s3510 + $0x34] sm:$0xf]
  %v3525 = vld [vmem:[%s3510 + $0x38] sm:$0xf]
  %v3526 = vld [vmem:[%s3510 + $0x3c] sm:$0xf]
  %v3527 = vld [vmem:[%s3510 + $0x40] sm:$0xf]
  %v3528 = vld [vmem:[%s3510 + $0x44] sm:$0xf]
  %v3529 = vld [vmem:[%s3510 + $0x48] sm:$0xf]
  %v3530 = vld [vmem:[%s3510 + $0x4c] sm:$0xf]
  %v3551 = vunpack.c.l.b16 %v3511
  %v3552 = vunpack.c.l.b16 %v3512
  %v3553 = vunpack.c.l.b16 %v3513
  %v3554 = vunpack.c.l.b16 %v3514
  %v3555 = vunpack.c.l.b16 %v3515
  %v3556 = vunpack.c.l.b16 %v3516
  %v3557 = vunpack.c.l.b16 %v3517
  %v3558 = vunpack.c.l.b16 %v3518
  %v3559 = vunpack.c.l.b16 %v3519
  %v3560 = vunpack.c.l.b16 %v3520
  %v3561 = vunpack.c.l.b16 %v3521
  %v3562 = vunpack.c.l.b16 %v3522
  %v3563 = vunpack.c.l.b16 %v3523
  %v3564 = vunpack.c.l.b16 %v3524
  %v3565 = vunpack.c.l.b16 %v3525
  %v3566 = vunpack.c.l.b16 %v3526
  %v3567 = vunpack.c.l.b16 %v3527
  %v3568 = vunpack.c.l.b16 %v3528
  %v3569 = vunpack.c.l.b16 %v3529
  %v3570 = vunpack.c.l.b16 %v3530
  %v3571 = vpack.c.b16 %v3552, %v3551
  %v3572 = vpack.c.b16 %v3554, %v3553
  %v3573 = vpack.c.b16 %v3556, %v3555
  %v3574 = vpack.c.b16 %v3558, %v3557
  %v3575 = vpack.c.b16 %v3560, %v3559
  %v3576 = vpack.c.b16 %v3562, %v3561
  %v3577 = vpack.c.b16 %v3564, %v3563
  %v3578 = vpack.c.b16 %v3566, %v3565
  %v3579 = vpack.c.b16 %v3568, %v3567
  %v3580 = vpack.c.b16 %v3570, %v3569
  %v3592 = vsel %vm2992, %v3509, 0
  %3594 = vmatprep.subr.bf16.mxu0 0
  %3595 = vmatpush1.bf16.msra.mxu0 %v3571
  %3596 = vmatprep.subr.bf16.mxu0 0
  %3597 = vmatpush1.bf16.msra.mxu0 %v3572
  %3598 = vmatprep.subr.bf16.mxu0 0
  %3599 = vmatpush1.bf16.msra.mxu0 %v3573
  %3600 = vmatprep.subr.bf16.mxu0 0
  %3601 = vmatpush1.bf16.msra.mxu0 %v3574
  %3602 = vmatprep.subr.bf16.mxu0 0
  %3603 = vmatpush1.bf16.msra.mxu0 %v3575
  %3604 = vmatprep.subr.bf16.mxu0 0
  %3605 = vmatpush1.bf16.msra.mxu0 %v3576
  %3606 = vmatprep.subr.bf16.mxu0 0
  %3607 = vmatpush1.bf16.msra.mxu0 %v3577
  %3608 = vmatprep.subr.bf16.mxu0 0
  %3609 = vmatpush1.bf16.msra.mxu0 %v3578
  %3610 = vmatprep.subr.bf16.mxu0 0
  %3611 = vmatpush1.bf16.msra.mxu0 %v3579
  %3612 = vmatprep.subr.bf16.mxu0 0
  %3613 = vmatpush1.bf16.msra.mxu0 %v3580
  %3614 = vmatprep.subr.bf16.mxu0 0
  %3615 = vmatpush1.bf16.msra.mxu0 0
  %3616 = vmatprep.subr.bf16.mxu0 0
  %3617 = vmatpush1.bf16.msra.mxu0 0
  %3618 = vmatprep.subr.bf16.mxu0 0
  %3619 = vmatpush1.bf16.msra.mxu0 0
  %3620 = vmatprep.subr.bf16.mxu0 0
  %3621 = vmatpush1.bf16.msra.mxu0 0
  %3622 = vmatprep.subr.bf16.mxu0 0
  %3623 = vmatpush1.bf16.msra.mxu0 0
  %3624 = vmatprep.subr.bf16.mxu0 0
  %3625 = vmatpush1.bf16.msra.mxu0 0
  %3626 = vmatprep.mubr.bf16.mxu0 %v3592
  %3627 = vmatmul.mubr.bf16.gmra.mrb[0].mxu0 %v3508
  %v3628 = vpop.f32.mrb[0].mxu0
  %v3629 = vadd.f32 0.0, %v3628
  %v3630 = vpop.f32.mrb[0].mxu0
  %v3631 = vpop.f32.mrb[0].mxu0
  %v3632 = vpop.f32.mrb[0].mxu0
  %3633 = vdwg.mxu0
  %v3634 = vadd.f32 %v3507, %v3629
  %v3635 = vld [vmem:[%s6] sm:$0x1]
  %v3637 = vlaneseq
  %v3638 = vshrl.u32 %v3637, 7
  %v3639 = vsub.s32 0, %v3638
  %v3640 = vrot.slane %v3635, %v3639
  %v3642 = vadd.f32 %v3634, %v3640
  %v3643 = vmax.f32 %v3642, 0.0
  %v3644 = vpack.c.bf16 %v3643, %v3643
  %v3645 = vld [vmem:[%s7] sm:$0xf]
  %v3646 = vld [vmem:[%s7 + $0x4] sm:$0xf]
  %v3647 = vld [vmem:[%s7 + $0x8] sm:$0xf]
  %v3648 = vld [vmem:[%s7 + $0xc] sm:$0xf]
  %v3649 = vld [vmem:[%s7 + $0x10] sm:$0xf]
  %v3650 = vld [vmem:[%s7 + $0x14] sm:$0xf]
  %v3651 = vld [vmem:[%s7 + $0x18] sm:$0x1]
  %v3652 = vld [vmem:[%s8] sm:$0x1]
  %v3654 = vlaneseq
  %v3655 = vshrl.u32 %v3654, 7
  %v3656 = vsub.s32 0, %v3655
  %v3657 = vrot.slane %v3652, %v3656
  %v3666 = vunpack.c.l.b16 %v3645
  %v3667 = vunpack.c.l.b16 %v3646
  %v3668 = vunpack.c.l.b16 %v3647
  %v3669 = vunpack.c.l.b16 %v3648
  %v3670 = vunpack.c.l.b16 %v3649
  %v3671 = vunpack.c.l.b16 %v3650
  %v3672 = vunpack.c.l.b16 %v3651
  %v3673 = vpack.c.b16 %v3667, %v3666
  %v3674 = vpack.c.b16 %v3669, %v3668
  %v3675 = vpack.c.b16 %v3671, %v3670
  %v3676 = vpack.c.b16 %v3672, %v3672
  %vm3680 = vcmask 408576
  %v3682 = vsel %vm3680, %v3644, 0
  %vm3684 = vcmask 1040384
  %v3686 = vsel %vm3684, %v3676, 0
  %3688 = vmatprep.subr.bf16.mxu0 0
  %3689 = vmatpush1.bf16.msra.mxu0 %v3673
  %3690 = vmatprep.subr.bf16.mxu0 0
  %3691 = vmatpush1.bf16.msra.mxu0 %v3674
  %3692 = vmatprep.subr.bf16.mxu0 0
  %3693 = vmatpush1.bf16.msra.mxu0 %v3675
  %3694 = vmatprep.subr.bf16.mxu0 0
  %3695 = vmatpush1.bf16.msra.mxu0 %v3686
  %3696 = vmatprep.subr.bf16.mxu0 0
  %3697 = vmatpush1.bf16.msra.mxu0 0
  %3698 = vmatprep.subr.bf16.mxu0 0
  %3699 = vmatpush1.bf16.msra.mxu0 0
  %3700 = vmatprep.subr.bf16.mxu0 0
  %3701 = vmatpush1.bf16.msra.mxu0 0
  %3702 = vmatprep.subr.bf16.mxu0 0
  %3703 = vmatpush1.bf16.msra.mxu0 0
  %3704 = vmatprep.subr.bf16.mxu0 0
  %3705 = vmatpush1.bf16.msra.mxu0 0
  %3706 = vmatprep.subr.bf16.mxu0 0
  %3707 = vmatpush1.bf16.msra.mxu0 0
  %3708 = vmatprep.subr.bf16.mxu0 0
  %3709 = vmatpush1.bf16.msra.mxu0 0
  %3710 = vmatprep.subr.bf16.mxu0 0
  %3711 = vmatpush1.bf16.msra.mxu0 0
  %3712 = vmatprep.subr.bf16.mxu0 0
  %3713 = vmatpush1.bf16.msra.mxu0 0
  %3714 = vmatprep.subr.bf16.mxu0 0
  %3715 = vmatpush1.bf16.msra.mxu0 0
  %3716 = vmatprep.subr.bf16.mxu0 0
  %3717 = vmatpush1.bf16.msra.mxu0 0
  %3718 = vmatprep.subr.bf16.mxu0 0
  %3719 = vmatpush1.bf16.msra.mxu0 0
  %3720 = vmatprep.mubr.bf16.mxu0 0
  %3721 = vmatmul.mubr.bf16.gmra.mrb[0].mxu0 %v3682
  %v3722 = vpop.f32.mrb[0].mxu0
  %v3723 = vadd.f32 %v3657, %v3722
  %v3724 = vpop.f32.mrb[0].mxu0
  %v3725 = vpop.f32.mrb[0].mxu0
  %v3726 = vpop.f32.mrb[0].mxu0
  %3727 = vdwg.mxu0
  %vm3728 = vcmask 80896
  %v3729 = vsel %vm3728, %v3723, -inf
  %3730 = vmax.xlane.f32.xlu0 %v3729
  %v3731 = vpop.xlane.xlu0 %3730
  %v3732 = vsub.f32 %v3723, %v3731
  %v3733 = vmul.f32 %v3732, 1.442695
  %v3734 = vpow.pop %v3733
  %v3735 = vsel %vm3728, %v3734, 0.0
  %3736 = vadd.xlane.f32.xlu0 %v3735
  %v3737 = vpop.xlane.xlu0 %3736
  %v3738 = vlog2.pop %v3737
  %v3739 = vmul.f32 %v3738, 0.6931472
  %v3740 = vsub.f32 %v3732, %v3739
  %3741 = vst.msk [vmem:[%s11] sm:$0xff] %vm3728, %v3740
  // Predicated region
  $region46: #{small_network_forward.1} parent=0 // pred_check
    _
  $region47: #{small_network_forward.1} parent=0 // pred_check_branch
    %3743 = sbr.rel (0) target = $region49
  $region48: #{small_network_forward.1} parent=0 // pred_region
    _
  $region49: #{small_network_forward.1} parent=0 // pred_fallthru
    _
  // Predicated region
  $region50: #{small_network_forward.1} parent=0 // pred_check
    _
  $region51: #{small_network_forward.1} parent=0 // pred_check_branch
    %3745 = sbr.rel (0) target = $region53
  $region52: #{small_network_forward.1} parent=0 // pred_region
    _
  $region53: #{small_network_forward.1} parent=0 // pred_fallthru
    _

</llo_original>
